<compile_context>
chip_gen: v6e
topology: v6e:2x2x1
jax: 0.10.0
libtpu: 0.0.40
codegen_flags: <defaults>
</compile_context>

<pallas_src>
import jax
import jax.numpy as jnp
from jax import lax
from jax.experimental import pallas as pl
from jax.experimental.pallas import tpu as pltpu

EPS_LN = 1e-5     # nn.LayerNorm default
EPS_BN = 1e-5     # nn.BatchNorm1d default
EPS_NORM = 1e-12  # F.normalize default


# ------------------------------ fused kernel ----------------------------------
#
# Packed-operand layout (row indices are static Python ints):
#   vec_e (25, E):
#     0-3   domian_lang_fc       : ln_g, ln_b, b1, b2
#     4-7   domian_lang_main_fc  : ln_g, ln_b, b1, b2
#     8-9   domian_lang_fc_merge : b1 (BN folded), b2
#     10-11 domian_vis_fc_merge  : b1 (BN folded), b2
#     12-13 vis_car_fc           : BN scale, BN shift
#     14-15 vis_motion_fc        : BN scale, BN shift
#     16-17 lang_car_fc          : ln_g, ln_b
#     18-19 lang_motion_fc       : ln_g, ln_b
#     20-22 id_cls / id_cls2 / id_cls_share : b1 (BN folded)
#     23-24 domian_vis_fc / domian_vis_fc_bk : conv bias
#   vec_h (4, E/2):  biases of vis_car / vis_motion / lang_car / lang_motion
#   vec_c (3, ncls): final biases of id_cls / id_cls2 / id_cls_share
#   w_ee  (12, E, E): lang_fc W1,W2 | main_fc W1,W2 | lang_merge W1_top,W1_bot,W2
#                     | vis_merge W1,W2 | id_cls W1 | id_cls2 W1 | id_share W1
#   w_eh  (4, E, E/2): vis_car, vis_motion, lang_car, lang_motion weights
#   w_ec  (3, E, ncls): id_cls, id_cls2, id_cls_share final weights
#   w_ce  (2, C_IN, E): domian_vis_fc, domian_vis_fc_bk (1x1 conv) weights

def make_fused_kernel(E, ncls, ncls_pad):
    H = E // 2

    def kernel(lang_tok_ref, main_tok_ref, crops_ref, motion_ref,
               p_lang_ref, p_main_ref,
               vec_e_ref, vec_h_ref, vec_c_ref,
               w_ee_ref, w_eh_ref, w_ec_ref, w_ce_ref,
               emb_ref, logits_ref):

        dot = lambda a, b: jnp.dot(a, b, preferred_element_type=jnp.float32)
        relu = lambda x: jnp.maximum(x, 0.0)

        def layernorm(x, g, b):
            mu = jnp.mean(x, axis=-1, keepdims=True)
            var = jnp.mean((x - mu) ** 2, axis=-1, keepdims=True)
            return (x - mu) * lax.rsqrt(var + EPS_LN) * g + b

        def l2norm(x):
            n = jnp.sqrt(jnp.sum(x * x, axis=-1, keepdims=True))
            return x / jnp.maximum(n, EPS_NORM)

        # zero-init the padded output slabs (keeps the unused pad lanes clean)
        emb_ref[...] = jnp.zeros_like(emb_ref)
        logits_ref[...] = jnp.zeros_like(logits_ref)

        # ---- language side: mean pooling as a block-diagonal matmul (MXU) ----
        lang_pool = dot(p_lang_ref[...], lang_tok_ref[...])          # (B, E)
        main_pool = dot(p_main_ref[...], main_tok_ref[...])          # (B, E)

        # domian_lang_fc : LN -> Linear -> ReLU -> Linear
        x = layernorm(lang_pool, vec_e_ref[0], vec_e_ref[1])
        x = relu(dot(x, w_ee_ref[0]) + vec_e_ref[2])
        lang_embeds = dot(x, w_ee_ref[1]) + vec_e_ref[3]

        # domian_lang_main_fc
        x = layernorm(main_pool, vec_e_ref[4], vec_e_ref[5])
        x = relu(dot(x, w_ee_ref[2]) + vec_e_ref[6])
        lang_main_embeds = dot(x, w_ee_ref[3]) + vec_e_ref[7]

        # domian_lang_fc_merge: Linear(2E->E, eval-BN folded) -> ReLU -> Linear
        # (split-K instead of materializing the concat)
        h = dot(lang_main_embeds, w_ee_ref[4]) + dot(lang_embeds, w_ee_ref[5]) \
            + vec_e_ref[8]
        lang_merge = dot(relu(h), w_ee_ref[6]) + vec_e_ref[9]

        # ---- visual side: 1x1 conv == matmul on pooled (B, C_IN) features ----
        visual_embeds = dot(crops_ref[...], w_ce_ref[0]) + vec_e_ref[23]
        motion_embeds = dot(motion_ref[...], w_ce_ref[1]) + vec_e_ref[24]

        # vis_car_fc / vis_motion_fc: eval-BN (scale/shift) -> ReLU -> Linear
        vc = relu(visual_embeds * vec_e_ref[12] + vec_e_ref[13])
        visual_car = dot(vc, w_eh_ref[0]) + vec_h_ref[0]
        vm = relu(motion_embeds * vec_e_ref[14] + vec_e_ref[15])
        visual_mo = dot(vm, w_eh_ref[1]) + vec_h_ref[1]

        # domian_vis_fc_merge: Linear(E->E, eval-BN folded) -> ReLU -> Linear
        # (split-K on the two E/2 halves instead of a concat)
        w1v = w_ee_ref[7]                                            # (E, E)
        h = dot(visual_car, w1v[:H, :]) + dot(visual_mo, w1v[H:, :]) \
            + vec_e_ref[10]
        visual_merge = dot(relu(h), w_ee_ref[8]) + vec_e_ref[11]

        # lang_car_fc / lang_motion_fc: LN -> ReLU -> Linear(E -> E/2)
        lc = relu(layernorm(lang_main_embeds, vec_e_ref[16], vec_e_ref[17]))
        lang_car = dot(lc, w_eh_ref[2]) + vec_h_ref[2]
        lm = relu(layernorm(lang_embeds, vec_e_ref[18], vec_e_ref[19]))
        lang_mo = dot(lm, w_eh_ref[3]) + vec_h_ref[3]

        # ---- classifier heads: Linear(+folded BN) -> ReLU -> Linear ----
        h1 = relu(dot(visual_embeds, w_ee_ref[9]) + vec_e_ref[20])
        logits1 = dot(h1, w_ec_ref[0]) + vec_c_ref[0]
        h2 = relu(dot(motion_embeds, w_ee_ref[10]) + vec_e_ref[21])
        logits2 = dot(h2, w_ec_ref[1]) + vec_c_ref[1]
        # id_cls_share applied to both merge embeds; the shared weights live in
        # VMEM once (single packed DMA) and are reused for both applications.
        hs_l = relu(dot(lang_merge, w_ee_ref[11]) + vec_e_ref[22])
        logits3 = dot(hs_l, w_ec_ref[2]) + vec_c_ref[2]
        hs_v = relu(dot(visual_merge, w_ee_ref[11]) + vec_e_ref[22])
        logits4 = dot(hs_v, w_ec_ref[2]) + vec_c_ref[2]

        # ---- packed, lane-aligned outputs (segments start at multiples of E /
        # ncls_pad, both multiples of 128 at the demo sizes) ----
        emb_ref[:, 0 * E:0 * E + H] = l2norm(visual_car)
        emb_ref[:, 1 * E:1 * E + H] = l2norm(visual_mo)
        emb_ref[:, 2 * E:2 * E + H] = l2norm(lang_car)
        emb_ref[:, 3 * E:3 * E + H] = l2norm(lang_mo)
        emb_ref[:, 4 * E:5 * E] = l2norm(visual_merge)
        emb_ref[:, 5 * E:6 * E] = l2norm(lang_merge)

        logits_ref[:, 0 * ncls_pad:0 * ncls_pad + ncls] = logits1
        logits_ref[:, 1 * ncls_pad:1 * ncls_pad + ncls] = logits2
        logits_ref[:, 2 * ncls_pad:2 * ncls_pad + ncls] = logits3
        logits_ref[:, 3 * ncls_pad:3 * ncls_pad + ncls] = logits4

    return kernel


# ----------------------------- parameter creation -----------------------------

def _linear(key, din, dout, scale=0.02):
    kw, kb = jax.random.split(key)
    w = scale * jax.random.normal(kw, (din, dout), jnp.float32)   # (in, out)
    b = scale * jax.random.normal(kb, (dout,), jnp.float32)
    return w, b


def _ln_params(key, dim):
    kg, kb = jax.random.split(key)
    g = 1.0 + 0.1 * jax.random.normal(kg, (dim,), jnp.float32)
    b = 0.1 * jax.random.normal(kb, (dim,), jnp.float32)
    return g, b


def _bn_params(key, dim):
    kg, kb, km, kv = jax.random.split(key, 4)
    g = 1.0 + 0.1 * jax.random.normal(kg, (dim,), jnp.float32)
    b = 0.1 * jax.random.normal(kb, (dim,), jnp.float32)
    m = 0.1 * jax.random.normal(km, (dim,), jnp.float32)
    v = 1.0 + 0.1 * jnp.abs(jax.random.normal(kv, (dim,), jnp.float32))
    return g, b, m, v


def init_params(key, embed_dim, c_in, num_class):
    """Raw (torch-shaped) parameters of every head."""
    E, Eh = embed_dim, embed_dim // 2
    keys = iter(jax.random.split(key, 64))
    nk = lambda: next(keys)

    def ln_lin_relu_lin(d):                      # LayerNorm, Linear, ReLU, Linear
        g, b = _ln_params(nk(), d)
        w1, b1 = _linear(nk(), d, d)
        w2, b2 = _linear(nk(), d, d)
        return (g, b, w1, b1, w2, b2)

    def lin_bn_relu_lin(din, dhid, dout):        # Linear, BatchNorm1d, ReLU, Linear
        w1, b1 = _linear(nk(), din, dhid)
        bn = _bn_params(nk(), dhid)
        w2, b2 = _linear(nk(), dhid, dout)
        return (w1, b1) + bn + (w2, b2)

    def bn_relu_lin(din, dout):                  # BatchNorm1d, ReLU, Linear
        bn = _bn_params(nk(), din)
        w, b = _linear(nk(), din, dout)
        return bn + (w, b)

    def ln_relu_lin(din, dout):                  # LayerNorm, ReLU, Linear
        g, b = _ln_params(nk(), din)
        w, bb = _linear(nk(), din, dout)
        return (g, b, w, bb)

    return dict(
        embed_dim=E, num_class=num_class,
        car_idloss=True, mo_idloss=True, share_idloss=True,
        logit_scale=jnp.ones((), jnp.float32),
        domian_lang_fc=ln_lin_relu_lin(E),
        domian_lang_main_fc=ln_lin_relu_lin(E),
        domian_lang_fc_merge=lin_bn_relu_lin(2 * E, E, E),
        domian_vis_fc=_linear(nk(), c_in, E),      # Conv2d(c_in->E, k=1) as (c_in, E)
        domian_vis_fc_bk=_linear(nk(), c_in, E),
        vis_car_fc=bn_relu_lin(E, Eh),
        vis_motion_fc=bn_relu_lin(E, Eh),
        domian_vis_fc_merge=lin_bn_relu_lin(E, E, E),
        lang_car_fc=ln_relu_lin(E, Eh),
        lang_motion_fc=ln_relu_lin(E, Eh),
        id_cls=lin_bn_relu_lin(E, E, num_class),
        id_cls2=lin_bn_relu_lin(E, E, num_class),
        id_cls_share=lin_bn_relu_lin(E, E, num_class),
    )


def pack_params(p):
    """Fold eval-mode BatchNorm into the neighbouring Linear and pack every
    same-shape parameter into one stacked operand (few big DMAs instead of
    ~60 sub-KB ones)."""
    E = p["embed_dim"]

    def bn_scale_shift(g, b, m, v):
        s = g * lax.rsqrt(v + EPS_BN)
        return s, b - m * s

    def fold_lin_bn(w1, b1, g, b, m, v):
        s, t = bn_scale_shift(g, b, m, v)
        return w1 * s[None, :], b1 * s + t

    lf = p["domian_lang_fc"]
    mf = p["domian_lang_main_fc"]

    lm_w1, lm_b1, g, b, m, v, lm_w2, lm_b2 = p["domian_lang_fc_merge"]
    lm_w1, lm_b1 = fold_lin_bn(lm_w1, lm_b1, g, b, m, v)
    vm_w1, vm_b1, g, b, m, v, vm_w2, vm_b2 = p["domian_vis_fc_merge"]
    vm_w1, vm_b1 = fold_lin_bn(vm_w1, vm_b1, g, b, m, v)

    g, b, m, v, vc_w, vc_bias = p["vis_car_fc"]
    vc_s, vc_t = bn_scale_shift(g, b, m, v)
    g, b, m, v, vmo_w, vmo_bias = p["vis_motion_fc"]
    vmo_s, vmo_t = bn_scale_shift(g, b, m, v)

    lc_g, lc_b, lc_w, lc_bias = p["lang_car_fc"]
    lmo_g, lmo_b, lmo_w, lmo_bias = p["lang_motion_fc"]

    id1_w1, id1_b1, g, b, m, v, id1_w2, id1_b2 = p["id_cls"]
    id1_w1, id1_b1 = fold_lin_bn(id1_w1, id1_b1, g, b, m, v)
    id2_w1, id2_b1, g, b, m, v, id2_w2, id2_b2 = p["id_cls2"]
    id2_w1, id2_b1 = fold_lin_bn(id2_w1, id2_b1, g, b, m, v)
    ids_w1, ids_b1, g, b, m, v, ids_w2, ids_b2 = p["id_cls_share"]
    ids_w1, ids_b1 = fold_lin_bn(ids_w1, ids_b1, g, b, m, v)

    vfc_w, vfc_b = p["domian_vis_fc"]
    vbk_w, vbk_b = p["domian_vis_fc_bk"]

    vec_e = jnp.stack([
        lf[0], lf[1], lf[3], lf[5],
        mf[0], mf[1], mf[3], mf[5],
        lm_b1, lm_b2,
        vm_b1, vm_b2,
        vc_s, vc_t,
        vmo_s, vmo_t,
        lc_g, lc_b,
        lmo_g, lmo_b,
        id1_b1, id2_b1, ids_b1,
        vfc_b, vbk_b,
    ], axis=0)                                                   # (25, E)
    vec_h = jnp.stack([vc_bias, vmo_bias, lc_bias, lmo_bias], axis=0)
    vec_c = jnp.stack([id1_b2, id2_b2, ids_b2], axis=0)
    w_ee = jnp.stack([
        lf[2], lf[4], mf[2], mf[4],
        lm_w1[:E], lm_w1[E:], lm_w2,
        vm_w1, vm_w2,
        id1_w1, id2_w1, ids_w1,
    ], axis=0)                                                   # (12, E, E)
    w_eh = jnp.stack([vc_w, vmo_w, lc_w, lmo_w], axis=0)
    w_ec = jnp.stack([id1_w2, id2_w2, ids_w2], axis=0)
    w_ce = jnp.stack([vfc_w, vbk_w], axis=0)

    return dict(
        embed_dim=E, num_class=p["num_class"],
        car_idloss=p["car_idloss"], mo_idloss=p["mo_idloss"],
        share_idloss=p["share_idloss"],
        logit_scale=p["logit_scale"],
        vec_e=vec_e, vec_h=vec_h, vec_c=vec_c,
        w_ee=w_ee, w_eh=w_eh, w_ec=w_ec, w_ce=w_ce,
    )


# ---------------------------------- forward ----------------------------------

def _pool_matrix(B, T):
    """Block-diagonal (B, B*T) mean-pooling matrix: pooling rides the MXU."""
    return jnp.kron(jnp.eye(B, dtype=jnp.float32),
                    jnp.full((1, T), 1.0 / T, jnp.float32))


def siamese_forward(pp, lang_hidden, main_hidden, crops_feat_nchw, motion_feat_nchw):
    E = pp["embed_dim"]
    H = E // 2
    ncls = pp["num_class"]
    ncls_pad = ((ncls + 127) // 128) * 128
    B = crops_feat_nchw.shape[0]

    # glue reshapes (layout plumbing only); (B*3, L, E) row-major groups rows
    # [3b, 3b+3) with batch b, so the mean over all 3L tokens matches torch's
    # .view(bsz, L, 3, -1).mean(dim=[1, 2]).
    lang_tokens = lang_hidden.reshape(-1, lang_hidden.shape[-1])     # (B*3L, E)
    main_tokens = main_hidden.reshape(-1, main_hidden.shape[-1])     # (B*Lm, E)
    crops_feat = crops_feat_nchw.reshape(B, -1)                      # (B, C_IN)
    motion_feat = motion_feat_nchw.reshape(B, -1)

    p_lang = _pool_matrix(B, lang_tokens.shape[0] // B)
    p_main = _pool_matrix(B, main_tokens.shape[0] // B)

    args = (lang_tokens, main_tokens, crops_feat, motion_feat, p_lang, p_main,
            pp["vec_e"], pp["vec_h"], pp["vec_c"],
            pp["w_ee"], pp["w_eh"], pp["w_ec"], pp["w_ce"])

    emb_slab, logits_slab = pl.pallas_call(
        make_fused_kernel(E, ncls, ncls_pad),
        out_shape=(jax.ShapeDtypeStruct((B, 6 * E), jnp.float32),
                   jax.ShapeDtypeStruct((B, 4 * ncls_pad), jnp.float32)),
        in_specs=[pl.BlockSpec(memory_space=pltpu.MemorySpace.VMEM)
                  for _ in args],
        out_specs=(pl.BlockSpec(memory_space=pltpu.MemorySpace.VMEM),
                   pl.BlockSpec(memory_space=pltpu.MemorySpace.VMEM)),
    )(*args)

    visual_car_embeds = emb_slab[:, 0 * E:0 * E + H]
    visual_mo_embeds = emb_slab[:, 1 * E:1 * E + H]
    lang_car_embeds = emb_slab[:, 2 * E:2 * E + H]
    lang_mo_embeds = emb_slab[:, 3 * E:3 * E + H]
    visual_merge_embeds = emb_slab[:, 4 * E:5 * E]
    lang_merge_embeds = emb_slab[:, 5 * E:6 * E]

    cls_logits_results = []
    if pp["car_idloss"]:
        cls_logits_results.append(logits_slab[:, 0 * ncls_pad:0 * ncls_pad + ncls])
    if pp["mo_idloss"]:
        cls_logits_results.append(logits_slab[:, 1 * ncls_pad:1 * ncls_pad + ncls])
    if pp["share_idloss"]:
        cls_logits_results.append(logits_slab[:, 2 * ncls_pad:2 * ncls_pad + ncls])
        cls_logits_results.append(logits_slab[:, 3 * ncls_pad:3 * ncls_pad + ncls])

    return ([(visual_car_embeds, lang_car_embeds),
             (visual_mo_embeds, lang_mo_embeds),
             (visual_merge_embeds, lang_merge_embeds)],
            pp["logit_scale"],
            cls_logits_results)


# --------------------------- pure-JAX reference -------------------------------

def reference_forward(p, lang_hidden, main_hidden, crops_nchw, motion_nchw):
    E = p["embed_dim"]
    B = crops_nchw.shape[0]

    def ln(x, g, b):
        mu = x.mean(-1, keepdims=True)
        var = ((x - mu) ** 2).mean(-1, keepdims=True)
        return (x - mu) / jnp.sqrt(var + EPS_LN) * g + b

    def bn(x, g, b, m, v):
        return (x - m) / jnp.sqrt(v + EPS_BN) * g + b

    def l2n(x):
        n = jnp.sqrt(jnp.sum(x * x, -1, keepdims=True))
        return x / jnp.maximum(n, EPS_NORM)

    def ln_lin_relu_lin(x, prm):
        g, b, w1, b1, w2, b2 = prm
        return jnp.maximum(ln(x, g, b) @ w1 + b1, 0.0) @ w2 + b2

    def lin_bn_relu_lin(x, prm):
        w1, b1, g, b, m, v, w2, b2 = prm
        return jnp.maximum(bn(x @ w1 + b1, g, b, m, v), 0.0) @ w2 + b2

    def bn_relu_lin(x, prm):
        g, b, m, v, w, bias = prm
        return jnp.maximum(bn(x, g, b, m, v), 0.0) @ w + bias

    def ln_relu_lin(x, prm):
        g, b, w, bias = prm
        return jnp.maximum(ln(x, g, b), 0.0) @ w + bias

    lang_pool = lang_hidden.reshape(B, -1, E).mean(axis=1)
    main_pool = main_hidden.mean(axis=1)
    lang_embeds = ln_lin_relu_lin(lang_pool, p["domian_lang_fc"])
    lang_main_embeds = ln_lin_relu_lin(main_pool, p["domian_lang_main_fc"])
    lang_merge = lin_bn_relu_lin(
        jnp.concatenate([lang_main_embeds, lang_embeds], -1), p["domian_lang_fc_merge"])

    crops = crops_nchw.reshape(B, -1)
    motion = motion_nchw.reshape(B, -1)
    visual_embeds = crops @ p["domian_vis_fc"][0] + p["domian_vis_fc"][1]
    motion_embeds = motion @ p["domian_vis_fc_bk"][0] + p["domian_vis_fc_bk"][1]
    visual_car = bn_relu_lin(visual_embeds, p["vis_car_fc"])
    visual_mo = bn_relu_lin(motion_embeds, p["vis_motion_fc"])
    visual_merge = lin_bn_relu_lin(
        jnp.concatenate([visual_car, visual_mo], -1), p["domian_vis_fc_merge"])

    logits = [lin_bn_relu_lin(visual_embeds, p["id_cls"]),
              lin_bn_relu_lin(motion_embeds, p["id_cls2"]),
              lin_bn_relu_lin(lang_merge, p["id_cls_share"]),
              lin_bn_relu_lin(visual_merge, p["id_cls_share"])]
    lang_car = ln_relu_lin(lang_main_embeds, p["lang_car_fc"])
    lang_mo = ln_relu_lin(lang_embeds, p["lang_motion_fc"])

    pairs = [(l2n(visual_car), l2n(lang_car)),
             (l2n(visual_mo), l2n(lang_mo)),
             (l2n(visual_merge), l2n(lang_merge))]
    return pairs, p["logit_scale"], logits


# ------------------------------------ main ------------------------------------

if __name__ == "__main__":
    B = 2          # batch size
    L = 8          # tokens per (sub-)description
    LM = 8         # tokens of the main description
    E = 128        # EMBED_DIM (== BERT hidden size in this model)
    C_IN = 256     # synthetic stand-in for img_in_dim=2048
    NUM_CLASS = 32

    key = jax.random.PRNGKey(0)
    kp, k1, k2, k3, k4 = jax.random.split(key, 5)
    raw_params = init_params(kp, E, C_IN, NUM_CLASS)
    packed_params = pack_params(raw_params)

    # synthetic deterministic backbone outputs
    lang_hidden = jax.random.normal(k1, (B * 3, L, E), jnp.float32)   # BERT last_hidden_state (3 NL / sample)
    main_hidden = jax.random.normal(k2, (B, LM, E), jnp.float32)      # BERT last_hidden_state (main NL)
    crops_feat = jax.random.normal(k3, (B, C_IN, 1, 1), jnp.float32)  # NCHW backbone output
    motion_feat = jax.random.normal(k4, (B, C_IN, 1, 1), jnp.float32)

    pairs, logit_scale, cls_logits = siamese_forward(
        packed_params, lang_hidden, main_hidden, crops_feat, motion_feat)
    jax.block_until_ready((pairs, logit_scale, cls_logits))

    # shape checks
    assert pairs[0][0].shape == (B, E // 2) and pairs[2][0].shape == (B, E)
    assert all(c.shape == (B, NUM_CLASS) for c in cls_logits)

    # numerical check against an unfused pure-JAX reference (eval-mode BN)
    ref_pairs, _, ref_logits = reference_forward(
        raw_params, lang_hidden, main_hidden, crops_feat, motion_feat)
    max_diff = 0.0
    for (a, b), (ra, rb) in zip(pairs, ref_pairs):
        max_diff = max(max_diff, float(jnp.max(jnp.abs(a - ra))),
                       float(jnp.max(jnp.abs(b - rb))))
    for c, rc in zip(cls_logits, ref_logits):
        max_diff = max(max_diff, float(jnp.max(jnp.abs(c - rc))))
    assert max_diff < 5e-2, f"mismatch vs reference: {max_diff}"

    print("KERNEL_OK")
</pallas_src>

<mosaic_0001>
module attributes {stable_mosaic.version = 11 : i64} {
  func.func @kernel(%arg0: memref<48x128xf32, #tpu.memory_space<vmem>>, %arg1: memref<16x128xf32, #tpu.memory_space<vmem>>, %arg2: memref<2x256xf32, #tpu.memory_space<vmem>>, %arg3: memref<2x256xf32, #tpu.memory_space<vmem>>, %arg4: memref<2x48xf32, #tpu.memory_space<vmem>>, %arg5: memref<2x16xf32, #tpu.memory_space<vmem>>, %arg6: memref<25x128xf32, #tpu.memory_space<vmem>>, %arg7: memref<4x64xf32, #tpu.memory_space<vmem>>, %arg8: memref<3x32xf32, #tpu.memory_space<vmem>>, %arg9: memref<12x128x128xf32, #tpu.memory_space<vmem>>, %arg10: memref<4x128x64xf32, #tpu.memory_space<vmem>>, %arg11: memref<3x128x32xf32, #tpu.memory_space<vmem>>, %arg12: memref<2x256x128xf32, #tpu.memory_space<vmem>>, %arg13: memref<2x768xf32, #tpu.memory_space<vmem>>, %arg14: memref<2x512xf32, #tpu.memory_space<vmem>>) attributes {dimension_semantics = [], scalar_prefetch = 0 : i64, scratch_operands = 0 : i64, tpu.core_type = #tpu.core_type<tc>} {
    %cst = arith.constant 0.000000e+00 : f32
    %0 = vector.broadcast %cst : f32 to vector<2x768xf32>
    %c0 = arith.constant 0 : index
    %c0_0 = arith.constant 0 : index
    %1 = vector.load %arg13[%c0, %c0_0] : memref<2x768xf32, #tpu.memory_space<vmem>>, vector<2x768xf32>
    tpu.vector_store %arg13[%c0, %c0_0], %0 {strides = array<i32>} : memref<2x768xf32, #tpu.memory_space<vmem>>, vector<2x768xf32>,
    %cst_1 = arith.constant 0.000000e+00 : f32
    %2 = vector.broadcast %cst_1 : f32 to vector<2x512xf32>
    %c0_2 = arith.constant 0 : index
    %c0_3 = arith.constant 0 : index
    %3 = vector.load %arg14[%c0_2, %c0_3] : memref<2x512xf32, #tpu.memory_space<vmem>>, vector<2x512xf32>
    tpu.vector_store %arg14[%c0_2, %c0_3], %2 {strides = array<i32>} : memref<2x512xf32, #tpu.memory_space<vmem>>, vector<2x512xf32>,
    %c0_4 = arith.constant 0 : index
    %c0_5 = arith.constant 0 : index
    %4 = vector.load %arg4[%c0_4, %c0_5] : memref<2x48xf32, #tpu.memory_space<vmem>>, vector<2x48xf32>
    %c0_6 = arith.constant 0 : index
    %c0_7 = arith.constant 0 : index
    %5 = vector.load %arg0[%c0_6, %c0_7] : memref<48x128xf32, #tpu.memory_space<vmem>>, vector<48x128xf32>
    %cst_8 = arith.constant dense<0.000000e+00> : vector<2x128xf32>
    %6 = tpu.matmul %4, %5, %cst_8 {dimension_numbers = #tpu.dot_dimension_numbers<[1], [0], [0], [1], [0, 0, 1, 1], [], []>} : vector<2x48xf32>, vector<48x128xf32>, vector<2x128xf32> -> vector<2x128xf32>
    %c0_9 = arith.constant 0 : index
    %c0_10 = arith.constant 0 : index
    %7 = vector.load %arg5[%c0_9, %c0_10] : memref<2x16xf32, #tpu.memory_space<vmem>>, vector<2x16xf32>
    %c0_11 = arith.constant 0 : index
    %c0_12 = arith.constant 0 : index
    %8 = vector.load %arg1[%c0_11, %c0_12] : memref<16x128xf32, #tpu.memory_space<vmem>>, vector<16x128xf32>
    %cst_13 = arith.constant dense<0.000000e+00> : vector<2x128xf32>
    %9 = tpu.matmul %7, %8, %cst_13 {dimension_numbers = #tpu.dot_dimension_numbers<[1], [0], [0], [1], [0, 0, 1, 1], [], []>} : vector<2x16xf32>, vector<16x128xf32>, vector<2x128xf32> -> vector<2x128xf32>
    %c0_14 = arith.constant 0 : index
    %c0_15 = arith.constant 0 : index
    %10 = vector.load %arg6[%c0_14, %c0_15] : memref<25x128xf32, #tpu.memory_space<vmem>>, vector<1x128xf32>
    %11 = vector.shape_cast %10 : vector<1x128xf32> to vector<128xf32>
    %c1 = arith.constant 1 : index
    %c0_16 = arith.constant 0 : index
    %12 = vector.load %arg6[%c1, %c0_16] : memref<25x128xf32, #tpu.memory_space<vmem>>, vector<1x128xf32>
    %13 = vector.shape_cast %12 : vector<1x128xf32> to vector<128xf32>
    %cst_17 = arith.constant dense<0.000000e+00> : vector<2xf32>
    %14 = vector.multi_reduction <add>, %6, %cst_17 [1] : vector<2x128xf32> to vector<2xf32>
    %15 = vector.shape_cast %14 : vector<2xf32> to vector<2x1xf32>
    %cst_18 = arith.constant 1.280000e+02 : f32
    %16 = vector.broadcast %cst_18 : f32 to vector<2x1xf32>
    %17 = arith.divf %15, %16 : vector<2x1xf32>
    %18 = vector.broadcast %17 : vector<2x1xf32> to vector<2x128xf32>
    %19 = arith.subf %6, %18 : vector<2x128xf32>
    %20 = arith.mulf %19, %19 : vector<2x128xf32>
    %cst_19 = arith.constant dense<0.000000e+00> : vector<2xf32>
    %21 = vector.multi_reduction <add>, %20, %cst_19 [1] : vector<2x128xf32> to vector<2xf32>
    %22 = vector.shape_cast %21 : vector<2xf32> to vector<2x1xf32>
    %cst_20 = arith.constant 1.280000e+02 : f32
    %23 = vector.broadcast %cst_20 : f32 to vector<2x1xf32>
    %24 = arith.divf %22, %23 : vector<2x1xf32>
    %25 = vector.broadcast %17 : vector<2x1xf32> to vector<2x128xf32>
    %26 = arith.subf %6, %25 : vector<2x128xf32>
    %cst_21 = arith.constant 9.99999974E-6 : f32
    %27 = vector.broadcast %cst_21 : f32 to vector<2x1xf32>
    %28 = arith.addf %24, %27 : vector<2x1xf32>
    %29 = math.rsqrt %28 : vector<2x1xf32>
    %30 = vector.broadcast %29 : vector<2x1xf32> to vector<2x128xf32>
    %31 = arith.mulf %26, %30 : vector<2x128xf32>
    %32 = vector.shape_cast %11 : vector<128xf32> to vector<1x128xf32>
    %33 = vector.broadcast %32 : vector<1x128xf32> to vector<2x128xf32>
    %34 = arith.mulf %31, %33 : vector<2x128xf32>
    %35 = vector.shape_cast %13 : vector<128xf32> to vector<1x128xf32>
    %36 = vector.broadcast %35 : vector<1x128xf32> to vector<2x128xf32>
    %37 = arith.addf %34, %36 : vector<2x128xf32>
    %c0_22 = arith.constant 0 : index
    %c0_23 = arith.constant 0 : index
    %c0_24 = arith.constant 0 : index
    %38 = vector.load %arg9[%c0_22, %c0_23, %c0_24] : memref<12x128x128xf32, #tpu.memory_space<vmem>>, vector<1x128x128xf32>
    %39 = vector.shape_cast %38 : vector<1x128x128xf32> to vector<128x128xf32>
    %cst_25 = arith.constant dense<0.000000e+00> : vector<2x128xf32>
    %40 = tpu.matmul %37, %39, %cst_25 {dimension_numbers = #tpu.dot_dimension_numbers<[1], [0], [0], [1], [0, 0, 1, 1], [], []>} : vector<2x128xf32>, vector<128x128xf32>, vector<2x128xf32> -> vector<2x128xf32>
    %c2 = arith.constant 2 : index
    %c0_26 = arith.constant 0 : index
    %41 = vector.load %arg6[%c2, %c0_26] : memref<25x128xf32, #tpu.memory_space<vmem>>, vector<1x128xf32>
    %42 = vector.shape_cast %41 : vector<1x128xf32> to vector<128xf32>
    %43 = vector.shape_cast %42 : vector<128xf32> to vector<1x128xf32>
    %44 = vector.broadcast %43 : vector<1x128xf32> to vector<2x128xf32>
    %45 = arith.addf %40, %44 : vector<2x128xf32>
    %cst_27 = arith.constant 0.000000e+00 : f32
    %46 = vector.broadcast %cst_27 : f32 to vector<2x128xf32>
    %47 = arith.maximumf %45, %46 : vector<2x128xf32>
    %c1_28 = arith.constant 1 : index
    %c0_29 = arith.constant 0 : index
    %c0_30 = arith.constant 0 : index
    %48 = vector.load %arg9[%c1_28, %c0_29, %c0_30] : memref<12x128x128xf32, #tpu.memory_space<vmem>>, vector<1x128x128xf32>
    %49 = vector.shape_cast %48 : vector<1x128x128xf32> to vector<128x128xf32>
    %cst_31 = arith.constant dense<0.000000e+00> : vector<2x128xf32>
    %50 = tpu.matmul %47, %49, %cst_31 {dimension_numbers = #tpu.dot_dimension_numbers<[1], [0], [0], [1], [0, 0, 1, 1], [], []>} : vector<2x128xf32>, vector<128x128xf32>, vector<2x128xf32> -> vector<2x128xf32>
    %c3 = arith.constant 3 : index
    %c0_32 = arith.constant 0 : index
    %51 = vector.load %arg6[%c3, %c0_32] : memref<25x128xf32, #tpu.memory_space<vmem>>, vector<1x128xf32>
    %52 = vector.shape_cast %51 : vector<1x128xf32> to vector<128xf32>
    %53 = vector.shape_cast %52 : vector<128xf32> to vector<1x128xf32>
    %54 = vector.broadcast %53 : vector<1x128xf32> to vector<2x128xf32>
    %55 = arith.addf %50, %54 : vector<2x128xf32>
    %c4 = arith.constant 4 : index
    %c0_33 = arith.constant 0 : index
    %56 = vector.load %arg6[%c4, %c0_33] : memref<25x128xf32, #tpu.memory_space<vmem>>, vector<1x128xf32>
    %57 = vector.shape_cast %56 : vector<1x128xf32> to vector<128xf32>
    %c5 = arith.constant 5 : index
    %c0_34 = arith.constant 0 : index
    %58 = vector.load %arg6[%c5, %c0_34] : memref<25x128xf32, #tpu.memory_space<vmem>>, vector<1x128xf32>
    %59 = vector.shape_cast %58 : vector<1x128xf32> to vector<128xf32>
    %cst_35 = arith.constant dense<0.000000e+00> : vector<2xf32>
    %60 = vector.multi_reduction <add>, %9, %cst_35 [1] : vector<2x128xf32> to vector<2xf32>
    %61 = vector.shape_cast %60 : vector<2xf32> to vector<2x1xf32>
    %cst_36 = arith.constant 1.280000e+02 : f32
    %62 = vector.broadcast %cst_36 : f32 to vector<2x1xf32>
    %63 = arith.divf %61, %62 : vector<2x1xf32>
    %64 = vector.broadcast %63 : vector<2x1xf32> to vector<2x128xf32>
    %65 = arith.subf %9, %64 : vector<2x128xf32>
    %66 = arith.mulf %65, %65 : vector<2x128xf32>
    %cst_37 = arith.constant dense<0.000000e+00> : vector<2xf32>
    %67 = vector.multi_reduction <add>, %66, %cst_37 [1] : vector<2x128xf32> to vector<2xf32>
    %68 = vector.shape_cast %67 : vector<2xf32> to vector<2x1xf32>
    %cst_38 = arith.constant 1.280000e+02 : f32
    %69 = vector.broadcast %cst_38 : f32 to vector<2x1xf32>
    %70 = arith.divf %68, %69 : vector<2x1xf32>
    %71 = vector.broadcast %63 : vector<2x1xf32> to vector<2x128xf32>
    %72 = arith.subf %9, %71 : vector<2x128xf32>
    %cst_39 = arith.constant 9.99999974E-6 : f32
    %73 = vector.broadcast %cst_39 : f32 to vector<2x1xf32>
    %74 = arith.addf %70, %73 : vector<2x1xf32>
    %75 = math.rsqrt %74 : vector<2x1xf32>
    %76 = vector.broadcast %75 : vector<2x1xf32> to vector<2x128xf32>
    %77 = arith.mulf %72, %76 : vector<2x128xf32>
    %78 = vector.shape_cast %57 : vector<128xf32> to vector<1x128xf32>
    %79 = vector.broadcast %78 : vector<1x128xf32> to vector<2x128xf32>
    %80 = arith.mulf %77, %79 : vector<2x128xf32>
    %81 = vector.shape_cast %59 : vector<128xf32> to vector<1x128xf32>
    %82 = vector.broadcast %81 : vector<1x128xf32> to vector<2x128xf32>
    %83 = arith.addf %80, %82 : vector<2x128xf32>
    %c2_40 = arith.constant 2 : index
    %c0_41 = arith.constant 0 : index
    %c0_42 = arith.constant 0 : index
    %84 = vector.load %arg9[%c2_40, %c0_41, %c0_42] : memref<12x128x128xf32, #tpu.memory_space<vmem>>, vector<1x128x128xf32>
    %85 = vector.shape_cast %84 : vector<1x128x128xf32> to vector<128x128xf32>
    %cst_43 = arith.constant dense<0.000000e+00> : vector<2x128xf32>
    %86 = tpu.matmul %83, %85, %cst_43 {dimension_numbers = #tpu.dot_dimension_numbers<[1], [0], [0], [1], [0, 0, 1, 1], [], []>} : vector<2x128xf32>, vector<128x128xf32>, vector<2x128xf32> -> vector<2x128xf32>
    %c6 = arith.constant 6 : index
    %c0_44 = arith.constant 0 : index
    %87 = vector.load %arg6[%c6, %c0_44] : memref<25x128xf32, #tpu.memory_space<vmem>>, vector<1x128xf32>
    %88 = vector.shape_cast %87 : vector<1x128xf32> to vector<128xf32>
    %89 = vector.shape_cast %88 : vector<128xf32> to vector<1x128xf32>
    %90 = vector.broadcast %89 : vector<1x128xf32> to vector<2x128xf32>
    %91 = arith.addf %86, %90 : vector<2x128xf32>
    %cst_45 = arith.constant 0.000000e+00 : f32
    %92 = vector.broadcast %cst_45 : f32 to vector<2x128xf32>
    %93 = arith.maximumf %91, %92 : vector<2x128xf32>
    %c3_46 = arith.constant 3 : index
    %c0_47 = arith.constant 0 : index
    %c0_48 = arith.constant 0 : index
    %94 = vector.load %arg9[%c3_46, %c0_47, %c0_48] : memref<12x128x128xf32, #tpu.memory_space<vmem>>, vector<1x128x128xf32>
    %95 = vector.shape_cast %94 : vector<1x128x128xf32> to vector<128x128xf32>
    %cst_49 = arith.constant dense<0.000000e+00> : vector<2x128xf32>
    %96 = tpu.matmul %93, %95, %cst_49 {dimension_numbers = #tpu.dot_dimension_numbers<[1], [0], [0], [1], [0, 0, 1, 1], [], []>} : vector<2x128xf32>, vector<128x128xf32>, vector<2x128xf32> -> vector<2x128xf32>
    %c7 = arith.constant 7 : index
    %c0_50 = arith.constant 0 : index
    %97 = vector.load %arg6[%c7, %c0_50] : memref<25x128xf32, #tpu.memory_space<vmem>>, vector<1x128xf32>
    %98 = vector.shape_cast %97 : vector<1x128xf32> to vector<128xf32>
    %99 = vector.shape_cast %98 : vector<128xf32> to vector<1x128xf32>
    %100 = vector.broadcast %99 : vector<1x128xf32> to vector<2x128xf32>
    %101 = arith.addf %96, %100 : vector<2x128xf32>
    %c4_51 = arith.constant 4 : index
    %c0_52 = arith.constant 0 : index
    %c0_53 = arith.constant 0 : index
    %102 = vector.load %arg9[%c4_51, %c0_52, %c0_53] : memref<12x128x128xf32, #tpu.memory_space<vmem>>, vector<1x128x128xf32>
    %103 = vector.shape_cast %102 : vector<1x128x128xf32> to vector<128x128xf32>
    %cst_54 = arith.constant dense<0.000000e+00> : vector<2x128xf32>
    %104 = tpu.matmul %101, %103, %cst_54 {dimension_numbers = #tpu.dot_dimension_numbers<[1], [0], [0], [1], [0, 0, 1, 1], [], []>} : vector<2x128xf32>, vector<128x128xf32>, vector<2x128xf32> -> vector<2x128xf32>
    %c5_55 = arith.constant 5 : index
    %c0_56 = arith.constant 0 : index
    %c0_57 = arith.constant 0 : index
    %105 = vector.load %arg9[%c5_55, %c0_56, %c0_57] : memref<12x128x128xf32, #tpu.memory_space<vmem>>, vector<1x128x128xf32>
    %106 = vector.shape_cast %105 : vector<1x128x128xf32> to vector<128x128xf32>
    %cst_58 = arith.constant dense<0.000000e+00> : vector<2x128xf32>
    %107 = tpu.matmul %55, %106, %cst_58 {dimension_numbers = #tpu.dot_dimension_numbers<[1], [0], [0], [1], [0, 0, 1, 1], [], []>} : vector<2x128xf32>, vector<128x128xf32>, vector<2x128xf32> -> vector<2x128xf32>
    %108 = arith.addf %104, %107 : vector<2x128xf32>
    %c8 = arith.constant 8 : index
    %c0_59 = arith.constant 0 : index
    %109 = vector.load %arg6[%c8, %c0_59] : memref<25x128xf32, #tpu.memory_space<vmem>>, vector<1x128xf32>
    %110 = vector.shape_cast %109 : vector<1x128xf32> to vector<128xf32>
    %111 = vector.shape_cast %110 : vector<128xf32> to vector<1x128xf32>
    %112 = vector.broadcast %111 : vector<1x128xf32> to vector<2x128xf32>
    %113 = arith.addf %108, %112 : vector<2x128xf32>
    %cst_60 = arith.constant 0.000000e+00 : f32
    %114 = vector.broadcast %cst_60 : f32 to vector<2x128xf32>
    %115 = arith.maximumf %113, %114 : vector<2x128xf32>
    %c6_61 = arith.constant 6 : index
    %c0_62 = arith.constant 0 : index
    %c0_63 = arith.constant 0 : index
    %116 = vector.load %arg9[%c6_61, %c0_62, %c0_63] : memref<12x128x128xf32, #tpu.memory_space<vmem>>, vector<1x128x128xf32>
    %117 = vector.shape_cast %116 : vector<1x128x128xf32> to vector<128x128xf32>
    %cst_64 = arith.constant dense<0.000000e+00> : vector<2x128xf32>
    %118 = tpu.matmul %115, %117, %cst_64 {dimension_numbers = #tpu.dot_dimension_numbers<[1], [0], [0], [1], [0, 0, 1, 1], [], []>} : vector<2x128xf32>, vector<128x128xf32>, vector<2x128xf32> -> vector<2x128xf32>
    %c9 = arith.constant 9 : index
    %c0_65 = arith.constant 0 : index
    %119 = vector.load %arg6[%c9, %c0_65] : memref<25x128xf32, #tpu.memory_space<vmem>>, vector<1x128xf32>
    %120 = vector.shape_cast %119 : vector<1x128xf32> to vector<128xf32>
    %121 = vector.shape_cast %120 : vector<128xf32> to vector<1x128xf32>
    %122 = vector.broadcast %121 : vector<1x128xf32> to vector<2x128xf32>
    %123 = arith.addf %118, %122 : vector<2x128xf32>
    %c0_66 = arith.constant 0 : index
    %c0_67 = arith.constant 0 : index
    %124 = vector.load %arg2[%c0_66, %c0_67] : memref<2x256xf32, #tpu.memory_space<vmem>>, vector<2x256xf32>
    %c0_68 = arith.constant 0 : index
    %c0_69 = arith.constant 0 : index
    %c0_70 = arith.constant 0 : index
    %125 = vector.load %arg12[%c0_68, %c0_69, %c0_70] : memref<2x256x128xf32, #tpu.memory_space<vmem>>, vector<1x256x128xf32>
    %126 = vector.shape_cast %125 : vector<1x256x128xf32> to vector<256x128xf32>
    %cst_71 = arith.constant dense<0.000000e+00> : vector<2x128xf32>
    %127 = tpu.matmul %124, %126, %cst_71 {dimension_numbers = #tpu.dot_dimension_numbers<[1], [0], [0], [1], [0, 0, 1, 1], [], []>} : vector<2x256xf32>, vector<256x128xf32>, vector<2x128xf32> -> vector<2x128xf32>
    %c23 = arith.constant 23 : index
    %c0_72 = arith.constant 0 : index
    %128 = vector.load %arg6[%c23, %c0_72] : memref<25x128xf32, #tpu.memory_space<vmem>>, vector<1x128xf32>
    %129 = vector.shape_cast %128 : vector<1x128xf32> to vector<128xf32>
    %130 = vector.shape_cast %129 : vector<128xf32> to vector<1x128xf32>
    %131 = vector.broadcast %130 : vector<1x128xf32> to vector<2x128xf32>
    %132 = arith.addf %127, %131 : vector<2x128xf32>
    %c0_73 = arith.constant 0 : index
    %c0_74 = arith.constant 0 : index
    %133 = vector.load %arg3[%c0_73, %c0_74] : memref<2x256xf32, #tpu.memory_space<vmem>>, vector<2x256xf32>
    %c1_75 = arith.constant 1 : index
    %c0_76 = arith.constant 0 : index
    %c0_77 = arith.constant 0 : index
    %134 = vector.load %arg12[%c1_75, %c0_76, %c0_77] : memref<2x256x128xf32, #tpu.memory_space<vmem>>, vector<1x256x128xf32>
    %135 = vector.shape_cast %134 : vector<1x256x128xf32> to vector<256x128xf32>
    %cst_78 = arith.constant dense<0.000000e+00> : vector<2x128xf32>
    %136 = tpu.matmul %133, %135, %cst_78 {dimension_numbers = #tpu.dot_dimension_numbers<[1], [0], [0], [1], [0, 0, 1, 1], [], []>} : vector<2x256xf32>, vector<256x128xf32>, vector<2x128xf32> -> vector<2x128xf32>
    %c24 = arith.constant 24 : index
    %c0_79 = arith.constant 0 : index
    %137 = vector.load %arg6[%c24, %c0_79] : memref<25x128xf32, #tpu.memory_space<vmem>>, vector<1x128xf32>
    %138 = vector.shape_cast %137 : vector<1x128xf32> to vector<128xf32>
    %139 = vector.shape_cast %138 : vector<128xf32> to vector<1x128xf32>
    %140 = vector.broadcast %139 : vector<1x128xf32> to vector<2x128xf32>
    %141 = arith.addf %136, %140 : vector<2x128xf32>
    %c12 = arith.constant 12 : index
    %c0_80 = arith.constant 0 : index
    %142 = vector.load %arg6[%c12, %c0_80] : memref<25x128xf32, #tpu.memory_space<vmem>>, vector<1x128xf32>
    %143 = vector.shape_cast %142 : vector<1x128xf32> to vector<128xf32>
    %144 = vector.shape_cast %143 : vector<128xf32> to vector<1x128xf32>
    %145 = vector.broadcast %144 : vector<1x128xf32> to vector<2x128xf32>
    %146 = arith.mulf %132, %145 : vector<2x128xf32>
    %c13 = arith.constant 13 : index
    %c0_81 = arith.constant 0 : index
    %147 = vector.load %arg6[%c13, %c0_81] : memref<25x128xf32, #tpu.memory_space<vmem>>, vector<1x128xf32>
    %148 = vector.shape_cast %147 : vector<1x128xf32> to vector<128xf32>
    %149 = vector.shape_cast %148 : vector<128xf32> to vector<1x128xf32>
    %150 = vector.broadcast %149 : vector<1x128xf32> to vector<2x128xf32>
    %151 = arith.addf %146, %150 : vector<2x128xf32>
    %cst_82 = arith.constant 0.000000e+00 : f32
    %152 = vector.broadcast %cst_82 : f32 to vector<2x128xf32>
    %153 = arith.maximumf %151, %152 : vector<2x128xf32>
    %c0_83 = arith.constant 0 : index
    %c0_84 = arith.constant 0 : index
    %c0_85 = arith.constant 0 : index
    %154 = vector.load %arg10[%c0_83, %c0_84, %c0_85] : memref<4x128x64xf32, #tpu.memory_space<vmem>>, vector<1x128x64xf32>
    %155 = vector.shape_cast %154 : vector<1x128x64xf32> to vector<128x64xf32>
    %cst_86 = arith.constant dense<0.000000e+00> : vector<2x64xf32>
    %156 = tpu.matmul %153, %155, %cst_86 {dimension_numbers = #tpu.dot_dimension_numbers<[1], [0], [0], [1], [0, 0, 1, 1], [], []>} : vector<2x128xf32>, vector<128x64xf32>, vector<2x64xf32> -> vector<2x64xf32>
    %c0_87 = arith.constant 0 : index
    %c0_88 = arith.constant 0 : index
    %157 = vector.load %arg7[%c0_87, %c0_88] : memref<4x64xf32, #tpu.memory_space<vmem>>, vector<1x64xf32>
    %158 = vector.shape_cast %157 : vector<1x64xf32> to vector<64xf32>
    %159 = vector.shape_cast %158 : vector<64xf32> to vector<1x64xf32>
    %160 = vector.broadcast %159 : vector<1x64xf32> to vector<2x64xf32>
    %161 = arith.addf %156, %160 : vector<2x64xf32>
    %c14 = arith.constant 14 : index
    %c0_89 = arith.constant 0 : index
    %162 = vector.load %arg6[%c14, %c0_89] : memref<25x128xf32, #tpu.memory_space<vmem>>, vector<1x128xf32>
    %163 = vector.shape_cast %162 : vector<1x128xf32> to vector<128xf32>
    %164 = vector.shape_cast %163 : vector<128xf32> to vector<1x128xf32>
    %165 = vector.broadcast %164 : vector<1x128xf32> to vector<2x128xf32>
    %166 = arith.mulf %141, %165 : vector<2x128xf32>
    %c15 = arith.constant 15 : index
    %c0_90 = arith.constant 0 : index
    %167 = vector.load %arg6[%c15, %c0_90] : memref<25x128xf32, #tpu.memory_space<vmem>>, vector<1x128xf32>
    %168 = vector.shape_cast %167 : vector<1x128xf32> to vector<128xf32>
    %169 = vector.shape_cast %168 : vector<128xf32> to vector<1x128xf32>
    %170 = vector.broadcast %169 : vector<1x128xf32> to vector<2x128xf32>
    %171 = arith.addf %166, %170 : vector<2x128xf32>
    %cst_91 = arith.constant 0.000000e+00 : f32
    %172 = vector.broadcast %cst_91 : f32 to vector<2x128xf32>
    %173 = arith.maximumf %171, %172 : vector<2x128xf32>
    %c1_92 = arith.constant 1 : index
    %c0_93 = arith.constant 0 : index
    %c0_94 = arith.constant 0 : index
    %174 = vector.load %arg10[%c1_92, %c0_93, %c0_94] : memref<4x128x64xf32, #tpu.memory_space<vmem>>, vector<1x128x64xf32>
    %175 = vector.shape_cast %174 : vector<1x128x64xf32> to vector<128x64xf32>
    %cst_95 = arith.constant dense<0.000000e+00> : vector<2x64xf32>
    %176 = tpu.matmul %173, %175, %cst_95 {dimension_numbers = #tpu.dot_dimension_numbers<[1], [0], [0], [1], [0, 0, 1, 1], [], []>} : vector<2x128xf32>, vector<128x64xf32>, vector<2x64xf32> -> vector<2x64xf32>
    %c1_96 = arith.constant 1 : index
    %c0_97 = arith.constant 0 : index
    %177 = vector.load %arg7[%c1_96, %c0_97] : memref<4x64xf32, #tpu.memory_space<vmem>>, vector<1x64xf32>
    %178 = vector.shape_cast %177 : vector<1x64xf32> to vector<64xf32>
    %179 = vector.shape_cast %178 : vector<64xf32> to vector<1x64xf32>
    %180 = vector.broadcast %179 : vector<1x64xf32> to vector<2x64xf32>
    %181 = arith.addf %176, %180 : vector<2x64xf32>
    %c7_98 = arith.constant 7 : index
    %c0_99 = arith.constant 0 : index
    %c0_100 = arith.constant 0 : index
    %182 = vector.load %arg9[%c7_98, %c0_99, %c0_100] : memref<12x128x128xf32, #tpu.memory_space<vmem>>, vector<1x128x128xf32>
    %183 = vector.shape_cast %182 : vector<1x128x128xf32> to vector<128x128xf32>
    %184 = vector.extract_strided_slice %183 {offsets = [0, 0], sizes = [64, 128], strides = [1, 1]} : vector<128x128xf32> to vector<64x128xf32>
    %cst_101 = arith.constant dense<0.000000e+00> : vector<2x128xf32>
    %185 = tpu.matmul %161, %184, %cst_101 {dimension_numbers = #tpu.dot_dimension_numbers<[1], [0], [0], [1], [0, 0, 1, 1], [], []>} : vector<2x64xf32>, vector<64x128xf32>, vector<2x128xf32> -> vector<2x128xf32>
    %186 = vector.extract_strided_slice %183 {offsets = [64, 0], sizes = [64, 128], strides = [1, 1]} : vector<128x128xf32> to vector<64x128xf32>
    %cst_102 = arith.constant dense<0.000000e+00> : vector<2x128xf32>
    %187 = tpu.matmul %181, %186, %cst_102 {dimension_numbers = #tpu.dot_dimension_numbers<[1], [0], [0], [1], [0, 0, 1, 1], [], []>} : vector<2x64xf32>, vector<64x128xf32>, vector<2x128xf32> -> vector<2x128xf32>
    %188 = arith.addf %185, %187 : vector<2x128xf32>
    %c10 = arith.constant 10 : index
    %c0_103 = arith.constant 0 : index
    %189 = vector.load %arg6[%c10, %c0_103] : memref<25x128xf32, #tpu.memory_space<vmem>>, vector<1x128xf32>
    %190 = vector.shape_cast %189 : vector<1x128xf32> to vector<128xf32>
    %191 = vector.shape_cast %190 : vector<128xf32> to vector<1x128xf32>
    %192 = vector.broadcast %191 : vector<1x128xf32> to vector<2x128xf32>
    %193 = arith.addf %188, %192 : vector<2x128xf32>
    %cst_104 = arith.constant 0.000000e+00 : f32
    %194 = vector.broadcast %cst_104 : f32 to vector<2x128xf32>
    %195 = arith.maximumf %193, %194 : vector<2x128xf32>
    %c8_105 = arith.constant 8 : index
    %c0_106 = arith.constant 0 : index
    %c0_107 = arith.constant 0 : index
    %196 = vector.load %arg9[%c8_105, %c0_106, %c0_107] : memref<12x128x128xf32, #tpu.memory_space<vmem>>, vector<1x128x128xf32>
    %197 = vector.shape_cast %196 : vector<1x128x128xf32> to vector<128x128xf32>
    %cst_108 = arith.constant dense<0.000000e+00> : vector<2x128xf32>
    %198 = tpu.matmul %195, %197, %cst_108 {dimension_numbers = #tpu.dot_dimension_numbers<[1], [0], [0], [1], [0, 0, 1, 1], [], []>} : vector<2x128xf32>, vector<128x128xf32>, vector<2x128xf32> -> vector<2x128xf32>
    %c11 = arith.constant 11 : index
    %c0_109 = arith.constant 0 : index
    %199 = vector.load %arg6[%c11, %c0_109] : memref<25x128xf32, #tpu.memory_space<vmem>>, vector<1x128xf32>
    %200 = vector.shape_cast %199 : vector<1x128xf32> to vector<128xf32>
    %201 = vector.shape_cast %200 : vector<128xf32> to vector<1x128xf32>
    %202 = vector.broadcast %201 : vector<1x128xf32> to vector<2x128xf32>
    %203 = arith.addf %198, %202 : vector<2x128xf32>
    %c16 = arith.constant 16 : index
    %c0_110 = arith.constant 0 : index
    %204 = vector.load %arg6[%c16, %c0_110] : memref<25x128xf32, #tpu.memory_space<vmem>>, vector<1x128xf32>
    %205 = vector.shape_cast %204 : vector<1x128xf32> to vector<128xf32>
    %c17 = arith.constant 17 : index
    %c0_111 = arith.constant 0 : index
    %206 = vector.load %arg6[%c17, %c0_111] : memref<25x128xf32, #tpu.memory_space<vmem>>, vector<1x128xf32>
    %207 = vector.shape_cast %206 : vector<1x128xf32> to vector<128xf32>
    %cst_112 = arith.constant dense<0.000000e+00> : vector<2xf32>
    %208 = vector.multi_reduction <add>, %101, %cst_112 [1] : vector<2x128xf32> to vector<2xf32>
    %209 = vector.shape_cast %208 : vector<2xf32> to vector<2x1xf32>
    %cst_113 = arith.constant 1.280000e+02 : f32
    %210 = vector.broadcast %cst_113 : f32 to vector<2x1xf32>
    %211 = arith.divf %209, %210 : vector<2x1xf32>
    %212 = vector.broadcast %211 : vector<2x1xf32> to vector<2x128xf32>
    %213 = arith.subf %101, %212 : vector<2x128xf32>
    %214 = arith.mulf %213, %213 : vector<2x128xf32>
    %cst_114 = arith.constant dense<0.000000e+00> : vector<2xf32>
    %215 = vector.multi_reduction <add>, %214, %cst_114 [1] : vector<2x128xf32> to vector<2xf32>
    %216 = vector.shape_cast %215 : vector<2xf32> to vector<2x1xf32>
    %cst_115 = arith.constant 1.280000e+02 : f32
    %217 = vector.broadcast %cst_115 : f32 to vector<2x1xf32>
    %218 = arith.divf %216, %217 : vector<2x1xf32>
    %219 = vector.broadcast %211 : vector<2x1xf32> to vector<2x128xf32>
    %220 = arith.subf %101, %219 : vector<2x128xf32>
    %cst_116 = arith.constant 9.99999974E-6 : f32
    %221 = vector.broadcast %cst_116 : f32 to vector<2x1xf32>
    %222 = arith.addf %218, %221 : vector<2x1xf32>
    %223 = math.rsqrt %222 : vector<2x1xf32>
    %224 = vector.broadcast %223 : vector<2x1xf32> to vector<2x128xf32>
    %225 = arith.mulf %220, %224 : vector<2x128xf32>
    %226 = vector.shape_cast %205 : vector<128xf32> to vector<1x128xf32>
    %227 = vector.broadcast %226 : vector<1x128xf32> to vector<2x128xf32>
    %228 = arith.mulf %225, %227 : vector<2x128xf32>
    %229 = vector.shape_cast %207 : vector<128xf32> to vector<1x128xf32>
    %230 = vector.broadcast %229 : vector<1x128xf32> to vector<2x128xf32>
    %231 = arith.addf %228, %230 : vector<2x128xf32>
    %cst_117 = arith.constant 0.000000e+00 : f32
    %232 = vector.broadcast %cst_117 : f32 to vector<2x128xf32>
    %233 = arith.maximumf %231, %232 : vector<2x128xf32>
    %c2_118 = arith.constant 2 : index
    %c0_119 = arith.constant 0 : index
    %c0_120 = arith.constant 0 : index
    %234 = vector.load %arg10[%c2_118, %c0_119, %c0_120] : memref<4x128x64xf32, #tpu.memory_space<vmem>>, vector<1x128x64xf32>
    %235 = vector.shape_cast %234 : vector<1x128x64xf32> to vector<128x64xf32>
    %cst_121 = arith.constant dense<0.000000e+00> : vector<2x64xf32>
    %236 = tpu.matmul %233, %235, %cst_121 {dimension_numbers = #tpu.dot_dimension_numbers<[1], [0], [0], [1], [0, 0, 1, 1], [], []>} : vector<2x128xf32>, vector<128x64xf32>, vector<2x64xf32> -> vector<2x64xf32>
    %c2_122 = arith.constant 2 : index
    %c0_123 = arith.constant 0 : index
    %237 = vector.load %arg7[%c2_122, %c0_123] : memref<4x64xf32, #tpu.memory_space<vmem>>, vector<1x64xf32>
    %238 = vector.shape_cast %237 : vector<1x64xf32> to vector<64xf32>
    %239 = vector.shape_cast %238 : vector<64xf32> to vector<1x64xf32>
    %240 = vector.broadcast %239 : vector<1x64xf32> to vector<2x64xf32>
    %241 = arith.addf %236, %240 : vector<2x64xf32>
    %c18 = arith.constant 18 : index
    %c0_124 = arith.constant 0 : index
    %242 = vector.load %arg6[%c18, %c0_124] : memref<25x128xf32, #tpu.memory_space<vmem>>, vector<1x128xf32>
    %243 = vector.shape_cast %242 : vector<1x128xf32> to vector<128xf32>
    %c19 = arith.constant 19 : index
    %c0_125 = arith.constant 0 : index
    %244 = vector.load %arg6[%c19, %c0_125] : memref<25x128xf32, #tpu.memory_space<vmem>>, vector<1x128xf32>
    %245 = vector.shape_cast %244 : vector<1x128xf32> to vector<128xf32>
    %cst_126 = arith.constant dense<0.000000e+00> : vector<2xf32>
    %246 = vector.multi_reduction <add>, %55, %cst_126 [1] : vector<2x128xf32> to vector<2xf32>
    %247 = vector.shape_cast %246 : vector<2xf32> to vector<2x1xf32>
    %cst_127 = arith.constant 1.280000e+02 : f32
    %248 = vector.broadcast %cst_127 : f32 to vector<2x1xf32>
    %249 = arith.divf %247, %248 : vector<2x1xf32>
    %250 = vector.broadcast %249 : vector<2x1xf32> to vector<2x128xf32>
    %251 = arith.subf %55, %250 : vector<2x128xf32>
    %252 = arith.mulf %251, %251 : vector<2x128xf32>
    %cst_128 = arith.constant dense<0.000000e+00> : vector<2xf32>
    %253 = vector.multi_reduction <add>, %252, %cst_128 [1] : vector<2x128xf32> to vector<2xf32>
    %254 = vector.shape_cast %253 : vector<2xf32> to vector<2x1xf32>
    %cst_129 = arith.constant 1.280000e+02 : f32
    %255 = vector.broadcast %cst_129 : f32 to vector<2x1xf32>
    %256 = arith.divf %254, %255 : vector<2x1xf32>
    %257 = vector.broadcast %249 : vector<2x1xf32> to vector<2x128xf32>
    %258 = arith.subf %55, %257 : vector<2x128xf32>
    %cst_130 = arith.constant 9.99999974E-6 : f32
    %259 = vector.broadcast %cst_130 : f32 to vector<2x1xf32>
    %260 = arith.addf %256, %259 : vector<2x1xf32>
    %261 = math.rsqrt %260 : vector<2x1xf32>
    %262 = vector.broadcast %261 : vector<2x1xf32> to vector<2x128xf32>
    %263 = arith.mulf %258, %262 : vector<2x128xf32>
    %264 = vector.shape_cast %243 : vector<128xf32> to vector<1x128xf32>
    %265 = vector.broadcast %264 : vector<1x128xf32> to vector<2x128xf32>
    %266 = arith.mulf %263, %265 : vector<2x128xf32>
    %267 = vector.shape_cast %245 : vector<128xf32> to vector<1x128xf32>
    %268 = vector.broadcast %267 : vector<1x128xf32> to vector<2x128xf32>
    %269 = arith.addf %266, %268 : vector<2x128xf32>
    %cst_131 = arith.constant 0.000000e+00 : f32
    %270 = vector.broadcast %cst_131 : f32 to vector<2x128xf32>
    %271 = arith.maximumf %269, %270 : vector<2x128xf32>
    %c3_132 = arith.constant 3 : index
    %c0_133 = arith.constant 0 : index
    %c0_134 = arith.constant 0 : index
    %272 = vector.load %arg10[%c3_132, %c0_133, %c0_134] : memref<4x128x64xf32, #tpu.memory_space<vmem>>, vector<1x128x64xf32>
    %273 = vector.shape_cast %272 : vector<1x128x64xf32> to vector<128x64xf32>
    %cst_135 = arith.constant dense<0.000000e+00> : vector<2x64xf32>
    %274 = tpu.matmul %271, %273, %cst_135 {dimension_numbers = #tpu.dot_dimension_numbers<[1], [0], [0], [1], [0, 0, 1, 1], [], []>} : vector<2x128xf32>, vector<128x64xf32>, vector<2x64xf32> -> vector<2x64xf32>
    %c3_136 = arith.constant 3 : index
    %c0_137 = arith.constant 0 : index
    %275 = vector.load %arg7[%c3_136, %c0_137] : memref<4x64xf32, #tpu.memory_space<vmem>>, vector<1x64xf32>
    %276 = vector.shape_cast %275 : vector<1x64xf32> to vector<64xf32>
    %277 = vector.shape_cast %276 : vector<64xf32> to vector<1x64xf32>
    %278 = vector.broadcast %277 : vector<1x64xf32> to vector<2x64xf32>
    %279 = arith.addf %274, %278 : vector<2x64xf32>
    %c9_138 = arith.constant 9 : index
    %c0_139 = arith.constant 0 : index
    %c0_140 = arith.constant 0 : index
    %280 = vector.load %arg9[%c9_138, %c0_139, %c0_140] : memref<12x128x128xf32, #tpu.memory_space<vmem>>, vector<1x128x128xf32>
    %281 = vector.shape_cast %280 : vector<1x128x128xf32> to vector<128x128xf32>
    %cst_141 = arith.constant dense<0.000000e+00> : vector<2x128xf32>
    %282 = tpu.matmul %132, %281, %cst_141 {dimension_numbers = #tpu.dot_dimension_numbers<[1], [0], [0], [1], [0, 0, 1, 1], [], []>} : vector<2x128xf32>, vector<128x128xf32>, vector<2x128xf32> -> vector<2x128xf32>
    %c20 = arith.constant 20 : index
    %c0_142 = arith.constant 0 : index
    %283 = vector.load %arg6[%c20, %c0_142] : memref<25x128xf32, #tpu.memory_space<vmem>>, vector<1x128xf32>
    %284 = vector.shape_cast %283 : vector<1x128xf32> to vector<128xf32>
    %285 = vector.shape_cast %284 : vector<128xf32> to vector<1x128xf32>
    %286 = vector.broadcast %285 : vector<1x128xf32> to vector<2x128xf32>
    %287 = arith.addf %282, %286 : vector<2x128xf32>
    %cst_143 = arith.constant 0.000000e+00 : f32
    %288 = vector.broadcast %cst_143 : f32 to vector<2x128xf32>
    %289 = arith.maximumf %287, %288 : vector<2x128xf32>
    %c0_144 = arith.constant 0 : index
    %c0_145 = arith.constant 0 : index
    %c0_146 = arith.constant 0 : index
    %290 = vector.load %arg11[%c0_144, %c0_145, %c0_146] : memref<3x128x32xf32, #tpu.memory_space<vmem>>, vector<1x128x32xf32>
    %291 = vector.shape_cast %290 : vector<1x128x32xf32> to vector<128x32xf32>
    %cst_147 = arith.constant dense<0.000000e+00> : vector<2x32xf32>
    %292 = tpu.matmul %289, %291, %cst_147 {dimension_numbers = #tpu.dot_dimension_numbers<[1], [0], [0], [1], [0, 0, 1, 1], [], []>} : vector<2x128xf32>, vector<128x32xf32>, vector<2x32xf32> -> vector<2x32xf32>
    %c0_148 = arith.constant 0 : index
    %c0_149 = arith.constant 0 : index
    %293 = vector.load %arg8[%c0_148, %c0_149] : memref<3x32xf32, #tpu.memory_space<vmem>>, vector<1x32xf32>
    %294 = vector.shape_cast %293 : vector<1x32xf32> to vector<32xf32>
    %295 = vector.shape_cast %294 : vector<32xf32> to vector<1x32xf32>
    %296 = vector.broadcast %295 : vector<1x32xf32> to vector<2x32xf32>
    %297 = arith.addf %292, %296 : vector<2x32xf32>
    %c10_150 = arith.constant 10 : index
    %c0_151 = arith.constant 0 : index
    %c0_152 = arith.constant 0 : index
    %298 = vector.load %arg9[%c10_150, %c0_151, %c0_152] : memref<12x128x128xf32, #tpu.memory_space<vmem>>, vector<1x128x128xf32>
    %299 = vector.shape_cast %298 : vector<1x128x128xf32> to vector<128x128xf32>
    %cst_153 = arith.constant dense<0.000000e+00> : vector<2x128xf32>
    %300 = tpu.matmul %141, %299, %cst_153 {dimension_numbers = #tpu.dot_dimension_numbers<[1], [0], [0], [1], [0, 0, 1, 1], [], []>} : vector<2x128xf32>, vector<128x128xf32>, vector<2x128xf32> -> vector<2x128xf32>
    %c21 = arith.constant 21 : index
    %c0_154 = arith.constant 0 : index
    %301 = vector.load %arg6[%c21, %c0_154] : memref<25x128xf32, #tpu.memory_space<vmem>>, vector<1x128xf32>
    %302 = vector.shape_cast %301 : vector<1x128xf32> to vector<128xf32>
    %303 = vector.shape_cast %302 : vector<128xf32> to vector<1x128xf32>
    %304 = vector.broadcast %303 : vector<1x128xf32> to vector<2x128xf32>
    %305 = arith.addf %300, %304 : vector<2x128xf32>
    %cst_155 = arith.constant 0.000000e+00 : f32
    %306 = vector.broadcast %cst_155 : f32 to vector<2x128xf32>
    %307 = arith.maximumf %305, %306 : vector<2x128xf32>
    %c1_156 = arith.constant 1 : index
    %c0_157 = arith.constant 0 : index
    %c0_158 = arith.constant 0 : index
    %308 = vector.load %arg11[%c1_156, %c0_157, %c0_158] : memref<3x128x32xf32, #tpu.memory_space<vmem>>, vector<1x128x32xf32>
    %309 = vector.shape_cast %308 : vector<1x128x32xf32> to vector<128x32xf32>
    %cst_159 = arith.constant dense<0.000000e+00> : vector<2x32xf32>
    %310 = tpu.matmul %307, %309, %cst_159 {dimension_numbers = #tpu.dot_dimension_numbers<[1], [0], [0], [1], [0, 0, 1, 1], [], []>} : vector<2x128xf32>, vector<128x32xf32>, vector<2x32xf32> -> vector<2x32xf32>
    %c1_160 = arith.constant 1 : index
    %c0_161 = arith.constant 0 : index
    %311 = vector.load %arg8[%c1_160, %c0_161] : memref<3x32xf32, #tpu.memory_space<vmem>>, vector<1x32xf32>
    %312 = vector.shape_cast %311 : vector<1x32xf32> to vector<32xf32>
    %313 = vector.shape_cast %312 : vector<32xf32> to vector<1x32xf32>
    %314 = vector.broadcast %313 : vector<1x32xf32> to vector<2x32xf32>
    %315 = arith.addf %310, %314 : vector<2x32xf32>
    %c11_162 = arith.constant 11 : index
    %c0_163 = arith.constant 0 : index
    %c0_164 = arith.constant 0 : index
    %316 = vector.load %arg9[%c11_162, %c0_163, %c0_164] : memref<12x128x128xf32, #tpu.memory_space<vmem>>, vector<1x128x128xf32>
    %317 = vector.shape_cast %316 : vector<1x128x128xf32> to vector<128x128xf32>
    %cst_165 = arith.constant dense<0.000000e+00> : vector<2x128xf32>
    %318 = tpu.matmul %123, %317, %cst_165 {dimension_numbers = #tpu.dot_dimension_numbers<[1], [0], [0], [1], [0, 0, 1, 1], [], []>} : vector<2x128xf32>, vector<128x128xf32>, vector<2x128xf32> -> vector<2x128xf32>
    %c22 = arith.constant 22 : index
    %c0_166 = arith.constant 0 : index
    %319 = vector.load %arg6[%c22, %c0_166] : memref<25x128xf32, #tpu.memory_space<vmem>>, vector<1x128xf32>
    %320 = vector.shape_cast %319 : vector<1x128xf32> to vector<128xf32>
    %321 = vector.shape_cast %320 : vector<128xf32> to vector<1x128xf32>
    %322 = vector.broadcast %321 : vector<1x128xf32> to vector<2x128xf32>
    %323 = arith.addf %318, %322 : vector<2x128xf32>
    %cst_167 = arith.constant 0.000000e+00 : f32
    %324 = vector.broadcast %cst_167 : f32 to vector<2x128xf32>
    %325 = arith.maximumf %323, %324 : vector<2x128xf32>
    %c2_168 = arith.constant 2 : index
    %c0_169 = arith.constant 0 : index
    %c0_170 = arith.constant 0 : index
    %326 = vector.load %arg11[%c2_168, %c0_169, %c0_170] : memref<3x128x32xf32, #tpu.memory_space<vmem>>, vector<1x128x32xf32>
    %327 = vector.shape_cast %326 : vector<1x128x32xf32> to vector<128x32xf32>
    %cst_171 = arith.constant dense<0.000000e+00> : vector<2x32xf32>
    %328 = tpu.matmul %325, %327, %cst_171 {dimension_numbers = #tpu.dot_dimension_numbers<[1], [0], [0], [1], [0, 0, 1, 1], [], []>} : vector<2x128xf32>, vector<128x32xf32>, vector<2x32xf32> -> vector<2x32xf32>
    %c2_172 = arith.constant 2 : index
    %c0_173 = arith.constant 0 : index
    %329 = vector.load %arg8[%c2_172, %c0_173] : memref<3x32xf32, #tpu.memory_space<vmem>>, vector<1x32xf32>
    %330 = vector.shape_cast %329 : vector<1x32xf32> to vector<32xf32>
    %331 = vector.shape_cast %330 : vector<32xf32> to vector<1x32xf32>
    %332 = vector.broadcast %331 : vector<1x32xf32> to vector<2x32xf32>
    %333 = arith.addf %328, %332 : vector<2x32xf32>
    %c11_174 = arith.constant 11 : index
    %c0_175 = arith.constant 0 : index
    %c0_176 = arith.constant 0 : index
    %334 = vector.load %arg9[%c11_174, %c0_175, %c0_176] : memref<12x128x128xf32, #tpu.memory_space<vmem>>, vector<1x128x128xf32>
    %335 = vector.shape_cast %334 : vector<1x128x128xf32> to vector<128x128xf32>
    %cst_177 = arith.constant dense<0.000000e+00> : vector<2x128xf32>
    %336 = tpu.matmul %203, %335, %cst_177 {dimension_numbers = #tpu.dot_dimension_numbers<[1], [0], [0], [1], [0, 0, 1, 1], [], []>} : vector<2x128xf32>, vector<128x128xf32>, vector<2x128xf32> -> vector<2x128xf32>
    %c22_178 = arith.constant 22 : index
    %c0_179 = arith.constant 0 : index
    %337 = vector.load %arg6[%c22_178, %c0_179] : memref<25x128xf32, #tpu.memory_space<vmem>>, vector<1x128xf32>
    %338 = vector.shape_cast %337 : vector<1x128xf32> to vector<128xf32>
    %339 = vector.shape_cast %338 : vector<128xf32> to vector<1x128xf32>
    %340 = vector.broadcast %339 : vector<1x128xf32> to vector<2x128xf32>
    %341 = arith.addf %336, %340 : vector<2x128xf32>
    %cst_180 = arith.constant 0.000000e+00 : f32
    %342 = vector.broadcast %cst_180 : f32 to vector<2x128xf32>
    %343 = arith.maximumf %341, %342 : vector<2x128xf32>
    %c2_181 = arith.constant 2 : index
    %c0_182 = arith.constant 0 : index
    %c0_183 = arith.constant 0 : index
    %344 = vector.load %arg11[%c2_181, %c0_182, %c0_183] : memref<3x128x32xf32, #tpu.memory_space<vmem>>, vector<1x128x32xf32>
    %345 = vector.shape_cast %344 : vector<1x128x32xf32> to vector<128x32xf32>
    %cst_184 = arith.constant dense<0.000000e+00> : vector<2x32xf32>
    %346 = tpu.matmul %343, %345, %cst_184 {dimension_numbers = #tpu.dot_dimension_numbers<[1], [0], [0], [1], [0, 0, 1, 1], [], []>} : vector<2x128xf32>, vector<128x32xf32>, vector<2x32xf32> -> vector<2x32xf32>
    %c2_185 = arith.constant 2 : index
    %c0_186 = arith.constant 0 : index
    %347 = vector.load %arg8[%c2_185, %c0_186] : memref<3x32xf32, #tpu.memory_space<vmem>>, vector<1x32xf32>
    %348 = vector.shape_cast %347 : vector<1x32xf32> to vector<32xf32>
    %349 = vector.shape_cast %348 : vector<32xf32> to vector<1x32xf32>
    %350 = vector.broadcast %349 : vector<1x32xf32> to vector<2x32xf32>
    %351 = arith.addf %346, %350 : vector<2x32xf32>
    %352 = arith.mulf %161, %161 : vector<2x64xf32>
    %cst_187 = arith.constant dense<0.000000e+00> : vector<2xf32>
    %353 = vector.multi_reduction <add>, %352, %cst_187 [1] : vector<2x64xf32> to vector<2xf32>
    %354 = vector.shape_cast %353 : vector<2xf32> to vector<2x1xf32>
    %355 = math.sqrt %354 : vector<2x1xf32>
    %cst_188 = arith.constant 9.99999996E-13 : f32
    %356 = vector.broadcast %cst_188 : f32 to vector<2x1xf32>
    %357 = arith.maximumf %355, %356 : vector<2x1xf32>
    %358 = vector.broadcast %357 : vector<2x1xf32> to vector<2x64xf32>
    %359 = arith.divf %161, %358 : vector<2x64xf32>
    %c0_189 = arith.constant 0 : index
    %c0_190 = arith.constant 0 : index
    %360 = vector.load %arg13[%c0_189, %c0_190] : memref<2x768xf32, #tpu.memory_space<vmem>>, vector<2x64xf32>
    tpu.vector_store %arg13[%c0_189, %c0_190], %359 {strides = array<i32>} : memref<2x768xf32, #tpu.memory_space<vmem>>, vector<2x64xf32>,
    %361 = arith.mulf %181, %181 : vector<2x64xf32>
    %cst_191 = arith.constant dense<0.000000e+00> : vector<2xf32>
    %362 = vector.multi_reduction <add>, %361, %cst_191 [1] : vector<2x64xf32> to vector<2xf32>
    %363 = vector.shape_cast %362 : vector<2xf32> to vector<2x1xf32>
    %364 = math.sqrt %363 : vector<2x1xf32>
    %cst_192 = arith.constant 9.99999996E-13 : f32
    %365 = vector.broadcast %cst_192 : f32 to vector<2x1xf32>
    %366 = arith.maximumf %364, %365 : vector<2x1xf32>
    %367 = vector.broadcast %366 : vector<2x1xf32> to vector<2x64xf32>
    %368 = arith.divf %181, %367 : vector<2x64xf32>
    %c0_193 = arith.constant 0 : index
    %c128 = arith.constant 128 : index
    %369 = vector.load %arg13[%c0_193, %c128] : memref<2x768xf32, #tpu.memory_space<vmem>>, vector<2x64xf32>
    tpu.vector_store %arg13[%c0_193, %c128], %368 {strides = array<i32>} : memref<2x768xf32, #tpu.memory_space<vmem>>, vector<2x64xf32>,
    %370 = arith.mulf %241, %241 : vector<2x64xf32>
    %cst_194 = arith.constant dense<0.000000e+00> : vector<2xf32>
    %371 = vector.multi_reduction <add>, %370, %cst_194 [1] : vector<2x64xf32> to vector<2xf32>
    %372 = vector.shape_cast %371 : vector<2xf32> to vector<2x1xf32>
    %373 = math.sqrt %372 : vector<2x1xf32>
    %cst_195 = arith.constant 9.99999996E-13 : f32
    %374 = vector.broadcast %cst_195 : f32 to vector<2x1xf32>
    %375 = arith.maximumf %373, %374 : vector<2x1xf32>
    %376 = vector.broadcast %375 : vector<2x1xf32> to vector<2x64xf32>
    %377 = arith.divf %241, %376 : vector<2x64xf32>
    %c0_196 = arith.constant 0 : index
    %c256 = arith.constant 256 : index
    %378 = vector.load %arg13[%c0_196, %c256] : memref<2x768xf32, #tpu.memory_space<vmem>>, vector<2x64xf32>
    tpu.vector_store %arg13[%c0_196, %c256], %377 {strides = array<i32>} : memref<2x768xf32, #tpu.memory_space<vmem>>, vector<2x64xf32>,
    %379 = arith.mulf %279, %279 : vector<2x64xf32>
    %cst_197 = arith.constant dense<0.000000e+00> : vector<2xf32>
    %380 = vector.multi_reduction <add>, %379, %cst_197 [1] : vector<2x64xf32> to vector<2xf32>
    %381 = vector.shape_cast %380 : vector<2xf32> to vector<2x1xf32>
    %382 = math.sqrt %381 : vector<2x1xf32>
    %cst_198 = arith.constant 9.99999996E-13 : f32
    %383 = vector.broadcast %cst_198 : f32 to vector<2x1xf32>
    %384 = arith.maximumf %382, %383 : vector<2x1xf32>
    %385 = vector.broadcast %384 : vector<2x1xf32> to vector<2x64xf32>
    %386 = arith.divf %279, %385 : vector<2x64xf32>
    %c0_199 = arith.constant 0 : index
    %c384 = arith.constant 384 : index
    %387 = vector.load %arg13[%c0_199, %c384] : memref<2x768xf32, #tpu.memory_space<vmem>>, vector<2x64xf32>
    tpu.vector_store %arg13[%c0_199, %c384], %386 {strides = array<i32>} : memref<2x768xf32, #tpu.memory_space<vmem>>, vector<2x64xf32>,
    %388 = arith.mulf %203, %203 : vector<2x128xf32>
    %cst_200 = arith.constant dense<0.000000e+00> : vector<2xf32>
    %389 = vector.multi_reduction <add>, %388, %cst_200 [1] : vector<2x128xf32> to vector<2xf32>
    %390 = vector.shape_cast %389 : vector<2xf32> to vector<2x1xf32>
    %391 = math.sqrt %390 : vector<2x1xf32>
    %cst_201 = arith.constant 9.99999996E-13 : f32
    %392 = vector.broadcast %cst_201 : f32 to vector<2x1xf32>
    %393 = arith.maximumf %391, %392 : vector<2x1xf32>
    %394 = vector.broadcast %393 : vector<2x1xf32> to vector<2x128xf32>
    %395 = arith.divf %203, %394 : vector<2x128xf32>
    %c0_202 = arith.constant 0 : index
    %c512 = arith.constant 512 : index
    %396 = vector.load %arg13[%c0_202, %c512] : memref<2x768xf32, #tpu.memory_space<vmem>>, vector<2x128xf32>
    tpu.vector_store %arg13[%c0_202, %c512], %395 {strides = array<i32>} : memref<2x768xf32, #tpu.memory_space<vmem>>, vector<2x128xf32>,
    %397 = arith.mulf %123, %123 : vector<2x128xf32>
    %cst_203 = arith.constant dense<0.000000e+00> : vector<2xf32>
    %398 = vector.multi_reduction <add>, %397, %cst_203 [1] : vector<2x128xf32> to vector<2xf32>
    %399 = vector.shape_cast %398 : vector<2xf32> to vector<2x1xf32>
    %400 = math.sqrt %399 : vector<2x1xf32>
    %cst_204 = arith.constant 9.99999996E-13 : f32
    %401 = vector.broadcast %cst_204 : f32 to vector<2x1xf32>
    %402 = arith.maximumf %400, %401 : vector<2x1xf32>
    %403 = vector.broadcast %402 : vector<2x1xf32> to vector<2x128xf32>
    %404 = arith.divf %123, %403 : vector<2x128xf32>
    %c0_205 = arith.constant 0 : index
    %c640 = arith.constant 640 : index
    %405 = vector.load %arg13[%c0_205, %c640] : memref<2x768xf32, #tpu.memory_space<vmem>>, vector<2x128xf32>
    tpu.vector_store %arg13[%c0_205, %c640], %404 {strides = array<i32>} : memref<2x768xf32, #tpu.memory_space<vmem>>, vector<2x128xf32>,
    %c0_206 = arith.constant 0 : index
    %c0_207 = arith.constant 0 : index
    %406 = vector.load %arg14[%c0_206, %c0_207] : memref<2x512xf32, #tpu.memory_space<vmem>>, vector<2x32xf32>
    tpu.vector_store %arg14[%c0_206, %c0_207], %297 {strides = array<i32>} : memref<2x512xf32, #tpu.memory_space<vmem>>, vector<2x32xf32>,
    %c0_208 = arith.constant 0 : index
    %c128_209 = arith.constant 128 : index
    %407 = vector.load %arg14[%c0_208, %c128_209] : memref<2x512xf32, #tpu.memory_space<vmem>>, vector<2x32xf32>
    tpu.vector_store %arg14[%c0_208, %c128_209], %315 {strides = array<i32>} : memref<2x512xf32, #tpu.memory_space<vmem>>, vector<2x32xf32>,
    %c0_210 = arith.constant 0 : index
    %c256_211 = arith.constant 256 : index
    %408 = vector.load %arg14[%c0_210, %c256_211] : memref<2x512xf32, #tpu.memory_space<vmem>>, vector<2x32xf32>
    tpu.vector_store %arg14[%c0_210, %c256_211], %333 {strides = array<i32>} : memref<2x512xf32, #tpu.memory_space<vmem>>, vector<2x32xf32>,
    %c0_212 = arith.constant 0 : index
    %c384_213 = arith.constant 384 : index
    %409 = vector.load %arg14[%c0_212, %c384_213] : memref<2x512xf32, #tpu.memory_space<vmem>>, vector<2x32xf32>
    tpu.vector_store %arg14[%c0_212, %c384_213], %351 {strides = array<i32>} : memref<2x512xf32, #tpu.memory_space<vmem>>, vector<2x32xf32>,
    return
  }
}

</mosaic_0001>

<llo_original>
// kernel: tpu_custom_call.1
$region0: #{tpu_custom_call.1}
  #allocation0 [shape = 'u32[]', space=smem, size = 0x4, offset = 0x4, fixed_abs, tag = 'smem constant byte address 0x4 - core index']
  #allocation1 [shape = 'u32[144,128]{1,0:T(1,128)}', space=vmem, size = 0x12000, scoped, tag = 'internal scratch']
  %s0 = inlined_call_operand.vmem [shape: f32[48,128], index: 0, kind: input, shape index: {}]
  %s1 = inlined_call_operand.vmem [shape: f32[16,128], index: 1, kind: input, shape index: {}]
  %s2 = inlined_call_operand.vmem [shape: f32[2,256], index: 2, kind: input, shape index: {}]
  %s3 = inlined_call_operand.vmem [shape: f32[2,256], index: 3, kind: input, shape index: {}]
  %s4 = inlined_call_operand.vmem [shape: f32[2,48], index: 4, kind: input, shape index: {}]
  %s5 = inlined_call_operand.vmem [shape: f32[2,16], index: 5, kind: input, shape index: {}]
  %s6 = inlined_call_operand.vmem [shape: f32[25,128], index: 6, kind: input, shape index: {}]
  %s7 = inlined_call_operand.vmem [shape: f32[4,64], index: 7, kind: input, shape index: {}]
  %s8 = inlined_call_operand.vmem [shape: f32[3,32], index: 8, kind: input, shape index: {}]
  %s9 = inlined_call_operand.hbm [shape: f32[12,128,128], index: 9, kind: input, shape index: {}]
  %s10 = inlined_call_operand.vmem [shape: f32[4,128,64], index: 10, kind: input, shape index: {}]
  %s11 = inlined_call_operand.vmem [shape: f32[3,128,32], index: 11, kind: input, shape index: {}]
  %s12 = inlined_call_operand.vmem [shape: f32[2,256,128], index: 12, kind: input, shape index: {}]
  %s13 = inlined_call_operand.hbm [shape: f32[2,768], index: 13, kind: output, shape index: {0}]
  %s14 = inlined_call_operand.hbm [shape: f32[2,512], index: 14, kind: output, shape index: {1}]
  %15 = xla_tuple %s13, %s14
  %s16 = sld [smem:[#allocation0]]
  $region74: #{tpu_custom_call.1} parent=0
    _
  %s18 = ssub.s32 1, %s16
  %s19 = scalar_select 0, %s18, %s16
  $region1: #{tpu_custom_call.1} parent=0
    #allocation2 [shape = 'u8[786432]{0}', space=vmem, size = 0xc0000, scoped, tag = 'input window, operand 9, single buffered']
    #allocation3 [shape = 's32[1]{0}', space=sflag, size = 0x4, scoped, tag = 'scoped memory for tpu_custom_call.1']
    #allocation4 [shape = 's32[1]{0}', space=sflag, size = 0x4, scoped, tag = 'scoped memory for tpu_custom_call.1']
    #allocation5 [shape = 'u8[6144]{0}', space=vmem, size = 0x1800, scoped, tag = 'output window, operand 0, single buffered']
    #allocation6 [shape = 'u8[4096]{0}', space=vmem, size = 0x1000, scoped, tag = 'output window, operand 1, single buffered']
    #allocation7 [shape = 's32[1]{0}', space=sflag, size = 0x4, scoped, tag = 'scoped memory for tpu_custom_call.1']
    %20 = vsyncpa [#allocation3], 0
    %21 = vsyncpa [#allocation4], 0
    %22 = vsyncpa [#allocation7], 0
    // Predicated region
    $region2: #{tpu_custom_call.1} parent=1 // pred_check
      _
    $region3: #{tpu_custom_call.1} parent=1 // pred_check_branch
      %24 = sbr.rel (0) target = $region5
    $region4: #{tpu_custom_call.1} parent=1 // pred_region
      _
    $region5: #{tpu_custom_call.1} parent=1 // pred_fallthru
      _
    // Predicated region
    $region6: #{tpu_custom_call.1} parent=1 // pred_check
      _
    $region7: #{tpu_custom_call.1} parent=1 // pred_check_branch
      %26 = sbr.rel (0) target = $region9
    $region8: #{tpu_custom_call.1} parent=1 // pred_region
      _
    $region9: #{tpu_custom_call.1} parent=1 // pred_fallthru
      _
    // Predicated region
    $region10: #{tpu_custom_call.1} parent=1 // pred_check
      _
    $region11: #{tpu_custom_call.1} parent=1 // pred_check_branch
      %28 = sbr.rel (0) target = $region13
    $region12: #{tpu_custom_call.1} parent=1 // pred_region
      _
    $region13: #{tpu_custom_call.1} parent=1 // pred_fallthru
      _
    // Predicated region
    $region14: #{tpu_custom_call.1} parent=1 // pred_check
      _
    $region15: #{tpu_custom_call.1} parent=1 // pred_check_branch
      %30 = sbr.rel (0) target = $region17
    $region16: #{tpu_custom_call.1} parent=1 // pred_region
      _
    $region17: #{tpu_custom_call.1} parent=1 // pred_fallthru
      _
    // Predicated region
    $region18: #{tpu_custom_call.1} parent=1 // pred_check
      _
    $region19: #{tpu_custom_call.1} parent=1 // pred_check_branch
      %32 = sbr.rel (0) target = $region21
    $region20: #{tpu_custom_call.1} parent=1 // pred_region
      _
    $region21: #{tpu_custom_call.1} parent=1 // pred_fallthru
      _
    // Predicated region
    $region22: #{tpu_custom_call.1} parent=1 // pred_check
      _
    $region23: #{tpu_custom_call.1} parent=1 // pred_check_branch
      %34 = sbr.rel (0) target = $region25
    $region24: #{tpu_custom_call.1} parent=1 // pred_region
      _
    $region25: #{tpu_custom_call.1} parent=1 // pred_fallthru
      _
    // Predicated region
    $region26: #{tpu_custom_call.1} parent=1 // pred_check
      _
    $region27: #{tpu_custom_call.1} parent=1 // pred_check_branch
      %36 = sbr.rel (0) target = $region29
    $region28: #{tpu_custom_call.1} parent=1 // pred_region
      _
    $region29: #{tpu_custom_call.1} parent=1 // pred_fallthru
      _
    // Predicated region
    $region30: #{tpu_custom_call.1} parent=1 // pred_check
      _
    $region31: #{tpu_custom_call.1} parent=1 // pred_check_branch
      %38 = sbr.rel (0) target = $region33
    $region32: #{tpu_custom_call.1} parent=1 // pred_region
      _
    $region33: #{tpu_custom_call.1} parent=1 // pred_fallthru
      _
    // Predicated region
    $region34: #{tpu_custom_call.1} parent=1 // pred_check
      _
    $region35: #{tpu_custom_call.1} parent=1 // pred_check_branch
      %40 = sbr.rel (0) target = $region37
    $region36: #{tpu_custom_call.1} parent=1 // pred_region
      _
    $region37: #{tpu_custom_call.1} parent=1 // pred_fallthru
      _
    // Predicated region
    $region38: #{tpu_custom_call.1} parent=1 // pred_check
      _
    $region39: #{tpu_custom_call.1} parent=1 // pred_check_branch
      %42 = sbr.rel (0) target = $region41
    $region40: #{tpu_custom_call.1} parent=1 // pred_region
      %s44 = ssub.s32 24576, 24576
      %45 = vsyncadd [#allocation3], %s44
      %s46 = sshll.u32 [#allocation2], 4
      %s47 = int_to_ptr.vmem [resolvable:$true] %s46
      %52 = dma.hbm_to_vmem [thread:$0]  %s9, 24576, %s47, [#allocation3], 128, 128, 8
    $region41: #{tpu_custom_call.1} parent=1 // pred_fallthru
      _
    // Predicated region
    $region42: #{tpu_custom_call.1} parent=1 // pred_check
      _
    $region43: #{tpu_custom_call.1} parent=1 // pred_check_branch
      %54 = sbr.rel (0) target = $region45
    $region44: #{tpu_custom_call.1} parent=1 // pred_region
      _
    $region45: #{tpu_custom_call.1} parent=1 // pred_fallthru
      _
    // Predicated region
    $region46: #{tpu_custom_call.1} parent=1 // pred_check
      _
    $region47: #{tpu_custom_call.1} parent=1 // pred_check_branch
      %56 = sbr.rel (0) target = $region49
    $region48: #{tpu_custom_call.1} parent=1 // pred_region
      _
    $region49: #{tpu_custom_call.1} parent=1 // pred_fallthru
      _
    // Predicated region
    $region50: #{tpu_custom_call.1} parent=1 // pred_check
      _
    $region51: #{tpu_custom_call.1} parent=1 // pred_check_branch
      %58 = sbr.rel (0) target = $region53
    $region52: #{tpu_custom_call.1} parent=1 // pred_region
      _
    $region53: #{tpu_custom_call.1} parent=1 // pred_fallthru
      _
    // Predicated region
    $region54: #{tpu_custom_call.1} parent=1 // pred_check
      _
    $region55: #{tpu_custom_call.1} parent=1 // pred_check_branch
      %60 = sbr.rel (0) target = $region57
    $region56: #{tpu_custom_call.1} parent=1 // pred_region
      %61 = dma.done [#allocation3], 24576
    $region57: #{tpu_custom_call.1} parent=1 // pred_fallthru
      _
    %62 = vst [vmem:[#allocation5] sm:$0xff] 0.0
    %63 = vst [vmem:[#allocation5 + $0x8] sm:$0xf] 0.0
    %64 = vst [vmem:[#allocation6] sm:$0xff] 0.0
    %v65 = vld [vmem:[%s4] sm:$0x3]
    %v66 = vld [vmem:[%s0] sm:$0xff]
    %v67 = vld [vmem:[%s0 + $0x8] sm:$0xff]
    %v68 = vld [vmem:[%s0 + $0x10] sm:$0xff]
    %v69 = vld [vmem:[%s0 + $0x18] sm:$0xff]
    %v70 = vld [vmem:[%s0 + $0x20] sm:$0xff]
    %v71 = vld [vmem:[%s0 + $0x28] sm:$0xff]
    %vm72 = vcmask 392192
    %v74 = vsel %vm72, %v65, 0
    %76 = vmatprep.subr.mxu0 0.0
    %77 = vmatpush1.msra.mxu0 0.0
    %78 = vmatprep.subr.mxu0 0.0
    %79 = vmatpush1.msra.mxu0 0.0
    %80 = vmatprep.subr.mxu0 0.0
    %81 = vmatpush1.msra.mxu0 0.0
    %82 = vmatprep.subr.mxu0 0.0
    %83 = vmatpush1.msra.mxu0 0.0
    %84 = vmatprep.subr.mxu0 0.0
    %85 = vmatpush1.msra.mxu0 0.0
    %86 = vmatprep.subr.mxu0 0.0
    %87 = vmatpush1.msra.mxu0 0.0
    %88 = vmatprep.subr.mxu0 0.0
    %89 = vmatpush1.msra.mxu0 0.0
    %90 = vmatprep.subr.mxu0 0.0
    %91 = vmatpush1.msra.mxu0 0.0
    %92 = vmatprep.subr.mxu0 0.0
    %93 = vmatpush1.msra.mxu0 0.0
    %94 = vmatprep.subr.mxu0 0.0
    %95 = vmatpush1.msra.mxu0 0.0
    %96 = vmatprep.subr.mxu0 0.0
    %97 = vmatpush1.msra.mxu0 %v71
    %98 = vmatprep.subr.mxu0 0.0
    %99 = vmatpush1.msra.mxu0 %v70
    %100 = vmatprep.subr.mxu0 0.0
    %101 = vmatpush1.msra.mxu0 %v69
    %102 = vmatprep.subr.mxu0 0.0
    %103 = vmatpush1.msra.mxu0 %v68
    %104 = vmatprep.subr.mxu0 0.0
    %105 = vmatpush1.msra.mxu0 %v67
    %106 = vmatprep.subr.mxu0 0.0
    %107 = vmatpush1.msra.mxu0 %v66
    %108 = vmatprep.subr.mxu0 0.0
    %109 = vmatpush2.msra.mxu0 0.0
    %110 = vmatprep.subr.mxu0 0.0
    %111 = vmatpush2.msra.mxu0 0.0
    %112 = vmatprep.subr.mxu0 0.0
    %113 = vmatpush2.msra.mxu0 0.0
    %114 = vmatprep.subr.mxu0 0.0
    %115 = vmatpush2.msra.mxu0 0.0
    %116 = vmatprep.subr.mxu0 0.0
    %117 = vmatpush2.msra.mxu0 0.0
    %118 = vmatprep.subr.mxu0 0.0
    %119 = vmatpush2.msra.mxu0 0.0
    %120 = vmatprep.subr.mxu0 0.0
    %121 = vmatpush2.msra.mxu0 0.0
    %122 = vmatprep.subr.mxu0 0.0
    %123 = vmatpush2.msra.mxu0 0.0
    %124 = vmatprep.subr.mxu0 0.0
    %125 = vmatpush2.msra.mxu0 0.0
    %126 = vmatprep.subr.mxu0 0.0
    %127 = vmatpush2.msra.mxu0 0.0
    %128 = vmatprep.subr.mxu0 0.0
    %129 = vmatpush2.msra.mxu0 0.0
    %130 = vmatprep.subr.mxu0 0.0
    %131 = vmatpush2.msra.mxu0 0.0
    %132 = vmatprep.subr.mxu0 0.0
    %133 = vmatpush2.msra.mxu0 0.0
    %134 = vmatprep.subr.mxu0 0.0
    %135 = vmatpush2.msra.mxu0 0.0
    %136 = vmatprep.subr.mxu0 0.0
    %137 = vmatpush2.msra.mxu0 0.0
    %138 = vmatprep.subr.mxu0 0.0
    %139 = vmatpush2.msra.mxu0 0.0
    %140 = vmatprep.mubr.f32.mxu0 0.0
    %141 = vmatmul.mubr.f32.gmra.mxu0 %v74
    %v142 = vpop.f32.mrf.mxu0
    %v143 = vadd.f32 0.0, %v142
    %v144 = vpop.f32.mrf.mxu0
    %145 = vdwg.mxu0
    %v146 = vld [vmem:[%s5] sm:$0x3]
    %v147 = vld [vmem:[%s1] sm:$0xff]
    %v148 = vld [vmem:[%s1 + $0x8] sm:$0xff]
    %vm149 = vcmask 130048
    %v151 = vsel %vm149, %v146, 0
    %153 = vmatprep.subr.mxu0 0.0
    %154 = vmatpush1.msra.mxu0 0.0
    %155 = vmatprep.subr.mxu0 0.0
    %156 = vmatpush1.msra.mxu0 0.0
    %157 = vmatprep.subr.mxu0 0.0
    %158 = vmatpush1.msra.mxu0 0.0
    %159 = vmatprep.subr.mxu0 0.0
    %160 = vmatpush1.msra.mxu0 0.0
    %161 = vmatprep.subr.mxu0 0.0
    %162 = vmatpush1.msra.mxu0 0.0
    %163 = vmatprep.subr.mxu0 0.0
    %164 = vmatpush1.msra.mxu0 0.0
    %165 = vmatprep.subr.mxu0 0.0
    %166 = vmatpush1.msra.mxu0 0.0
    %167 = vmatprep.subr.mxu0 0.0
    %168 = vmatpush1.msra.mxu0 0.0
    %169 = vmatprep.subr.mxu0 0.0
    %170 = vmatpush1.msra.mxu0 0.0
    %171 = vmatprep.subr.mxu0 0.0
    %172 = vmatpush1.msra.mxu0 0.0
    %173 = vmatprep.subr.mxu0 0.0
    %174 = vmatpush1.msra.mxu0 0.0
    %175 = vmatprep.subr.mxu0 0.0
    %176 = vmatpush1.msra.mxu0 0.0
    %177 = vmatprep.subr.mxu0 0.0
    %178 = vmatpush1.msra.mxu0 0.0
    %179 = vmatprep.subr.mxu0 0.0
    %180 = vmatpush1.msra.mxu0 0.0
    %181 = vmatprep.subr.mxu0 0.0
    %182 = vmatpush1.msra.mxu0 %v148
    %183 = vmatprep.subr.mxu0 0.0
    %184 = vmatpush1.msra.mxu0 %v147
    %185 = vmatprep.subr.mxu0 0.0
    %186 = vmatpush2.msra.mxu0 0.0
    %187 = vmatprep.subr.mxu0 0.0
    %188 = vmatpush2.msra.mxu0 0.0
    %189 = vmatprep.subr.mxu0 0.0
    %190 = vmatpush2.msra.mxu0 0.0
    %191 = vmatprep.subr.mxu0 0.0
    %192 = vmatpush2.msra.mxu0 0.0
    %193 = vmatprep.subr.mxu0 0.0
    %194 = vmatpush2.msra.mxu0 0.0
    %195 = vmatprep.subr.mxu0 0.0
    %196 = vmatpush2.msra.mxu0 0.0
    %197 = vmatprep.subr.mxu0 0.0
    %198 = vmatpush2.msra.mxu0 0.0
    %199 = vmatprep.subr.mxu0 0.0
    %200 = vmatpush2.msra.mxu0 0.0
    %201 = vmatprep.subr.mxu0 0.0
    %202 = vmatpush2.msra.mxu0 0.0
    %203 = vmatprep.subr.mxu0 0.0
    %204 = vmatpush2.msra.mxu0 0.0
    %205 = vmatprep.subr.mxu0 0.0
    %206 = vmatpush2.msra.mxu0 0.0
    %207 = vmatprep.subr.mxu0 0.0
    %208 = vmatpush2.msra.mxu0 0.0
    %209 = vmatprep.subr.mxu0 0.0
    %210 = vmatpush2.msra.mxu0 0.0
    %211 = vmatprep.subr.mxu0 0.0
    %212 = vmatpush2.msra.mxu0 0.0
    %213 = vmatprep.subr.mxu0 0.0
    %214 = vmatpush2.msra.mxu0 0.0
    %215 = vmatprep.subr.mxu0 0.0
    %216 = vmatpush2.msra.mxu0 0.0
    %217 = vmatprep.mubr.f32.mxu0 0.0
    %218 = vmatmul.mubr.f32.gmra.mxu0 %v151
    %v219 = vpop.f32.mrf.mxu0
    %v220 = vadd.f32 0.0, %v219
    %v221 = vpop.f32.mrf.mxu0
    %222 = vdwg.mxu0
    %v223 = vld [vmem:[%s6] sm:$0x1]
    %v224 = vld [vmem:[%s6 + $0x1] sm:$0x1]
    %vm225 = vcmask 1041408
    %v226 = vsel %vm225, %v143, 0.0
    %227 = vadd.xlane.f32.xlu0 %v226
    %v228 = vpop.xlane.xlu0 %227
    %v229 = vrcp.pop 128.0
    %v230 = vmul.f32 %v228, %v229
    %v231 = vsub.f32 %v143, %v230
    %v232 = vmul.f32 %v231, %v231
    %v233 = vsel %vm225, %v232, 0.0
    %234 = vadd.xlane.f32.xlu0 %v233
    %v235 = vpop.xlane.xlu0 %234
    %v236 = vmul.f32 %v235, %v229
    %v237 = vadd.f32 %v236, 1e-05
    %v238 = vrsqrt.pop %v237
    %v239 = vmul.f32 %v231, %v238
    %v240 = vlaneseq
    %v241 = vshrl.u32 %v240, 7
    %v242 = vsub.s32 0, %v241
    %v243 = vrot.slane %v223, %v242
    %v244 = vmul.f32 %v239, %v243
    %v245 = vlaneseq
    %v246 = vshrl.u32 %v245, 7
    %v247 = vsub.s32 0, %v246
    %v248 = vrot.slane %v224, %v247
    %v249 = vadd.f32 %v244, %v248
    %v250 = vld [vmem:[#allocation2] sm:$0xff]
    %v251 = vld [vmem:[#allocation2 + $0x8] sm:$0xff]
    %v252 = vld [vmem:[#allocation2 + $0x10] sm:$0xff]
    %v253 = vld [vmem:[#allocation2 + $0x18] sm:$0xff]
    %v254 = vld [vmem:[#allocation2 + $0x20] sm:$0xff]
    %v255 = vld [vmem:[#allocation2 + $0x28] sm:$0xff]
    %v256 = vld [vmem:[#allocation2 + $0x30] sm:$0xff]
    %v257 = vld [vmem:[#allocation2 + $0x38] sm:$0xff]
    %v258 = vld [vmem:[#allocation2 + $0x40] sm:$0xff]
    %v259 = vld [vmem:[#allocation2 + $0x48] sm:$0xff]
    %v260 = vld [vmem:[#allocation2 + $0x50] sm:$0xff]
    %v261 = vld [vmem:[#allocation2 + $0x58] sm:$0xff]
    %v262 = vld [vmem:[#allocation2 + $0x60] sm:$0xff]
    %v263 = vld [vmem:[#allocation2 + $0x68] sm:$0xff]
    %v264 = vld [vmem:[#allocation2 + $0x70] sm:$0xff]
    %v265 = vld [vmem:[#allocation2 + $0x78] sm:$0xff]
    %v266 = vld [vmem:[%s6 + $0x2] sm:$0x1]
    %v267 = vlaneseq
    %v268 = vshrl.u32 %v267, 7
    %v269 = vsub.s32 0, %v268
    %v270 = vrot.slane %v266, %v269
    %271 = vmatprep.subr.mxu0 0.0
    %272 = vmatpush1.msra.mxu0 %v265
    %273 = vmatprep.subr.mxu0 0.0
    %274 = vmatpush1.msra.mxu0 %v264
    %275 = vmatprep.subr.mxu0 0.0
    %276 = vmatpush1.msra.mxu0 %v263
    %277 = vmatprep.subr.mxu0 0.0
    %278 = vmatpush1.msra.mxu0 %v262
    %279 = vmatprep.subr.mxu0 0.0
    %280 = vmatpush1.msra.mxu0 %v261
    %281 = vmatprep.subr.mxu0 0.0
    %282 = vmatpush1.msra.mxu0 %v260
    %283 = vmatprep.subr.mxu0 0.0
    %284 = vmatpush1.msra.mxu0 %v259
    %285 = vmatprep.subr.mxu0 0.0
    %286 = vmatpush1.msra.mxu0 %v258
    %287 = vmatprep.subr.mxu0 0.0
    %288 = vmatpush1.msra.mxu0 %v257
    %289 = vmatprep.subr.mxu0 0.0
    %290 = vmatpush1.msra.mxu0 %v256
    %291 = vmatprep.subr.mxu0 0.0
    %292 = vmatpush1.msra.mxu0 %v255
    %293 = vmatprep.subr.mxu0 0.0
    %294 = vmatpush1.msra.mxu0 %v254
    %295 = vmatprep.subr.mxu0 0.0
    %296 = vmatpush1.msra.mxu0 %v253
    %297 = vmatprep.subr.mxu0 0.0
    %298 = vmatpush1.msra.mxu0 %v252
    %299 = vmatprep.subr.mxu0 0.0
    %300 = vmatpush1.msra.mxu0 %v251
    %301 = vmatprep.subr.mxu0 0.0
    %302 = vmatpush1.msra.mxu0 %v250
    %303 = vmatprep.subr.mxu0 0.0
    %304 = vmatpush2.msra.mxu0 0.0
    %305 = vmatprep.subr.mxu0 0.0
    %306 = vmatpush2.msra.mxu0 0.0
    %307 = vmatprep.subr.mxu0 0.0
    %308 = vmatpush2.msra.mxu0 0.0
    %309 = vmatprep.subr.mxu0 0.0
    %310 = vmatpush2.msra.mxu0 0.0
    %311 = vmatprep.subr.mxu0 0.0
    %312 = vmatpush2.msra.mxu0 0.0
    %313 = vmatprep.subr.mxu0 0.0
    %314 = vmatpush2.msra.mxu0 0.0
    %315 = vmatprep.subr.mxu0 0.0
    %316 = vmatpush2.msra.mxu0 0.0
    %317 = vmatprep.subr.mxu0 0.0
    %318 = vmatpush2.msra.mxu0 0.0
    %319 = vmatprep.subr.mxu0 0.0
    %320 = vmatpush2.msra.mxu0 0.0
    %321 = vmatprep.subr.mxu0 0.0
    %322 = vmatpush2.msra.mxu0 0.0
    %323 = vmatprep.subr.mxu0 0.0
    %324 = vmatpush2.msra.mxu0 0.0
    %325 = vmatprep.subr.mxu0 0.0
    %326 = vmatpush2.msra.mxu0 0.0
    %327 = vmatprep.subr.mxu0 0.0
    %328 = vmatpush2.msra.mxu0 0.0
    %329 = vmatprep.subr.mxu0 0.0
    %330 = vmatpush2.msra.mxu0 0.0
    %331 = vmatprep.subr.mxu0 0.0
    %332 = vmatpush2.msra.mxu0 0.0
    %333 = vmatprep.subr.mxu0 0.0
    %334 = vmatpush2.msra.mxu0 0.0
    %335 = vmatprep.mubr.f32.mxu0 0.0
    %336 = vmatmul.mubr.f32.gmra.mxu0 %v249
    %v337 = vpop.f32.mrf.mxu0
    %v338 = vadd.f32 %v270, %v337
    %v339 = vpop.f32.mrf.mxu0
    %340 = vdwg.mxu0
    %v341 = vmax.f32 %v338, 0.0
    %s342 = scalar_lea.vmem [#allocation2], 128
    %v343 = vld [vmem:[%s342] sm:$0xff]
    %v344 = vld [vmem:[%s342 + $0x8] sm:$0xff]
    %v345 = vld [vmem:[%s342 + $0x10] sm:$0xff]
    %v346 = vld [vmem:[%s342 + $0x18] sm:$0xff]
    %v347 = vld [vmem:[%s342 + $0x20] sm:$0xff]
    %v348 = vld [vmem:[%s342 + $0x28] sm:$0xff]
    %v349 = vld [vmem:[%s342 + $0x30] sm:$0xff]
    %v350 = vld [vmem:[%s342 + $0x38] sm:$0xff]
    %v351 = vld [vmem:[%s342 + $0x40] sm:$0xff]
    %v352 = vld [vmem:[%s342 + $0x48] sm:$0xff]
    %v353 = vld [vmem:[%s342 + $0x50] sm:$0xff]
    %v354 = vld [vmem:[%s342 + $0x58] sm:$0xff]
    %v355 = vld [vmem:[%s342 + $0x60] sm:$0xff]
    %v356 = vld [vmem:[%s342 + $0x68] sm:$0xff]
    %v357 = vld [vmem:[%s342 + $0x70] sm:$0xff]
    %v358 = vld [vmem:[%s342 + $0x78] sm:$0xff]
    %v359 = vld [vmem:[%s6 + $0x3] sm:$0x1]
    %v360 = vlaneseq
    %v361 = vshrl.u32 %v360, 7
    %v362 = vsub.s32 0, %v361
    %v363 = vrot.slane %v359, %v362
    %364 = vmatprep.subr.mxu0 0.0
    %365 = vmatpush1.msra.mxu0 %v358
    %366 = vmatprep.subr.mxu0 0.0
    %367 = vmatpush1.msra.mxu0 %v357
    %368 = vmatprep.subr.mxu0 0.0
    %369 = vmatpush1.msra.mxu0 %v356
    %370 = vmatprep.subr.mxu0 0.0
    %371 = vmatpush1.msra.mxu0 %v355
    %372 = vmatprep.subr.mxu0 0.0
    %373 = vmatpush1.msra.mxu0 %v354
    %374 = vmatprep.subr.mxu0 0.0
    %375 = vmatpush1.msra.mxu0 %v353
    %376 = vmatprep.subr.mxu0 0.0
    %377 = vmatpush1.msra.mxu0 %v352
    %378 = vmatprep.subr.mxu0 0.0
    %379 = vmatpush1.msra.mxu0 %v351
    %380 = vmatprep.subr.mxu0 0.0
    %381 = vmatpush1.msra.mxu0 %v350
    %382 = vmatprep.subr.mxu0 0.0
    %383 = vmatpush1.msra.mxu0 %v349
    %384 = vmatprep.subr.mxu0 0.0
    %385 = vmatpush1.msra.mxu0 %v348
    %386 = vmatprep.subr.mxu0 0.0
    %387 = vmatpush1.msra.mxu0 %v347
    %388 = vmatprep.subr.mxu0 0.0
    %389 = vmatpush1.msra.mxu0 %v346
    %390 = vmatprep.subr.mxu0 0.0
    %391 = vmatpush1.msra.mxu0 %v345
    %392 = vmatprep.subr.mxu0 0.0
    %393 = vmatpush1.msra.mxu0 %v344
    %394 = vmatprep.subr.mxu0 0.0
    %395 = vmatpush1.msra.mxu0 %v343
    %396 = vmatprep.subr.mxu0 0.0
    %397 = vmatpush2.msra.mxu0 0.0
    %398 = vmatprep.subr.mxu0 0.0
    %399 = vmatpush2.msra.mxu0 0.0
    %400 = vmatprep.subr.mxu0 0.0
    %401 = vmatpush2.msra.mxu0 0.0
    %402 = vmatprep.subr.mxu0 0.0
    %403 = vmatpush2.msra.mxu0 0.0
    %404 = vmatprep.subr.mxu0 0.0
    %405 = vmatpush2.msra.mxu0 0.0
    %406 = vmatprep.subr.mxu0 0.0
    %407 = vmatpush2.msra.mxu0 0.0
    %408 = vmatprep.subr.mxu0 0.0
    %409 = vmatpush2.msra.mxu0 0.0
    %410 = vmatprep.subr.mxu0 0.0
    %411 = vmatpush2.msra.mxu0 0.0
    %412 = vmatprep.subr.mxu0 0.0
    %413 = vmatpush2.msra.mxu0 0.0
    %414 = vmatprep.subr.mxu0 0.0
    %415 = vmatpush2.msra.mxu0 0.0
    %416 = vmatprep.subr.mxu0 0.0
    %417 = vmatpush2.msra.mxu0 0.0
    %418 = vmatprep.subr.mxu0 0.0
    %419 = vmatpush2.msra.mxu0 0.0
    %420 = vmatprep.subr.mxu0 0.0
    %421 = vmatpush2.msra.mxu0 0.0
    %422 = vmatprep.subr.mxu0 0.0
    %423 = vmatpush2.msra.mxu0 0.0
    %424 = vmatprep.subr.mxu0 0.0
    %425 = vmatpush2.msra.mxu0 0.0
    %426 = vmatprep.subr.mxu0 0.0
    %427 = vmatpush2.msra.mxu0 0.0
    %428 = vmatprep.mubr.f32.mxu0 0.0
    %429 = vmatmul.mubr.f32.gmra.mxu0 %v341
    %v430 = vpop.f32.mrf.mxu0
    %v431 = vadd.f32 %v363, %v430
    %v432 = vpop.f32.mrf.mxu0
    %433 = vdwg.mxu0
    %v434 = vld [vmem:[%s6 + $0x4] sm:$0x1]
    %v435 = vld [vmem:[%s6 + $0x5] sm:$0x1]
    %v436 = vsel %vm225, %v220, 0.0
    %437 = vadd.xlane.f32.xlu0 %v436
    %v438 = vpop.xlane.xlu0 %437
    %v439 = vmul.f32 %v438, %v229
    %v440 = vsub.f32 %v220, %v439
    %v441 = vmul.f32 %v440, %v440
    %v442 = vsel %vm225, %v441, 0.0
    %443 = vadd.xlane.f32.xlu0 %v442
    %v444 = vpop.xlane.xlu0 %443
    %v445 = vmul.f32 %v444, %v229
    %v446 = vadd.f32 %v445, 1e-05
    %v447 = vrsqrt.pop %v446
    %v448 = vmul.f32 %v440, %v447
    %v449 = vlaneseq
    %v450 = vshrl.u32 %v449, 7
    %v451 = vsub.s32 0, %v450
    %v452 = vrot.slane %v434, %v451
    %v453 = vmul.f32 %v448, %v452
    %v454 = vlaneseq
    %v455 = vshrl.u32 %v454, 7
    %v456 = vsub.s32 0, %v455
    %v457 = vrot.slane %v435, %v456
    %v458 = vadd.f32 %v453, %v457
    %s459 = scalar_lea.vmem [#allocation2], 256
    %v460 = vld [vmem:[%s459] sm:$0xff]
    %v461 = vld [vmem:[%s459 + $0x8] sm:$0xff]
    %v462 = vld [vmem:[%s459 + $0x10] sm:$0xff]
    %v463 = vld [vmem:[%s459 + $0x18] sm:$0xff]
    %v464 = vld [vmem:[%s459 + $0x20] sm:$0xff]
    %v465 = vld [vmem:[%s459 + $0x28] sm:$0xff]
    %v466 = vld [vmem:[%s459 + $0x30] sm:$0xff]
    %v467 = vld [vmem:[%s459 + $0x38] sm:$0xff]
    %v468 = vld [vmem:[%s459 + $0x40] sm:$0xff]
    %v469 = vld [vmem:[%s459 + $0x48] sm:$0xff]
    %v470 = vld [vmem:[%s459 + $0x50] sm:$0xff]
    %v471 = vld [vmem:[%s459 + $0x58] sm:$0xff]
    %v472 = vld [vmem:[%s459 + $0x60] sm:$0xff]
    %v473 = vld [vmem:[%s459 + $0x68] sm:$0xff]
    %v474 = vld [vmem:[%s459 + $0x70] sm:$0xff]
    %v475 = vld [vmem:[%s459 + $0x78] sm:$0xff]
    %v476 = vld [vmem:[%s6 + $0x6] sm:$0x1]
    %v477 = vlaneseq
    %v478 = vshrl.u32 %v477, 7
    %v479 = vsub.s32 0, %v478
    %v480 = vrot.slane %v476, %v479
    %481 = vmatprep.subr.mxu0 0.0
    %482 = vmatpush1.msra.mxu0 %v475
    %483 = vmatprep.subr.mxu0 0.0
    %484 = vmatpush1.msra.mxu0 %v474
    %485 = vmatprep.subr.mxu0 0.0
    %486 = vmatpush1.msra.mxu0 %v473
    %487 = vmatprep.subr.mxu0 0.0
    %488 = vmatpush1.msra.mxu0 %v472
    %489 = vmatprep.subr.mxu0 0.0
    %490 = vmatpush1.msra.mxu0 %v471
    %491 = vmatprep.subr.mxu0 0.0
    %492 = vmatpush1.msra.mxu0 %v470
    %493 = vmatprep.subr.mxu0 0.0
    %494 = vmatpush1.msra.mxu0 %v469
    %495 = vmatprep.subr.mxu0 0.0
    %496 = vmatpush1.msra.mxu0 %v468
    %497 = vmatprep.subr.mxu0 0.0
    %498 = vmatpush1.msra.mxu0 %v467
    %499 = vmatprep.subr.mxu0 0.0
    %500 = vmatpush1.msra.mxu0 %v466
    %501 = vmatprep.subr.mxu0 0.0
    %502 = vmatpush1.msra.mxu0 %v465
    %503 = vmatprep.subr.mxu0 0.0
    %504 = vmatpush1.msra.mxu0 %v464
    %505 = vmatprep.subr.mxu0 0.0
    %506 = vmatpush1.msra.mxu0 %v463
    %507 = vmatprep.subr.mxu0 0.0
    %508 = vmatpush1.msra.mxu0 %v462
    %509 = vmatprep.subr.mxu0 0.0
    %510 = vmatpush1.msra.mxu0 %v461
    %511 = vmatprep.subr.mxu0 0.0
    %512 = vmatpush1.msra.mxu0 %v460
    %513 = vmatprep.subr.mxu0 0.0
    %514 = vmatpush2.msra.mxu0 0.0
    %515 = vmatprep.subr.mxu0 0.0
    %516 = vmatpush2.msra.mxu0 0.0
    %517 = vmatprep.subr.mxu0 0.0
    %518 = vmatpush2.msra.mxu0 0.0
    %519 = vmatprep.subr.mxu0 0.0
    %520 = vmatpush2.msra.mxu0 0.0
    %521 = vmatprep.subr.mxu0 0.0
    %522 = vmatpush2.msra.mxu0 0.0
    %523 = vmatprep.subr.mxu0 0.0
    %524 = vmatpush2.msra.mxu0 0.0
    %525 = vmatprep.subr.mxu0 0.0
    %526 = vmatpush2.msra.mxu0 0.0
    %527 = vmatprep.subr.mxu0 0.0
    %528 = vmatpush2.msra.mxu0 0.0
    %529 = vmatprep.subr.mxu0 0.0
    %530 = vmatpush2.msra.mxu0 0.0
    %531 = vmatprep.subr.mxu0 0.0
    %532 = vmatpush2.msra.mxu0 0.0
    %533 = vmatprep.subr.mxu0 0.0
    %534 = vmatpush2.msra.mxu0 0.0
    %535 = vmatprep.subr.mxu0 0.0
    %536 = vmatpush2.msra.mxu0 0.0
    %537 = vmatprep.subr.mxu0 0.0
    %538 = vmatpush2.msra.mxu0 0.0
    %539 = vmatprep.subr.mxu0 0.0
    %540 = vmatpush2.msra.mxu0 0.0
    %541 = vmatprep.subr.mxu0 0.0
    %542 = vmatpush2.msra.mxu0 0.0
    %543 = vmatprep.subr.mxu0 0.0
    %544 = vmatpush2.msra.mxu0 0.0
    %545 = vmatprep.mubr.f32.mxu0 0.0
    %546 = vmatmul.mubr.f32.gmra.mxu0 %v458
    %v547 = vpop.f32.mrf.mxu0
    %v548 = vadd.f32 %v480, %v547
    %v549 = vpop.f32.mrf.mxu0
    %550 = vdwg.mxu0
    %v551 = vmax.f32 %v548, 0.0
    %s552 = scalar_lea.vmem [#allocation2], 384
    %v553 = vld [vmem:[%s552] sm:$0xff]
    %v554 = vld [vmem:[%s552 + $0x8] sm:$0xff]
    %v555 = vld [vmem:[%s552 + $0x10] sm:$0xff]
    %v556 = vld [vmem:[%s552 + $0x18] sm:$0xff]
    %v557 = vld [vmem:[%s552 + $0x20] sm:$0xff]
    %v558 = vld [vmem:[%s552 + $0x28] sm:$0xff]
    %v559 = vld [vmem:[%s552 + $0x30] sm:$0xff]
    %v560 = vld [vmem:[%s552 + $0x38] sm:$0xff]
    %v561 = vld [vmem:[%s552 + $0x40] sm:$0xff]
    %v562 = vld [vmem:[%s552 + $0x48] sm:$0xff]
    %v563 = vld [vmem:[%s552 + $0x50] sm:$0xff]
    %v564 = vld [vmem:[%s552 + $0x58] sm:$0xff]
    %v565 = vld [vmem:[%s552 + $0x60] sm:$0xff]
    %v566 = vld [vmem:[%s552 + $0x68] sm:$0xff]
    %v567 = vld [vmem:[%s552 + $0x70] sm:$0xff]
    %v568 = vld [vmem:[%s552 + $0x78] sm:$0xff]
    %v569 = vld [vmem:[%s6 + $0x7] sm:$0x1]
    %v570 = vlaneseq
    %v571 = vshrl.u32 %v570, 7
    %v572 = vsub.s32 0, %v571
    %v573 = vrot.slane %v569, %v572
    %574 = vmatprep.subr.mxu0 0.0
    %575 = vmatpush1.msra.mxu0 %v568
    %576 = vmatprep.subr.mxu0 0.0
    %577 = vmatpush1.msra.mxu0 %v567
    %578 = vmatprep.subr.mxu0 0.0
    %579 = vmatpush1.msra.mxu0 %v566
    %580 = vmatprep.subr.mxu0 0.0
    %581 = vmatpush1.msra.mxu0 %v565
    %582 = vmatprep.subr.mxu0 0.0
    %583 = vmatpush1.msra.mxu0 %v564
    %584 = vmatprep.subr.mxu0 0.0
    %585 = vmatpush1.msra.mxu0 %v563
    %586 = vmatprep.subr.mxu0 0.0
    %587 = vmatpush1.msra.mxu0 %v562
    %588 = vmatprep.subr.mxu0 0.0
    %589 = vmatpush1.msra.mxu0 %v561
    %590 = vmatprep.subr.mxu0 0.0
    %591 = vmatpush1.msra.mxu0 %v560
    %592 = vmatprep.subr.mxu0 0.0
    %593 = vmatpush1.msra.mxu0 %v559
    %594 = vmatprep.subr.mxu0 0.0
    %595 = vmatpush1.msra.mxu0 %v558
    %596 = vmatprep.subr.mxu0 0.0
    %597 = vmatpush1.msra.mxu0 %v557
    %598 = vmatprep.subr.mxu0 0.0
    %599 = vmatpush1.msra.mxu0 %v556
    %600 = vmatprep.subr.mxu0 0.0
    %601 = vmatpush1.msra.mxu0 %v555
    %602 = vmatprep.subr.mxu0 0.0
    %603 = vmatpush1.msra.mxu0 %v554
    %604 = vmatprep.subr.mxu0 0.0
    %605 = vmatpush1.msra.mxu0 %v553
    %606 = vmatprep.subr.mxu0 0.0
    %607 = vmatpush2.msra.mxu0 0.0
    %608 = vmatprep.subr.mxu0 0.0
    %609 = vmatpush2.msra.mxu0 0.0
    %610 = vmatprep.subr.mxu0 0.0
    %611 = vmatpush2.msra.mxu0 0.0
    %612 = vmatprep.subr.mxu0 0.0
    %613 = vmatpush2.msra.mxu0 0.0
    %614 = vmatprep.subr.mxu0 0.0
    %615 = vmatpush2.msra.mxu0 0.0
    %616 = vmatprep.subr.mxu0 0.0
    %617 = vmatpush2.msra.mxu0 0.0
    %618 = vmatprep.subr.mxu0 0.0
    %619 = vmatpush2.msra.mxu0 0.0
    %620 = vmatprep.subr.mxu0 0.0
    %621 = vmatpush2.msra.mxu0 0.0
    %622 = vmatprep.subr.mxu0 0.0
    %623 = vmatpush2.msra.mxu0 0.0
    %624 = vmatprep.subr.mxu0 0.0
    %625 = vmatpush2.msra.mxu0 0.0
    %626 = vmatprep.subr.mxu0 0.0
    %627 = vmatpush2.msra.mxu0 0.0
    %628 = vmatprep.subr.mxu0 0.0
    %629 = vmatpush2.msra.mxu0 0.0
    %630 = vmatprep.subr.mxu0 0.0
    %631 = vmatpush2.msra.mxu0 0.0
    %632 = vmatprep.subr.mxu0 0.0
    %633 = vmatpush2.msra.mxu0 0.0
    %634 = vmatprep.subr.mxu0 0.0
    %635 = vmatpush2.msra.mxu0 0.0
    %636 = vmatprep.subr.mxu0 0.0
    %637 = vmatpush2.msra.mxu0 0.0
    %638 = vmatprep.mubr.f32.mxu0 0.0
    %639 = vmatmul.mubr.f32.gmra.mxu0 %v551
    %v640 = vpop.f32.mrf.mxu0
    %v641 = vadd.f32 %v573, %v640
    %v642 = vpop.f32.mrf.mxu0
    %643 = vdwg.mxu0
    %s644 = scalar_lea.vmem [#allocation2], 512
    %v645 = vld [vmem:[%s644] sm:$0xff]
    %v646 = vld [vmem:[%s644 + $0x8] sm:$0xff]
    %v647 = vld [vmem:[%s644 + $0x10] sm:$0xff]
    %v648 = vld [vmem:[%s644 + $0x18] sm:$0xff]
    %v649 = vld [vmem:[%s644 + $0x20] sm:$0xff]
    %v650 = vld [vmem:[%s644 + $0x28] sm:$0xff]
    %v651 = vld [vmem:[%s644 + $0x30] sm:$0xff]
    %v652 = vld [vmem:[%s644 + $0x38] sm:$0xff]
    %v653 = vld [vmem:[%s644 + $0x40] sm:$0xff]
    %v654 = vld [vmem:[%s644 + $0x48] sm:$0xff]
    %v655 = vld [vmem:[%s644 + $0x50] sm:$0xff]
    %v656 = vld [vmem:[%s644 + $0x58] sm:$0xff]
    %v657 = vld [vmem:[%s644 + $0x60] sm:$0xff]
    %v658 = vld [vmem:[%s644 + $0x68] sm:$0xff]
    %v659 = vld [vmem:[%s644 + $0x70] sm:$0xff]
    %v660 = vld [vmem:[%s644 + $0x78] sm:$0xff]
    %s661 = scalar_lea.vmem [#allocation2], 640
    %v662 = vld [vmem:[%s661] sm:$0xff]
    %v663 = vld [vmem:[%s661 + $0x8] sm:$0xff]
    %v664 = vld [vmem:[%s661 + $0x10] sm:$0xff]
    %v665 = vld [vmem:[%s661 + $0x18] sm:$0xff]
    %v666 = vld [vmem:[%s661 + $0x20] sm:$0xff]
    %v667 = vld [vmem:[%s661 + $0x28] sm:$0xff]
    %v668 = vld [vmem:[%s661 + $0x30] sm:$0xff]
    %v669 = vld [vmem:[%s661 + $0x38] sm:$0xff]
    %v670 = vld [vmem:[%s661 + $0x40] sm:$0xff]
    %v671 = vld [vmem:[%s661 + $0x48] sm:$0xff]
    %v672 = vld [vmem:[%s661 + $0x50] sm:$0xff]
    %v673 = vld [vmem:[%s661 + $0x58] sm:$0xff]
    %v674 = vld [vmem:[%s661 + $0x60] sm:$0xff]
    %v675 = vld [vmem:[%s661 + $0x68] sm:$0xff]
    %v676 = vld [vmem:[%s661 + $0x70] sm:$0xff]
    %v677 = vld [vmem:[%s661 + $0x78] sm:$0xff]
    %678 = vmatprep.subr.mxu0 0.0
    %679 = vmatpush1.msra.mxu0 %v677
    %680 = vmatprep.subr.mxu0 0.0
    %681 = vmatpush1.msra.mxu0 %v676
    %682 = vmatprep.subr.mxu0 0.0
    %683 = vmatpush1.msra.mxu0 %v675
    %684 = vmatprep.subr.mxu0 0.0
    %685 = vmatpush1.msra.mxu0 %v674
    %686 = vmatprep.subr.mxu0 0.0
    %687 = vmatpush1.msra.mxu0 %v673
    %688 = vmatprep.subr.mxu0 0.0
    %689 = vmatpush1.msra.mxu0 %v672
    %690 = vmatprep.subr.mxu0 0.0
    %691 = vmatpush1.msra.mxu0 %v671
    %692 = vmatprep.subr.mxu0 0.0
    %693 = vmatpush1.msra.mxu0 %v670
    %694 = vmatprep.subr.mxu0 0.0
    %695 = vmatpush1.msra.mxu0 %v669
    %696 = vmatprep.subr.mxu0 0.0
    %697 = vmatpush1.msra.mxu0 %v668
    %698 = vmatprep.subr.mxu0 0.0
    %699 = vmatpush1.msra.mxu0 %v667
    %700 = vmatprep.subr.mxu0 0.0
    %701 = vmatpush1.msra.mxu0 %v666
    %702 = vmatprep.subr.mxu0 0.0
    %703 = vmatpush1.msra.mxu0 %v665
    %704 = vmatprep.subr.mxu0 0.0
    %705 = vmatpush1.msra.mxu0 %v664
    %706 = vmatprep.subr.mxu0 0.0
    %707 = vmatpush1.msra.mxu0 %v663
    %708 = vmatprep.subr.mxu0 0.0
    %709 = vmatpush1.msra.mxu0 %v662
    %710 = vmatprep.subr.mxu0 0.0
    %711 = vmatpush2.msra.mxu0 0.0
    %712 = vmatprep.subr.mxu0 0.0
    %713 = vmatpush2.msra.mxu0 0.0
    %714 = vmatprep.subr.mxu0 0.0
    %715 = vmatpush2.msra.mxu0 0.0
    %716 = vmatprep.subr.mxu0 0.0
    %717 = vmatpush2.msra.mxu0 0.0
    %718 = vmatprep.subr.mxu0 0.0
    %719 = vmatpush2.msra.mxu0 0.0
    %720 = vmatprep.subr.mxu0 0.0
    %721 = vmatpush2.msra.mxu0 0.0
    %722 = vmatprep.subr.mxu0 0.0
    %723 = vmatpush2.msra.mxu0 0.0
    %724 = vmatprep.subr.mxu0 0.0
    %725 = vmatpush2.msra.mxu0 0.0
    %726 = vmatprep.subr.mxu0 0.0
    %727 = vmatpush2.msra.mxu0 0.0
    %728 = vmatprep.subr.mxu0 0.0
    %729 = vmatpush2.msra.mxu0 0.0
    %730 = vmatprep.subr.mxu0 0.0
    %731 = vmatpush2.msra.mxu0 0.0
    %732 = vmatprep.subr.mxu0 0.0
    %733 = vmatpush2.msra.mxu0 0.0
    %734 = vmatprep.subr.mxu0 0.0
    %735 = vmatpush2.msra.mxu0 0.0
    %736 = vmatprep.subr.mxu0 0.0
    %737 = vmatpush2.msra.mxu0 0.0
    %738 = vmatprep.subr.mxu0 0.0
    %739 = vmatpush2.msra.mxu0 0.0
    %740 = vmatprep.subr.mxu0 0.0
    %741 = vmatpush2.msra.mxu0 0.0
    %742 = vmatprep.mubr.f32.mxu0 0.0
    %743 = vmatmul.mubr.f32.gmra.mxu0 %v431
    %v744 = vpop.f32.mrf.mxu0
    %v745 = vadd.f32 0.0, %v744
    %v746 = vpop.f32.mrf.mxu0
    %747 = vdwg.mxu0
    %748 = vmatprep.subr.mxu0 0.0
    %749 = vmatpush1.msra.mxu0 %v660
    %750 = vmatprep.subr.mxu0 0.0
    %751 = vmatpush1.msra.mxu0 %v659
    %752 = vmatprep.subr.mxu0 0.0
    %753 = vmatpush1.msra.mxu0 %v658
    %754 = vmatprep.subr.mxu0 0.0
    %755 = vmatpush1.msra.mxu0 %v657
    %756 = vmatprep.subr.mxu0 0.0
    %757 = vmatpush1.msra.mxu0 %v656
    %758 = vmatprep.subr.mxu0 0.0
    %759 = vmatpush1.msra.mxu0 %v655
    %760 = vmatprep.subr.mxu0 0.0
    %761 = vmatpush1.msra.mxu0 %v654
    %762 = vmatprep.subr.mxu0 0.0
    %763 = vmatpush1.msra.mxu0 %v653
    %764 = vmatprep.subr.mxu0 0.0
    %765 = vmatpush1.msra.mxu0 %v652
    %766 = vmatprep.subr.mxu0 0.0
    %767 = vmatpush1.msra.mxu0 %v651
    %768 = vmatprep.subr.mxu0 0.0
    %769 = vmatpush1.msra.mxu0 %v650
    %770 = vmatprep.subr.mxu0 0.0
    %771 = vmatpush1.msra.mxu0 %v649
    %772 = vmatprep.subr.mxu0 0.0
    %773 = vmatpush1.msra.mxu0 %v648
    %774 = vmatprep.subr.mxu0 0.0
    %775 = vmatpush1.msra.mxu0 %v647
    %776 = vmatprep.subr.mxu0 0.0
    %777 = vmatpush1.msra.mxu0 %v646
    %778 = vmatprep.subr.mxu0 0.0
    %779 = vmatpush1.msra.mxu0 %v645
    %780 = vmatprep.subr.mxu0 0.0
    %781 = vmatpush2.msra.mxu0 0.0
    %782 = vmatprep.subr.mxu0 0.0
    %783 = vmatpush2.msra.mxu0 0.0
    %784 = vmatprep.subr.mxu0 0.0
    %785 = vmatpush2.msra.mxu0 0.0
    %786 = vmatprep.subr.mxu0 0.0
    %787 = vmatpush2.msra.mxu0 0.0
    %788 = vmatprep.subr.mxu0 0.0
    %789 = vmatpush2.msra.mxu0 0.0
    %790 = vmatprep.subr.mxu0 0.0
    %791 = vmatpush2.msra.mxu0 0.0
    %792 = vmatprep.subr.mxu0 0.0
    %793 = vmatpush2.msra.mxu0 0.0
    %794 = vmatprep.subr.mxu0 0.0
    %795 = vmatpush2.msra.mxu0 0.0
    %796 = vmatprep.subr.mxu0 0.0
    %797 = vmatpush2.msra.mxu0 0.0
    %798 = vmatprep.subr.mxu0 0.0
    %799 = vmatpush2.msra.mxu0 0.0
    %800 = vmatprep.subr.mxu0 0.0
    %801 = vmatpush2.msra.mxu0 0.0
    %802 = vmatprep.subr.mxu0 0.0
    %803 = vmatpush2.msra.mxu0 0.0
    %804 = vmatprep.subr.mxu0 0.0
    %805 = vmatpush2.msra.mxu0 0.0
    %806 = vmatprep.subr.mxu0 0.0
    %807 = vmatpush2.msra.mxu0 0.0
    %808 = vmatprep.subr.mxu0 0.0
    %809 = vmatpush2.msra.mxu0 0.0
    %810 = vmatprep.subr.mxu0 0.0
    %811 = vmatpush2.msra.mxu0 0.0
    %812 = vmatprep.mubr.f32.mxu0 0.0
    %813 = vmatmul.mubr.f32.gmra.mxu0 %v641
    %v814 = vpop.f32.mrf.mxu0
    %v815 = vadd.f32 %v745, %v814
    %v816 = vpop.f32.mrf.mxu0
    %817 = vdwg.mxu0
    %v818 = vld [vmem:[%s6 + $0x8] sm:$0x1]
    %v819 = vlaneseq
    %v820 = vshrl.u32 %v819, 7
    %v821 = vsub.s32 0, %v820
    %v822 = vrot.slane %v818, %v821
    %v823 = vadd.f32 %v815, %v822
    %v824 = vmax.f32 %v823, 0.0
    %s825 = scalar_lea.vmem [#allocation2], 768
    %v826 = vld [vmem:[%s825] sm:$0xff]
    %v827 = vld [vmem:[%s825 + $0x8] sm:$0xff]
    %v828 = vld [vmem:[%s825 + $0x10] sm:$0xff]
    %v829 = vld [vmem:[%s825 + $0x18] sm:$0xff]
    %v830 = vld [vmem:[%s825 + $0x20] sm:$0xff]
    %v831 = vld [vmem:[%s825 + $0x28] sm:$0xff]
    %v832 = vld [vmem:[%s825 + $0x30] sm:$0xff]
    %v833 = vld [vmem:[%s825 + $0x38] sm:$0xff]
    %v834 = vld [vmem:[%s825 + $0x40] sm:$0xff]
    %v835 = vld [vmem:[%s825 + $0x48] sm:$0xff]
    %v836 = vld [vmem:[%s825 + $0x50] sm:$0xff]
    %v837 = vld [vmem:[%s825 + $0x58] sm:$0xff]
    %v838 = vld [vmem:[%s825 + $0x60] sm:$0xff]
    %v839 = vld [vmem:[%s825 + $0x68] sm:$0xff]
    %v840 = vld [vmem:[%s825 + $0x70] sm:$0xff]
    %v841 = vld [vmem:[%s825 + $0x78] sm:$0xff]
    %v842 = vld [vmem:[%s6 + $0x9] sm:$0x1]
    %v843 = vlaneseq
    %v844 = vshrl.u32 %v843, 7
    %v845 = vsub.s32 0, %v844
    %v846 = vrot.slane %v842, %v845
    %847 = vmatprep.subr.mxu0 0.0
    %848 = vmatpush1.msra.mxu0 %v841
    %849 = vmatprep.subr.mxu0 0.0
    %850 = vmatpush1.msra.mxu0 %v840
    %851 = vmatprep.subr.mxu0 0.0
    %852 = vmatpush1.msra.mxu0 %v839
    %853 = vmatprep.subr.mxu0 0.0
    %854 = vmatpush1.msra.mxu0 %v838
    %855 = vmatprep.subr.mxu0 0.0
    %856 = vmatpush1.msra.mxu0 %v837
    %857 = vmatprep.subr.mxu0 0.0
    %858 = vmatpush1.msra.mxu0 %v836
    %859 = vmatprep.subr.mxu0 0.0
    %860 = vmatpush1.msra.mxu0 %v835
    %861 = vmatprep.subr.mxu0 0.0
    %862 = vmatpush1.msra.mxu0 %v834
    %863 = vmatprep.subr.mxu0 0.0
    %864 = vmatpush1.msra.mxu0 %v833
    %865 = vmatprep.subr.mxu0 0.0
    %866 = vmatpush1.msra.mxu0 %v832
    %867 = vmatprep.subr.mxu0 0.0
    %868 = vmatpush1.msra.mxu0 %v831
    %869 = vmatprep.subr.mxu0 0.0
    %870 = vmatpush1.msra.mxu0 %v830
    %871 = vmatprep.subr.mxu0 0.0
    %872 = vmatpush1.msra.mxu0 %v829
    %873 = vmatprep.subr.mxu0 0.0
    %874 = vmatpush1.msra.mxu0 %v828
    %875 = vmatprep.subr.mxu0 0.0
    %876 = vmatpush1.msra.mxu0 %v827
    %877 = vmatprep.subr.mxu0 0.0
    %878 = vmatpush1.msra.mxu0 %v826
    %879 = vmatprep.subr.mxu0 0.0
    %880 = vmatpush2.msra.mxu0 0.0
    %881 = vmatprep.subr.mxu0 0.0
    %882 = vmatpush2.msra.mxu0 0.0
    %883 = vmatprep.subr.mxu0 0.0
    %884 = vmatpush2.msra.mxu0 0.0
    %885 = vmatprep.subr.mxu0 0.0
    %886 = vmatpush2.msra.mxu0 0.0
    %887 = vmatprep.subr.mxu0 0.0
    %888 = vmatpush2.msra.mxu0 0.0
    %889 = vmatprep.subr.mxu0 0.0
    %890 = vmatpush2.msra.mxu0 0.0
    %891 = vmatprep.subr.mxu0 0.0
    %892 = vmatpush2.msra.mxu0 0.0
    %893 = vmatprep.subr.mxu0 0.0
    %894 = vmatpush2.msra.mxu0 0.0
    %895 = vmatprep.subr.mxu0 0.0
    %896 = vmatpush2.msra.mxu0 0.0
    %897 = vmatprep.subr.mxu0 0.0
    %898 = vmatpush2.msra.mxu0 0.0
    %899 = vmatprep.subr.mxu0 0.0
    %900 = vmatpush2.msra.mxu0 0.0
    %901 = vmatprep.subr.mxu0 0.0
    %902 = vmatpush2.msra.mxu0 0.0
    %903 = vmatprep.subr.mxu0 0.0
    %904 = vmatpush2.msra.mxu0 0.0
    %905 = vmatprep.subr.mxu0 0.0
    %906 = vmatpush2.msra.mxu0 0.0
    %907 = vmatprep.subr.mxu0 0.0
    %908 = vmatpush2.msra.mxu0 0.0
    %909 = vmatprep.subr.mxu0 0.0
    %910 = vmatpush2.msra.mxu0 0.0
    %911 = vmatprep.mubr.f32.mxu0 0.0
    %912 = vmatmul.mubr.f32.gmra.mxu0 %v824
    %v913 = vpop.f32.mrf.mxu0
    %v914 = vadd.f32 %v846, %v913
    %v915 = vpop.f32.mrf.mxu0
    %916 = vdwg.mxu0
    %v917 = vld [vmem:[%s2] sm:$0xf]
    %v918 = vld [vmem:[%s12] sm:$0xff]
    %v919 = vld [vmem:[%s12 + $0x8] sm:$0xff]
    %v920 = vld [vmem:[%s12 + $0x10] sm:$0xff]
    %v921 = vld [vmem:[%s12 + $0x18] sm:$0xff]
    %v922 = vld [vmem:[%s12 + $0x20] sm:$0xff]
    %v923 = vld [vmem:[%s12 + $0x28] sm:$0xff]
    %v924 = vld [vmem:[%s12 + $0x30] sm:$0xff]
    %v925 = vld [vmem:[%s12 + $0x38] sm:$0xff]
    %v926 = vld [vmem:[%s12 + $0x40] sm:$0xff]
    %v927 = vld [vmem:[%s12 + $0x48] sm:$0xff]
    %v928 = vld [vmem:[%s12 + $0x50] sm:$0xff]
    %v929 = vld [vmem:[%s12 + $0x58] sm:$0xff]
    %v930 = vld [vmem:[%s12 + $0x60] sm:$0xff]
    %v931 = vld [vmem:[%s12 + $0x68] sm:$0xff]
    %v932 = vld [vmem:[%s12 + $0x70] sm:$0xff]
    %v933 = vld [vmem:[%s12 + $0x78] sm:$0xff]
    %v934 = vld [vmem:[%s12 + $0x80] sm:$0xff]
    %v935 = vld [vmem:[%s12 + $0x88] sm:$0xff]
    %v936 = vld [vmem:[%s12 + $0x90] sm:$0xff]
    %v937 = vld [vmem:[%s12 + $0x98] sm:$0xff]
    %v938 = vld [vmem:[%s12 + $0xa0] sm:$0xff]
    %v939 = vld [vmem:[%s12 + $0xa8] sm:$0xff]
    %v940 = vld [vmem:[%s12 + $0xb0] sm:$0xff]
    %v941 = vld [vmem:[%s12 + $0xb8] sm:$0xff]
    %v942 = vld [vmem:[%s12 + $0xc0] sm:$0xff]
    %v943 = vld [vmem:[%s12 + $0xc8] sm:$0xff]
    %v944 = vld [vmem:[%s12 + $0xd0] sm:$0xff]
    %v945 = vld [vmem:[%s12 + $0xd8] sm:$0xff]
    %v946 = vld [vmem:[%s12 + $0xe0] sm:$0xff]
    %v947 = vld [vmem:[%s12 + $0xe8] sm:$0xff]
    %v948 = vld [vmem:[%s12 + $0xf0] sm:$0xff]
    %v949 = vld [vmem:[%s12 + $0xf8] sm:$0xff]
    %v950 = vld [vmem:[%s6 + $0x17] sm:$0x1]
    %v951 = vlaneseq
    %v952 = vshrl.u32 %v951, 7
    %v953 = vsub.s32 0, %v952
    %v954 = vrot.slane %v950, %v953
    %v957 = vunpack.c.l.s4 1983009808
    %v958 = vunpack.c.0.s8 %v957
    %v959 = vlaneseq
    %v960 = vshrl.u32 %v959, 7
    %v961 = vsub.s32 %v958, %v960
    %v962 = vrot.slane %v917, %v961
    %v963 = vcombine.high %v962, %v962
    %966 = vmatprep.subr.mxu0 0.0
    %967 = vmatpush1.msra.mxu0 %v933
    %968 = vmatprep.subr.mxu0 0.0
    %969 = vmatpush1.msra.mxu0 %v932
    %970 = vmatprep.subr.mxu0 0.0
    %971 = vmatpush1.msra.mxu0 %v931
    %972 = vmatprep.subr.mxu0 0.0
    %973 = vmatpush1.msra.mxu0 %v930
    %974 = vmatprep.subr.mxu0 0.0
    %975 = vmatpush1.msra.mxu0 %v929
    %976 = vmatprep.subr.mxu0 0.0
    %977 = vmatpush1.msra.mxu0 %v928
    %978 = vmatprep.subr.mxu0 0.0
    %979 = vmatpush1.msra.mxu0 %v927
    %980 = vmatprep.subr.mxu0 0.0
    %981 = vmatpush1.msra.mxu0 %v926
    %982 = vmatprep.subr.mxu0 0.0
    %983 = vmatpush1.msra.mxu0 %v925
    %984 = vmatprep.subr.mxu0 0.0
    %985 = vmatpush1.msra.mxu0 %v924
    %986 = vmatprep.subr.mxu0 0.0
    %987 = vmatpush1.msra.mxu0 %v923
    %988 = vmatprep.subr.mxu0 0.0
    %989 = vmatpush1.msra.mxu0 %v922
    %990 = vmatprep.subr.mxu0 0.0
    %991 = vmatpush1.msra.mxu0 %v921
    %992 = vmatprep.subr.mxu0 0.0
    %993 = vmatpush1.msra.mxu0 %v920
    %994 = vmatprep.subr.mxu0 0.0
    %995 = vmatpush1.msra.mxu0 %v919
    %996 = vmatprep.subr.mxu0 0.0
    %997 = vmatpush1.msra.mxu0 %v918
    %998 = vmatprep.subr.mxu0 0.0
    %999 = vmatpush2.msra.mxu0 %v949
    %1000 = vmatprep.subr.mxu0 0.0
    %1001 = vmatpush2.msra.mxu0 %v948
    %1002 = vmatprep.subr.mxu0 0.0
    %1003 = vmatpush2.msra.mxu0 %v947
    %1004 = vmatprep.subr.mxu0 0.0
    %1005 = vmatpush2.msra.mxu0 %v946
    %1006 = vmatprep.subr.mxu0 0.0
    %1007 = vmatpush2.msra.mxu0 %v945
    %1008 = vmatprep.subr.mxu0 0.0
    %1009 = vmatpush2.msra.mxu0 %v944
    %1010 = vmatprep.subr.mxu0 0.0
    %1011 = vmatpush2.msra.mxu0 %v943
    %1012 = vmatprep.subr.mxu0 0.0
    %1013 = vmatpush2.msra.mxu0 %v942
    %1014 = vmatprep.subr.mxu0 0.0
    %1015 = vmatpush2.msra.mxu0 %v941
    %1016 = vmatprep.subr.mxu0 0.0
    %1017 = vmatpush2.msra.mxu0 %v940
    %1018 = vmatprep.subr.mxu0 0.0
    %1019 = vmatpush2.msra.mxu0 %v939
    %1020 = vmatprep.subr.mxu0 0.0
    %1021 = vmatpush2.msra.mxu0 %v938
    %1022 = vmatprep.subr.mxu0 0.0
    %1023 = vmatpush2.msra.mxu0 %v937
    %1024 = vmatprep.subr.mxu0 0.0
    %1025 = vmatpush2.msra.mxu0 %v936
    %1026 = vmatprep.subr.mxu0 0.0
    %1027 = vmatpush2.msra.mxu0 %v935
    %1028 = vmatprep.subr.mxu0 0.0
    %1029 = vmatpush2.msra.mxu0 %v934
    %1030 = vmatprep.mubr.f32.mxu0 %v963
    %1031 = vmatmul.mubr.f32.gmra.mxu0 %v962
    %v1032 = vpop.f32.mrf.mxu0
    %v1033 = vadd.f32 %v954, %v1032
    %v1034 = vpop.f32.mrf.mxu0
    %1035 = vdwg.mxu0
    %v1036 = vld [vmem:[%s3] sm:$0xf]
    %s1037 = scalar_lea.vmem %s12, 256
    %v1038 = vld [vmem:[%s1037] sm:$0xff]
    %v1039 = vld [vmem:[%s1037 + $0x8] sm:$0xff]
    %v1040 = vld [vmem:[%s1037 + $0x10] sm:$0xff]
    %v1041 = vld [vmem:[%s1037 + $0x18] sm:$0xff]
    %v1042 = vld [vmem:[%s1037 + $0x20] sm:$0xff]
    %v1043 = vld [vmem:[%s1037 + $0x28] sm:$0xff]
    %v1044 = vld [vmem:[%s1037 + $0x30] sm:$0xff]
    %v1045 = vld [vmem:[%s1037 + $0x38] sm:$0xff]
    %v1046 = vld [vmem:[%s1037 + $0x40] sm:$0xff]
    %v1047 = vld [vmem:[%s1037 + $0x48] sm:$0xff]
    %v1048 = vld [vmem:[%s1037 + $0x50] sm:$0xff]
    %v1049 = vld [vmem:[%s1037 + $0x58] sm:$0xff]
    %v1050 = vld [vmem:[%s1037 + $0x60] sm:$0xff]
    %v1051 = vld [vmem:[%s1037 + $0x68] sm:$0xff]
    %v1052 = vld [vmem:[%s1037 + $0x70] sm:$0xff]
    %v1053 = vld [vmem:[%s1037 + $0x78] sm:$0xff]
    %v1054 = vld [vmem:[%s1037 + $0x80] sm:$0xff]
    %v1055 = vld [vmem:[%s1037 + $0x88] sm:$0xff]
    %v1056 = vld [vmem:[%s1037 + $0x90] sm:$0xff]
    %v1057 = vld [vmem:[%s1037 + $0x98] sm:$0xff]
    %v1058 = vld [vmem:[%s1037 + $0xa0] sm:$0xff]
    %v1059 = vld [vmem:[%s1037 + $0xa8] sm:$0xff]
    %v1060 = vld [vmem:[%s1037 + $0xb0] sm:$0xff]
    %v1061 = vld [vmem:[%s1037 + $0xb8] sm:$0xff]
    %v1062 = vld [vmem:[%s1037 + $0xc0] sm:$0xff]
    %v1063 = vld [vmem:[%s1037 + $0xc8] sm:$0xff]
    %v1064 = vld [vmem:[%s1037 + $0xd0] sm:$0xff]
    %v1065 = vld [vmem:[%s1037 + $0xd8] sm:$0xff]
    %v1066 = vld [vmem:[%s1037 + $0xe0] sm:$0xff]
    %v1067 = vld [vmem:[%s1037 + $0xe8] sm:$0xff]
    %v1068 = vld [vmem:[%s1037 + $0xf0] sm:$0xff]
    %v1069 = vld [vmem:[%s1037 + $0xf8] sm:$0xff]
    %v1070 = vld [vmem:[%s6 + $0x18] sm:$0x1]
    %v1071 = vlaneseq
    %v1072 = vshrl.u32 %v1071, 7
    %v1073 = vsub.s32 0, %v1072
    %v1074 = vrot.slane %v1070, %v1073
    %v1077 = vunpack.c.l.s4 1983009808
    %v1078 = vunpack.c.0.s8 %v1077
    %v1079 = vlaneseq
    %v1080 = vshrl.u32 %v1079, 7
    %v1081 = vsub.s32 %v1078, %v1080
    %v1082 = vrot.slane %v1036, %v1081
    %v1083 = vcombine.high %v1082, %v1082
    %1086 = vmatprep.subr.mxu0 0.0
    %1087 = vmatpush1.msra.mxu0 %v1053
    %1088 = vmatprep.subr.mxu0 0.0
    %1089 = vmatpush1.msra.mxu0 %v1052
    %1090 = vmatprep.subr.mxu0 0.0
    %1091 = vmatpush1.msra.mxu0 %v1051
    %1092 = vmatprep.subr.mxu0 0.0
    %1093 = vmatpush1.msra.mxu0 %v1050
    %1094 = vmatprep.subr.mxu0 0.0
    %1095 = vmatpush1.msra.mxu0 %v1049
    %1096 = vmatprep.subr.mxu0 0.0
    %1097 = vmatpush1.msra.mxu0 %v1048
    %1098 = vmatprep.subr.mxu0 0.0
    %1099 = vmatpush1.msra.mxu0 %v1047
    %1100 = vmatprep.subr.mxu0 0.0
    %1101 = vmatpush1.msra.mxu0 %v1046
    %1102 = vmatprep.subr.mxu0 0.0
    %1103 = vmatpush1.msra.mxu0 %v1045
    %1104 = vmatprep.subr.mxu0 0.0
    %1105 = vmatpush1.msra.mxu0 %v1044
    %1106 = vmatprep.subr.mxu0 0.0
    %1107 = vmatpush1.msra.mxu0 %v1043
    %1108 = vmatprep.subr.mxu0 0.0
    %1109 = vmatpush1.msra.mxu0 %v1042
    %1110 = vmatprep.subr.mxu0 0.0
    %1111 = vmatpush1.msra.mxu0 %v1041
    %1112 = vmatprep.subr.mxu0 0.0
    %1113 = vmatpush1.msra.mxu0 %v1040
    %1114 = vmatprep.subr.mxu0 0.0
    %1115 = vmatpush1.msra.mxu0 %v1039
    %1116 = vmatprep.subr.mxu0 0.0
    %1117 = vmatpush1.msra.mxu0 %v1038
    %1118 = vmatprep.subr.mxu0 0.0
    %1119 = vmatpush2.msra.mxu0 %v1069
    %1120 = vmatprep.subr.mxu0 0.0
    %1121 = vmatpush2.msra.mxu0 %v1068
    %1122 = vmatprep.subr.mxu0 0.0
    %1123 = vmatpush2.msra.mxu0 %v1067
    %1124 = vmatprep.subr.mxu0 0.0
    %1125 = vmatpush2.msra.mxu0 %v1066
    %1126 = vmatprep.subr.mxu0 0.0
    %1127 = vmatpush2.msra.mxu0 %v1065
    %1128 = vmatprep.subr.mxu0 0.0
    %1129 = vmatpush2.msra.mxu0 %v1064
    %1130 = vmatprep.subr.mxu0 0.0
    %1131 = vmatpush2.msra.mxu0 %v1063
    %1132 = vmatprep.subr.mxu0 0.0
    %1133 = vmatpush2.msra.mxu0 %v1062
    %1134 = vmatprep.subr.mxu0 0.0
    %1135 = vmatpush2.msra.mxu0 %v1061
    %1136 = vmatprep.subr.mxu0 0.0
    %1137 = vmatpush2.msra.mxu0 %v1060
    %1138 = vmatprep.subr.mxu0 0.0
    %1139 = vmatpush2.msra.mxu0 %v1059
    %1140 = vmatprep.subr.mxu0 0.0
    %1141 = vmatpush2.msra.mxu0 %v1058
    %1142 = vmatprep.subr.mxu0 0.0
    %1143 = vmatpush2.msra.mxu0 %v1057
    %1144 = vmatprep.subr.mxu0 0.0
    %1145 = vmatpush2.msra.mxu0 %v1056
    %1146 = vmatprep.subr.mxu0 0.0
    %1147 = vmatpush2.msra.mxu0 %v1055
    %1148 = vmatprep.subr.mxu0 0.0
    %1149 = vmatpush2.msra.mxu0 %v1054
    %1150 = vmatprep.mubr.f32.mxu0 %v1083
    %1151 = vmatmul.mubr.f32.gmra.mxu0 %v1082
    %v1152 = vpop.f32.mrf.mxu0
    %v1153 = vadd.f32 %v1074, %v1152
    %v1154 = vpop.f32.mrf.mxu0
    %1155 = vdwg.mxu0
    %v1156 = vld [vmem:[%s6 + $0xc] sm:$0x1]
    %v1157 = vlaneseq
    %v1158 = vshrl.u32 %v1157, 7
    %v1159 = vsub.s32 0, %v1158
    %v1160 = vrot.slane %v1156, %v1159
    %v1161 = vmul.f32 %v1033, %v1160
    %v1162 = vld [vmem:[%s6 + $0xd] sm:$0x1]
    %v1163 = vlaneseq
    %v1164 = vshrl.u32 %v1163, 7
    %v1165 = vsub.s32 0, %v1164
    %v1166 = vrot.slane %v1162, %v1165
    %v1167 = vadd.f32 %v1161, %v1166
    %v1168 = vmax.f32 %v1167, 0.0
    %v1169 = vld [vmem:[%s10] sm:$0xff]
    %v1170 = vld [vmem:[%s10 + $0x8] sm:$0xff]
    %v1171 = vld [vmem:[%s10 + $0x10] sm:$0xff]
    %v1172 = vld [vmem:[%s10 + $0x18] sm:$0xff]
    %v1173 = vld [vmem:[%s10 + $0x20] sm:$0xff]
    %v1174 = vld [vmem:[%s10 + $0x28] sm:$0xff]
    %v1175 = vld [vmem:[%s10 + $0x30] sm:$0xff]
    %v1176 = vld [vmem:[%s10 + $0x38] sm:$0xff]
    %v1177 = vld [vmem:[%s10 + $0x40] sm:$0xff]
    %v1178 = vld [vmem:[%s10 + $0x48] sm:$0xff]
    %v1179 = vld [vmem:[%s10 + $0x50] sm:$0xff]
    %v1180 = vld [vmem:[%s10 + $0x58] sm:$0xff]
    %v1181 = vld [vmem:[%s10 + $0x60] sm:$0xff]
    %v1182 = vld [vmem:[%s10 + $0x68] sm:$0xff]
    %v1183 = vld [vmem:[%s10 + $0x70] sm:$0xff]
    %v1184 = vld [vmem:[%s10 + $0x78] sm:$0xff]
    %v1185 = vld [vmem:[%s7] sm:$0x1]
    %v1186 = vlaneseq
    %v1187 = vshrl.u32 %v1186, 7
    %v1188 = vsub.s32 0, %v1187
    %v1189 = vrot.slane %v1185, %v1188
    %1190 = vmatprep.subr.mxu0 0.0
    %1191 = vmatpush1.msra.mxu0 %v1184
    %1192 = vmatprep.subr.mxu0 0.0
    %1193 = vmatpush1.msra.mxu0 %v1183
    %1194 = vmatprep.subr.mxu0 0.0
    %1195 = vmatpush1.msra.mxu0 %v1182
    %1196 = vmatprep.subr.mxu0 0.0
    %1197 = vmatpush1.msra.mxu0 %v1181
    %1198 = vmatprep.subr.mxu0 0.0
    %1199 = vmatpush1.msra.mxu0 %v1180
    %1200 = vmatprep.subr.mxu0 0.0
    %1201 = vmatpush1.msra.mxu0 %v1179
    %1202 = vmatprep.subr.mxu0 0.0
    %1203 = vmatpush1.msra.mxu0 %v1178
    %1204 = vmatprep.subr.mxu0 0.0
    %1205 = vmatpush1.msra.mxu0 %v1177
    %1206 = vmatprep.subr.mxu0 0.0
    %1207 = vmatpush1.msra.mxu0 %v1176
    %1208 = vmatprep.subr.mxu0 0.0
    %1209 = vmatpush1.msra.mxu0 %v1175
    %1210 = vmatprep.subr.mxu0 0.0
    %1211 = vmatpush1.msra.mxu0 %v1174
    %1212 = vmatprep.subr.mxu0 0.0
    %1213 = vmatpush1.msra.mxu0 %v1173
    %1214 = vmatprep.subr.mxu0 0.0
    %1215 = vmatpush1.msra.mxu0 %v1172
    %1216 = vmatprep.subr.mxu0 0.0
    %1217 = vmatpush1.msra.mxu0 %v1171
    %1218 = vmatprep.subr.mxu0 0.0
    %1219 = vmatpush1.msra.mxu0 %v1170
    %1220 = vmatprep.subr.mxu0 0.0
    %1221 = vmatpush1.msra.mxu0 %v1169
    %1222 = vmatprep.subr.mxu0 0.0
    %1223 = vmatpush2.msra.mxu0 0.0
    %1224 = vmatprep.subr.mxu0 0.0
    %1225 = vmatpush2.msra.mxu0 0.0
    %1226 = vmatprep.subr.mxu0 0.0
    %1227 = vmatpush2.msra.mxu0 0.0
    %1228 = vmatprep.subr.mxu0 0.0
    %1229 = vmatpush2.msra.mxu0 0.0
    %1230 = vmatprep.subr.mxu0 0.0
    %1231 = vmatpush2.msra.mxu0 0.0
    %1232 = vmatprep.subr.mxu0 0.0
    %1233 = vmatpush2.msra.mxu0 0.0
    %1234 = vmatprep.subr.mxu0 0.0
    %1235 = vmatpush2.msra.mxu0 0.0
    %1236 = vmatprep.subr.mxu0 0.0
    %1237 = vmatpush2.msra.mxu0 0.0
    %1238 = vmatprep.subr.mxu0 0.0
    %1239 = vmatpush2.msra.mxu0 0.0
    %1240 = vmatprep.subr.mxu0 0.0
    %1241 = vmatpush2.msra.mxu0 0.0
    %1242 = vmatprep.subr.mxu0 0.0
    %1243 = vmatpush2.msra.mxu0 0.0
    %1244 = vmatprep.subr.mxu0 0.0
    %1245 = vmatpush2.msra.mxu0 0.0
    %1246 = vmatprep.subr.mxu0 0.0
    %1247 = vmatpush2.msra.mxu0 0.0
    %1248 = vmatprep.subr.mxu0 0.0
    %1249 = vmatpush2.msra.mxu0 0.0
    %1250 = vmatprep.subr.mxu0 0.0
    %1251 = vmatpush2.msra.mxu0 0.0
    %1252 = vmatprep.subr.mxu0 0.0
    %1253 = vmatpush2.msra.mxu0 0.0
    %1254 = vmatprep.mubr.f32.mxu0 0.0
    %1255 = vmatmul.mubr.f32.gmra.mxu0 %v1168
    %v1256 = vpop.f32.mrf.mxu0
    %v1257 = vadd.f32 %v1189, %v1256
    %v1258 = vpop.f32.mrf.mxu0
    %1259 = vdwg.mxu0
    %v1260 = vld [vmem:[%s6 + $0xe] sm:$0x1]
    %v1261 = vlaneseq
    %v1262 = vshrl.u32 %v1261, 7
    %v1263 = vsub.s32 0, %v1262
    %v1264 = vrot.slane %v1260, %v1263
    %v1265 = vmul.f32 %v1153, %v1264
    %v1266 = vld [vmem:[%s6 + $0xf] sm:$0x1]
    %v1267 = vlaneseq
    %v1268 = vshrl.u32 %v1267, 7
    %v1269 = vsub.s32 0, %v1268
    %v1270 = vrot.slane %v1266, %v1269
    %v1271 = vadd.f32 %v1265, %v1270
    %v1272 = vmax.f32 %v1271, 0.0
    %s1273 = scalar_lea.vmem %s10, 128
    %v1274 = vld [vmem:[%s1273] sm:$0xff]
    %v1275 = vld [vmem:[%s1273 + $0x8] sm:$0xff]
    %v1276 = vld [vmem:[%s1273 + $0x10] sm:$0xff]
    %v1277 = vld [vmem:[%s1273 + $0x18] sm:$0xff]
    %v1278 = vld [vmem:[%s1273 + $0x20] sm:$0xff]
    %v1279 = vld [vmem:[%s1273 + $0x28] sm:$0xff]
    %v1280 = vld [vmem:[%s1273 + $0x30] sm:$0xff]
    %v1281 = vld [vmem:[%s1273 + $0x38] sm:$0xff]
    %v1282 = vld [vmem:[%s1273 + $0x40] sm:$0xff]
    %v1283 = vld [vmem:[%s1273 + $0x48] sm:$0xff]
    %v1284 = vld [vmem:[%s1273 + $0x50] sm:$0xff]
    %v1285 = vld [vmem:[%s1273 + $0x58] sm:$0xff]
    %v1286 = vld [vmem:[%s1273 + $0x60] sm:$0xff]
    %v1287 = vld [vmem:[%s1273 + $0x68] sm:$0xff]
    %v1288 = vld [vmem:[%s1273 + $0x70] sm:$0xff]
    %v1289 = vld [vmem:[%s1273 + $0x78] sm:$0xff]
    %v1290 = vld [vmem:[%s7 + $0x1] sm:$0x1]
    %v1291 = vlaneseq
    %v1292 = vshrl.u32 %v1291, 7
    %v1293 = vsub.s32 0, %v1292
    %v1294 = vrot.slane %v1290, %v1293
    %1295 = vmatprep.subr.mxu0 0.0
    %1296 = vmatpush1.msra.mxu0 %v1289
    %1297 = vmatprep.subr.mxu0 0.0
    %1298 = vmatpush1.msra.mxu0 %v1288
    %1299 = vmatprep.subr.mxu0 0.0
    %1300 = vmatpush1.msra.mxu0 %v1287
    %1301 = vmatprep.subr.mxu0 0.0
    %1302 = vmatpush1.msra.mxu0 %v1286
    %1303 = vmatprep.subr.mxu0 0.0
    %1304 = vmatpush1.msra.mxu0 %v1285
    %1305 = vmatprep.subr.mxu0 0.0
    %1306 = vmatpush1.msra.mxu0 %v1284
    %1307 = vmatprep.subr.mxu0 0.0
    %1308 = vmatpush1.msra.mxu0 %v1283
    %1309 = vmatprep.subr.mxu0 0.0
    %1310 = vmatpush1.msra.mxu0 %v1282
    %1311 = vmatprep.subr.mxu0 0.0
    %1312 = vmatpush1.msra.mxu0 %v1281
    %1313 = vmatprep.subr.mxu0 0.0
    %1314 = vmatpush1.msra.mxu0 %v1280
    %1315 = vmatprep.subr.mxu0 0.0
    %1316 = vmatpush1.msra.mxu0 %v1279
    %1317 = vmatprep.subr.mxu0 0.0
    %1318 = vmatpush1.msra.mxu0 %v1278
    %1319 = vmatprep.subr.mxu0 0.0
    %1320 = vmatpush1.msra.mxu0 %v1277
    %1321 = vmatprep.subr.mxu0 0.0
    %1322 = vmatpush1.msra.mxu0 %v1276
    %1323 = vmatprep.subr.mxu0 0.0
    %1324 = vmatpush1.msra.mxu0 %v1275
    %1325 = vmatprep.subr.mxu0 0.0
    %1326 = vmatpush1.msra.mxu0 %v1274
    %1327 = vmatprep.subr.mxu0 0.0
    %1328 = vmatpush2.msra.mxu0 0.0
    %1329 = vmatprep.subr.mxu0 0.0
    %1330 = vmatpush2.msra.mxu0 0.0
    %1331 = vmatprep.subr.mxu0 0.0
    %1332 = vmatpush2.msra.mxu0 0.0
    %1333 = vmatprep.subr.mxu0 0.0
    %1334 = vmatpush2.msra.mxu0 0.0
    %1335 = vmatprep.subr.mxu0 0.0
    %1336 = vmatpush2.msra.mxu0 0.0
    %1337 = vmatprep.subr.mxu0 0.0
    %1338 = vmatpush2.msra.mxu0 0.0
    %1339 = vmatprep.subr.mxu0 0.0
    %1340 = vmatpush2.msra.mxu0 0.0
    %1341 = vmatprep.subr.mxu0 0.0
    %1342 = vmatpush2.msra.mxu0 0.0
    %1343 = vmatprep.subr.mxu0 0.0
    %1344 = vmatpush2.msra.mxu0 0.0
    %1345 = vmatprep.subr.mxu0 0.0
    %1346 = vmatpush2.msra.mxu0 0.0
    %1347 = vmatprep.subr.mxu0 0.0
    %1348 = vmatpush2.msra.mxu0 0.0
    %1349 = vmatprep.subr.mxu0 0.0
    %1350 = vmatpush2.msra.mxu0 0.0
    %1351 = vmatprep.subr.mxu0 0.0
    %1352 = vmatpush2.msra.mxu0 0.0
    %1353 = vmatprep.subr.mxu0 0.0
    %1354 = vmatpush2.msra.mxu0 0.0
    %1355 = vmatprep.subr.mxu0 0.0
    %1356 = vmatpush2.msra.mxu0 0.0
    %1357 = vmatprep.subr.mxu0 0.0
    %1358 = vmatpush2.msra.mxu0 0.0
    %1359 = vmatprep.mubr.f32.mxu0 0.0
    %1360 = vmatmul.mubr.f32.gmra.mxu0 %v1272
    %v1361 = vpop.f32.mrf.mxu0
    %v1362 = vadd.f32 %v1294, %v1361
    %v1363 = vpop.f32.mrf.mxu0
    %1364 = vdwg.mxu0
    %s1365 = scalar_lea.vmem [#allocation2], 896
    %v1366 = vld [vmem:[%s1365] sm:$0xff]
    %v1367 = vld [vmem:[%s1365 + $0x8] sm:$0xff]
    %v1368 = vld [vmem:[%s1365 + $0x10] sm:$0xff]
    %v1369 = vld [vmem:[%s1365 + $0x18] sm:$0xff]
    %v1370 = vld [vmem:[%s1365 + $0x20] sm:$0xff]
    %v1371 = vld [vmem:[%s1365 + $0x28] sm:$0xff]
    %v1372 = vld [vmem:[%s1365 + $0x30] sm:$0xff]
    %v1373 = vld [vmem:[%s1365 + $0x38] sm:$0xff]
    %v1374 = vld [vmem:[%s1365 + $0x40] sm:$0xff]
    %v1375 = vld [vmem:[%s1365 + $0x48] sm:$0xff]
    %v1376 = vld [vmem:[%s1365 + $0x50] sm:$0xff]
    %v1377 = vld [vmem:[%s1365 + $0x58] sm:$0xff]
    %v1378 = vld [vmem:[%s1365 + $0x60] sm:$0xff]
    %v1379 = vld [vmem:[%s1365 + $0x68] sm:$0xff]
    %v1380 = vld [vmem:[%s1365 + $0x70] sm:$0xff]
    %v1381 = vld [vmem:[%s1365 + $0x78] sm:$0xff]
    %vm1382 = vcmask 523264
    %v1384 = vsel %vm1382, %v1362, 0
    %1386 = vmatprep.subr.mxu0 0.0
    %1387 = vmatpush1.msra.mxu0 0.0
    %1388 = vmatprep.subr.mxu0 0.0
    %1389 = vmatpush1.msra.mxu0 0.0
    %1390 = vmatprep.subr.mxu0 0.0
    %1391 = vmatpush1.msra.mxu0 0.0
    %1392 = vmatprep.subr.mxu0 0.0
    %1393 = vmatpush1.msra.mxu0 0.0
    %1394 = vmatprep.subr.mxu0 0.0
    %1395 = vmatpush1.msra.mxu0 0.0
    %1396 = vmatprep.subr.mxu0 0.0
    %1397 = vmatpush1.msra.mxu0 0.0
    %1398 = vmatprep.subr.mxu0 0.0
    %1399 = vmatpush1.msra.mxu0 0.0
    %1400 = vmatprep.subr.mxu0 0.0
    %1401 = vmatpush1.msra.mxu0 0.0
    %1402 = vmatprep.subr.mxu0 0.0
    %1403 = vmatpush1.msra.mxu0 %v1381
    %1404 = vmatprep.subr.mxu0 0.0
    %1405 = vmatpush1.msra.mxu0 %v1380
    %1406 = vmatprep.subr.mxu0 0.0
    %1407 = vmatpush1.msra.mxu0 %v1379
    %1408 = vmatprep.subr.mxu0 0.0
    %1409 = vmatpush1.msra.mxu0 %v1378
    %1410 = vmatprep.subr.mxu0 0.0
    %1411 = vmatpush1.msra.mxu0 %v1377
    %1412 = vmatprep.subr.mxu0 0.0
    %1413 = vmatpush1.msra.mxu0 %v1376
    %1414 = vmatprep.subr.mxu0 0.0
    %1415 = vmatpush1.msra.mxu0 %v1375
    %1416 = vmatprep.subr.mxu0 0.0
    %1417 = vmatpush1.msra.mxu0 %v1374
    %1418 = vmatprep.subr.mxu0 0.0
    %1419 = vmatpush2.msra.mxu0 0.0
    %1420 = vmatprep.subr.mxu0 0.0
    %1421 = vmatpush2.msra.mxu0 0.0
    %1422 = vmatprep.subr.mxu0 0.0
    %1423 = vmatpush2.msra.mxu0 0.0
    %1424 = vmatprep.subr.mxu0 0.0
    %1425 = vmatpush2.msra.mxu0 0.0
    %1426 = vmatprep.subr.mxu0 0.0
    %1427 = vmatpush2.msra.mxu0 0.0
    %1428 = vmatprep.subr.mxu0 0.0
    %1429 = vmatpush2.msra.mxu0 0.0
    %1430 = vmatprep.subr.mxu0 0.0
    %1431 = vmatpush2.msra.mxu0 0.0
    %1432 = vmatprep.subr.mxu0 0.0
    %1433 = vmatpush2.msra.mxu0 0.0
    %1434 = vmatprep.subr.mxu0 0.0
    %1435 = vmatpush2.msra.mxu0 0.0
    %1436 = vmatprep.subr.mxu0 0.0
    %1437 = vmatpush2.msra.mxu0 0.0
    %1438 = vmatprep.subr.mxu0 0.0
    %1439 = vmatpush2.msra.mxu0 0.0
    %1440 = vmatprep.subr.mxu0 0.0
    %1441 = vmatpush2.msra.mxu0 0.0
    %1442 = vmatprep.subr.mxu0 0.0
    %1443 = vmatpush2.msra.mxu0 0.0
    %1444 = vmatprep.subr.mxu0 0.0
    %1445 = vmatpush2.msra.mxu0 0.0
    %1446 = vmatprep.subr.mxu0 0.0
    %1447 = vmatpush2.msra.mxu0 0.0
    %1448 = vmatprep.subr.mxu0 0.0
    %1449 = vmatpush2.msra.mxu0 0.0
    %1450 = vmatprep.mubr.f32.mxu0 0.0
    %1451 = vmatmul.mubr.f32.gmra.mxu0 %v1384
    %v1452 = vpop.f32.mrf.mxu0
    %v1453 = vadd.f32 0.0, %v1452
    %v1454 = vpop.f32.mrf.mxu0
    %1455 = vdwg.mxu0
    %v1457 = vsel %vm1382, %v1257, 0
    %1459 = vmatprep.subr.mxu0 0.0
    %1460 = vmatpush1.msra.mxu0 0.0
    %1461 = vmatprep.subr.mxu0 0.0
    %1462 = vmatpush1.msra.mxu0 0.0
    %1463 = vmatprep.subr.mxu0 0.0
    %1464 = vmatpush1.msra.mxu0 0.0
    %1465 = vmatprep.subr.mxu0 0.0
    %1466 = vmatpush1.msra.mxu0 0.0
    %1467 = vmatprep.subr.mxu0 0.0
    %1468 = vmatpush1.msra.mxu0 0.0
    %1469 = vmatprep.subr.mxu0 0.0
    %1470 = vmatpush1.msra.mxu0 0.0
    %1471 = vmatprep.subr.mxu0 0.0
    %1472 = vmatpush1.msra.mxu0 0.0
    %1473 = vmatprep.subr.mxu0 0.0
    %1474 = vmatpush1.msra.mxu0 0.0
    %1475 = vmatprep.subr.mxu0 0.0
    %1476 = vmatpush1.msra.mxu0 %v1373
    %1477 = vmatprep.subr.mxu0 0.0
    %1478 = vmatpush1.msra.mxu0 %v1372
    %1479 = vmatprep.subr.mxu0 0.0
    %1480 = vmatpush1.msra.mxu0 %v1371
    %1481 = vmatprep.subr.mxu0 0.0
    %1482 = vmatpush1.msra.mxu0 %v1370
    %1483 = vmatprep.subr.mxu0 0.0
    %1484 = vmatpush1.msra.mxu0 %v1369
    %1485 = vmatprep.subr.mxu0 0.0
    %1486 = vmatpush1.msra.mxu0 %v1368
    %1487 = vmatprep.subr.mxu0 0.0
    %1488 = vmatpush1.msra.mxu0 %v1367
    %1489 = vmatprep.subr.mxu0 0.0
    %1490 = vmatpush1.msra.mxu0 %v1366
    %1491 = vmatprep.subr.mxu0 0.0
    %1492 = vmatpush2.msra.mxu0 0.0
    %1493 = vmatprep.subr.mxu0 0.0
    %1494 = vmatpush2.msra.mxu0 0.0
    %1495 = vmatprep.subr.mxu0 0.0
    %1496 = vmatpush2.msra.mxu0 0.0
    %1497 = vmatprep.subr.mxu0 0.0
    %1498 = vmatpush2.msra.mxu0 0.0
    %1499 = vmatprep.subr.mxu0 0.0
    %1500 = vmatpush2.msra.mxu0 0.0
    %1501 = vmatprep.subr.mxu0 0.0
    %1502 = vmatpush2.msra.mxu0 0.0
    %1503 = vmatprep.subr.mxu0 0.0
    %1504 = vmatpush2.msra.mxu0 0.0
    %1505 = vmatprep.subr.mxu0 0.0
    %1506 = vmatpush2.msra.mxu0 0.0
    %1507 = vmatprep.subr.mxu0 0.0
    %1508 = vmatpush2.msra.mxu0 0.0
    %1509 = vmatprep.subr.mxu0 0.0
    %1510 = vmatpush2.msra.mxu0 0.0
    %1511 = vmatprep.subr.mxu0 0.0
    %1512 = vmatpush2.msra.mxu0 0.0
    %1513 = vmatprep.subr.mxu0 0.0
    %1514 = vmatpush2.msra.mxu0 0.0
    %1515 = vmatprep.subr.mxu0 0.0
    %1516 = vmatpush2.msra.mxu0 0.0
    %1517 = vmatprep.subr.mxu0 0.0
    %1518 = vmatpush2.msra.mxu0 0.0
    %1519 = vmatprep.subr.mxu0 0.0
    %1520 = vmatpush2.msra.mxu0 0.0
    %1521 = vmatprep.subr.mxu0 0.0
    %1522 = vmatpush2.msra.mxu0 0.0
    %1523 = vmatprep.mubr.f32.mxu0 0.0
    %1524 = vmatmul.mubr.f32.gmra.mxu0 %v1457
    %v1525 = vpop.f32.mrf.mxu0
    %v1526 = vadd.f32 %v1453, %v1525
    %v1527 = vpop.f32.mrf.mxu0
    %1528 = vdwg.mxu0
    %v1529 = vld [vmem:[%s6 + $0xa] sm:$0x1]
    %v1530 = vlaneseq
    %v1531 = vshrl.u32 %v1530, 7
    %v1532 = vsub.s32 0, %v1531
    %v1533 = vrot.slane %v1529, %v1532
    %v1534 = vadd.f32 %v1526, %v1533
    %v1535 = vmax.f32 %v1534, 0.0
    %s1536 = scalar_lea.vmem [#allocation2], 1024
    %v1537 = vld [vmem:[%s1536] sm:$0xff]
    %v1538 = vld [vmem:[%s1536 + $0x8] sm:$0xff]
    %v1539 = vld [vmem:[%s1536 + $0x10] sm:$0xff]
    %v1540 = vld [vmem:[%s1536 + $0x18] sm:$0xff]
    %v1541 = vld [vmem:[%s1536 + $0x20] sm:$0xff]
    %v1542 = vld [vmem:[%s1536 + $0x28] sm:$0xff]
    %v1543 = vld [vmem:[%s1536 + $0x30] sm:$0xff]
    %v1544 = vld [vmem:[%s1536 + $0x38] sm:$0xff]
    %v1545 = vld [vmem:[%s1536 + $0x40] sm:$0xff]
    %v1546 = vld [vmem:[%s1536 + $0x48] sm:$0xff]
    %v1547 = vld [vmem:[%s1536 + $0x50] sm:$0xff]
    %v1548 = vld [vmem:[%s1536 + $0x58] sm:$0xff]
    %v1549 = vld [vmem:[%s1536 + $0x60] sm:$0xff]
    %v1550 = vld [vmem:[%s1536 + $0x68] sm:$0xff]
    %v1551 = vld [vmem:[%s1536 + $0x70] sm:$0xff]
    %v1552 = vld [vmem:[%s1536 + $0x78] sm:$0xff]
    %v1553 = vld [vmem:[%s6 + $0xb] sm:$0x1]
    %v1554 = vlaneseq
    %v1555 = vshrl.u32 %v1554, 7
    %v1556 = vsub.s32 0, %v1555
    %v1557 = vrot.slane %v1553, %v1556
    %1558 = vmatprep.subr.mxu0 0.0
    %1559 = vmatpush1.msra.mxu0 %v1552
    %1560 = vmatprep.subr.mxu0 0.0
    %1561 = vmatpush1.msra.mxu0 %v1551
    %1562 = vmatprep.subr.mxu0 0.0
    %1563 = vmatpush1.msra.mxu0 %v1550
    %1564 = vmatprep.subr.mxu0 0.0
    %1565 = vmatpush1.msra.mxu0 %v1549
    %1566 = vmatprep.subr.mxu0 0.0
    %1567 = vmatpush1.msra.mxu0 %v1548
    %1568 = vmatprep.subr.mxu0 0.0
    %1569 = vmatpush1.msra.mxu0 %v1547
    %1570 = vmatprep.subr.mxu0 0.0
    %1571 = vmatpush1.msra.mxu0 %v1546
    %1572 = vmatprep.subr.mxu0 0.0
    %1573 = vmatpush1.msra.mxu0 %v1545
    %1574 = vmatprep.subr.mxu0 0.0
    %1575 = vmatpush1.msra.mxu0 %v1544
    %1576 = vmatprep.subr.mxu0 0.0
    %1577 = vmatpush1.msra.mxu0 %v1543
    %1578 = vmatprep.subr.mxu0 0.0
    %1579 = vmatpush1.msra.mxu0 %v1542
    %1580 = vmatprep.subr.mxu0 0.0
    %1581 = vmatpush1.msra.mxu0 %v1541
    %1582 = vmatprep.subr.mxu0 0.0
    %1583 = vmatpush1.msra.mxu0 %v1540
    %1584 = vmatprep.subr.mxu0 0.0
    %1585 = vmatpush1.msra.mxu0 %v1539
    %1586 = vmatprep.subr.mxu0 0.0
    %1587 = vmatpush1.msra.mxu0 %v1538
    %1588 = vmatprep.subr.mxu0 0.0
    %1589 = vmatpush1.msra.mxu0 %v1537
    %1590 = vmatprep.subr.mxu0 0.0
    %1591 = vmatpush2.msra.mxu0 0.0
    %1592 = vmatprep.subr.mxu0 0.0
    %1593 = vmatpush2.msra.mxu0 0.0
    %1594 = vmatprep.subr.mxu0 0.0
    %1595 = vmatpush2.msra.mxu0 0.0
    %1596 = vmatprep.subr.mxu0 0.0
    %1597 = vmatpush2.msra.mxu0 0.0
    %1598 = vmatprep.subr.mxu0 0.0
    %1599 = vmatpush2.msra.mxu0 0.0
    %1600 = vmatprep.subr.mxu0 0.0
    %1601 = vmatpush2.msra.mxu0 0.0
    %1602 = vmatprep.subr.mxu0 0.0
    %1603 = vmatpush2.msra.mxu0 0.0
    %1604 = vmatprep.subr.mxu0 0.0
    %1605 = vmatpush2.msra.mxu0 0.0
    %1606 = vmatprep.subr.mxu0 0.0
    %1607 = vmatpush2.msra.mxu0 0.0
    %1608 = vmatprep.subr.mxu0 0.0
    %1609 = vmatpush2.msra.mxu0 0.0
    %1610 = vmatprep.subr.mxu0 0.0
    %1611 = vmatpush2.msra.mxu0 0.0
    %1612 = vmatprep.subr.mxu0 0.0
    %1613 = vmatpush2.msra.mxu0 0.0
    %1614 = vmatprep.subr.mxu0 0.0
    %1615 = vmatpush2.msra.mxu0 0.0
    %1616 = vmatprep.subr.mxu0 0.0
    %1617 = vmatpush2.msra.mxu0 0.0
    %1618 = vmatprep.subr.mxu0 0.0
    %1619 = vmatpush2.msra.mxu0 0.0
    %1620 = vmatprep.subr.mxu0 0.0
    %1621 = vmatpush2.msra.mxu0 0.0
    %1622 = vmatprep.mubr.f32.mxu0 0.0
    %1623 = vmatmul.mubr.f32.gmra.mxu0 %v1535
    %v1624 = vpop.f32.mrf.mxu0
    %v1625 = vadd.f32 %v1557, %v1624
    %v1626 = vpop.f32.mrf.mxu0
    %1627 = vdwg.mxu0
    %v1628 = vld [vmem:[%s6 + $0x10] sm:$0x1]
    %v1629 = vld [vmem:[%s6 + $0x11] sm:$0x1]
    %v1630 = vsel %vm225, %v641, 0.0
    %1631 = vadd.xlane.f32.xlu0 %v1630
    %v1632 = vpop.xlane.xlu0 %1631
    %v1633 = vmul.f32 %v1632, %v229
    %v1634 = vsub.f32 %v641, %v1633
    %v1635 = vmul.f32 %v1634, %v1634
    %v1636 = vsel %vm225, %v1635, 0.0
    %1637 = vadd.xlane.f32.xlu0 %v1636
    %v1638 = vpop.xlane.xlu0 %1637
    %v1639 = vmul.f32 %v1638, %v229
    %v1640 = vadd.f32 %v1639, 1e-05
    %v1641 = vrsqrt.pop %v1640
    %v1642 = vmul.f32 %v1634, %v1641
    %v1643 = vlaneseq
    %v1644 = vshrl.u32 %v1643, 7
    %v1645 = vsub.s32 0, %v1644
    %v1646 = vrot.slane %v1628, %v1645
    %v1647 = vmul.f32 %v1642, %v1646
    %v1648 = vlaneseq
    %v1649 = vshrl.u32 %v1648, 7
    %v1650 = vsub.s32 0, %v1649
    %v1651 = vrot.slane %v1629, %v1650
    %v1652 = vadd.f32 %v1647, %v1651
    %v1653 = vmax.f32 %v1652, 0.0
    %s1654 = scalar_lea.vmem %s10, 256
    %v1655 = vld [vmem:[%s1654] sm:$0xff]
    %v1656 = vld [vmem:[%s1654 + $0x8] sm:$0xff]
    %v1657 = vld [vmem:[%s1654 + $0x10] sm:$0xff]
    %v1658 = vld [vmem:[%s1654 + $0x18] sm:$0xff]
    %v1659 = vld [vmem:[%s1654 + $0x20] sm:$0xff]
    %v1660 = vld [vmem:[%s1654 + $0x28] sm:$0xff]
    %v1661 = vld [vmem:[%s1654 + $0x30] sm:$0xff]
    %v1662 = vld [vmem:[%s1654 + $0x38] sm:$0xff]
    %v1663 = vld [vmem:[%s1654 + $0x40] sm:$0xff]
    %v1664 = vld [vmem:[%s1654 + $0x48] sm:$0xff]
    %v1665 = vld [vmem:[%s1654 + $0x50] sm:$0xff]
    %v1666 = vld [vmem:[%s1654 + $0x58] sm:$0xff]
    %v1667 = vld [vmem:[%s1654 + $0x60] sm:$0xff]
    %v1668 = vld [vmem:[%s1654 + $0x68] sm:$0xff]
    %v1669 = vld [vmem:[%s1654 + $0x70] sm:$0xff]
    %v1670 = vld [vmem:[%s1654 + $0x78] sm:$0xff]
    %v1671 = vld [vmem:[%s7 + $0x2] sm:$0x1]
    %v1672 = vlaneseq
    %v1673 = vshrl.u32 %v1672, 7
    %v1674 = vsub.s32 0, %v1673
    %v1675 = vrot.slane %v1671, %v1674
    %1676 = vmatprep.subr.mxu0 0.0
    %1677 = vmatpush1.msra.mxu0 %v1670
    %1678 = vmatprep.subr.mxu0 0.0
    %1679 = vmatpush1.msra.mxu0 %v1669
    %1680 = vmatprep.subr.mxu0 0.0
    %1681 = vmatpush1.msra.mxu0 %v1668
    %1682 = vmatprep.subr.mxu0 0.0
    %1683 = vmatpush1.msra.mxu0 %v1667
    %1684 = vmatprep.subr.mxu0 0.0
    %1685 = vmatpush1.msra.mxu0 %v1666
    %1686 = vmatprep.subr.mxu0 0.0
    %1687 = vmatpush1.msra.mxu0 %v1665
    %1688 = vmatprep.subr.mxu0 0.0
    %1689 = vmatpush1.msra.mxu0 %v1664
    %1690 = vmatprep.subr.mxu0 0.0
    %1691 = vmatpush1.msra.mxu0 %v1663
    %1692 = vmatprep.subr.mxu0 0.0
    %1693 = vmatpush1.msra.mxu0 %v1662
    %1694 = vmatprep.subr.mxu0 0.0
    %1695 = vmatpush1.msra.mxu0 %v1661
    %1696 = vmatprep.subr.mxu0 0.0
    %1697 = vmatpush1.msra.mxu0 %v1660
    %1698 = vmatprep.subr.mxu0 0.0
    %1699 = vmatpush1.msra.mxu0 %v1659
    %1700 = vmatprep.subr.mxu0 0.0
    %1701 = vmatpush1.msra.mxu0 %v1658
    %1702 = vmatprep.subr.mxu0 0.0
    %1703 = vmatpush1.msra.mxu0 %v1657
    %1704 = vmatprep.subr.mxu0 0.0
    %1705 = vmatpush1.msra.mxu0 %v1656
    %1706 = vmatprep.subr.mxu0 0.0
    %1707 = vmatpush1.msra.mxu0 %v1655
    %1708 = vmatprep.subr.mxu0 0.0
    %1709 = vmatpush2.msra.mxu0 0.0
    %1710 = vmatprep.subr.mxu0 0.0
    %1711 = vmatpush2.msra.mxu0 0.0
    %1712 = vmatprep.subr.mxu0 0.0
    %1713 = vmatpush2.msra.mxu0 0.0
    %1714 = vmatprep.subr.mxu0 0.0
    %1715 = vmatpush2.msra.mxu0 0.0
    %1716 = vmatprep.subr.mxu0 0.0
    %1717 = vmatpush2.msra.mxu0 0.0
    %1718 = vmatprep.subr.mxu0 0.0
    %1719 = vmatpush2.msra.mxu0 0.0
    %1720 = vmatprep.subr.mxu0 0.0
    %1721 = vmatpush2.msra.mxu0 0.0
    %1722 = vmatprep.subr.mxu0 0.0
    %1723 = vmatpush2.msra.mxu0 0.0
    %1724 = vmatprep.subr.mxu0 0.0
    %1725 = vmatpush2.msra.mxu0 0.0
    %1726 = vmatprep.subr.mxu0 0.0
    %1727 = vmatpush2.msra.mxu0 0.0
    %1728 = vmatprep.subr.mxu0 0.0
    %1729 = vmatpush2.msra.mxu0 0.0
    %1730 = vmatprep.subr.mxu0 0.0
    %1731 = vmatpush2.msra.mxu0 0.0
    %1732 = vmatprep.subr.mxu0 0.0
    %1733 = vmatpush2.msra.mxu0 0.0
    %1734 = vmatprep.subr.mxu0 0.0
    %1735 = vmatpush2.msra.mxu0 0.0
    %1736 = vmatprep.subr.mxu0 0.0
    %1737 = vmatpush2.msra.mxu0 0.0
    %1738 = vmatprep.subr.mxu0 0.0
    %1739 = vmatpush2.msra.mxu0 0.0
    %1740 = vmatprep.mubr.f32.mxu0 0.0
    %1741 = vmatmul.mubr.f32.gmra.mxu0 %v1653
    %v1742 = vpop.f32.mrf.mxu0
    %v1743 = vadd.f32 %v1675, %v1742
    %v1744 = vpop.f32.mrf.mxu0
    %1745 = vdwg.mxu0
    %v1746 = vld [vmem:[%s6 + $0x12] sm:$0x1]
    %v1747 = vld [vmem:[%s6 + $0x13] sm:$0x1]
    %v1748 = vsel %vm225, %v431, 0.0
    %1749 = vadd.xlane.f32.xlu0 %v1748
    %v1750 = vpop.xlane.xlu0 %1749
    %v1751 = vmul.f32 %v1750, %v229
    %v1752 = vsub.f32 %v431, %v1751
    %v1753 = vmul.f32 %v1752, %v1752
    %v1754 = vsel %vm225, %v1753, 0.0
    %1755 = vadd.xlane.f32.xlu0 %v1754
    %v1756 = vpop.xlane.xlu0 %1755
    %v1757 = vmul.f32 %v1756, %v229
    %v1758 = vadd.f32 %v1757, 1e-05
    %v1759 = vrsqrt.pop %v1758
    %v1760 = vmul.f32 %v1752, %v1759
    %v1761 = vlaneseq
    %v1762 = vshrl.u32 %v1761, 7
    %v1763 = vsub.s32 0, %v1762
    %v1764 = vrot.slane %v1746, %v1763
    %v1765 = vmul.f32 %v1760, %v1764
    %v1766 = vlaneseq
    %v1767 = vshrl.u32 %v1766, 7
    %v1768 = vsub.s32 0, %v1767
    %v1769 = vrot.slane %v1747, %v1768
    %v1770 = vadd.f32 %v1765, %v1769
    %v1771 = vmax.f32 %v1770, 0.0
    %s1772 = scalar_lea.vmem %s10, 384
    %v1773 = vld [vmem:[%s1772] sm:$0xff]
    %v1774 = vld [vmem:[%s1772 + $0x8] sm:$0xff]
    %v1775 = vld [vmem:[%s1772 + $0x10] sm:$0xff]
    %v1776 = vld [vmem:[%s1772 + $0x18] sm:$0xff]
    %v1777 = vld [vmem:[%s1772 + $0x20] sm:$0xff]
    %v1778 = vld [vmem:[%s1772 + $0x28] sm:$0xff]
    %v1779 = vld [vmem:[%s1772 + $0x30] sm:$0xff]
    %v1780 = vld [vmem:[%s1772 + $0x38] sm:$0xff]
    %v1781 = vld [vmem:[%s1772 + $0x40] sm:$0xff]
    %v1782 = vld [vmem:[%s1772 + $0x48] sm:$0xff]
    %v1783 = vld [vmem:[%s1772 + $0x50] sm:$0xff]
    %v1784 = vld [vmem:[%s1772 + $0x58] sm:$0xff]
    %v1785 = vld [vmem:[%s1772 + $0x60] sm:$0xff]
    %v1786 = vld [vmem:[%s1772 + $0x68] sm:$0xff]
    %v1787 = vld [vmem:[%s1772 + $0x70] sm:$0xff]
    %v1788 = vld [vmem:[%s1772 + $0x78] sm:$0xff]
    %v1789 = vld [vmem:[%s7 + $0x3] sm:$0x1]
    %v1790 = vlaneseq
    %v1791 = vshrl.u32 %v1790, 7
    %v1792 = vsub.s32 0, %v1791
    %v1793 = vrot.slane %v1789, %v1792
    %1794 = vmatprep.subr.mxu0 0.0
    %1795 = vmatpush1.msra.mxu0 %v1788
    %1796 = vmatprep.subr.mxu0 0.0
    %1797 = vmatpush1.msra.mxu0 %v1787
    %1798 = vmatprep.subr.mxu0 0.0
    %1799 = vmatpush1.msra.mxu0 %v1786
    %1800 = vmatprep.subr.mxu0 0.0
    %1801 = vmatpush1.msra.mxu0 %v1785
    %1802 = vmatprep.subr.mxu0 0.0
    %1803 = vmatpush1.msra.mxu0 %v1784
    %1804 = vmatprep.subr.mxu0 0.0
    %1805 = vmatpush1.msra.mxu0 %v1783
    %1806 = vmatprep.subr.mxu0 0.0
    %1807 = vmatpush1.msra.mxu0 %v1782
    %1808 = vmatprep.subr.mxu0 0.0
    %1809 = vmatpush1.msra.mxu0 %v1781
    %1810 = vmatprep.subr.mxu0 0.0
    %1811 = vmatpush1.msra.mxu0 %v1780
    %1812 = vmatprep.subr.mxu0 0.0
    %1813 = vmatpush1.msra.mxu0 %v1779
    %1814 = vmatprep.subr.mxu0 0.0
    %1815 = vmatpush1.msra.mxu0 %v1778
    %1816 = vmatprep.subr.mxu0 0.0
    %1817 = vmatpush1.msra.mxu0 %v1777
    %1818 = vmatprep.subr.mxu0 0.0
    %1819 = vmatpush1.msra.mxu0 %v1776
    %1820 = vmatprep.subr.mxu0 0.0
    %1821 = vmatpush1.msra.mxu0 %v1775
    %1822 = vmatprep.subr.mxu0 0.0
    %1823 = vmatpush1.msra.mxu0 %v1774
    %1824 = vmatprep.subr.mxu0 0.0
    %1825 = vmatpush1.msra.mxu0 %v1773
    %1826 = vmatprep.subr.mxu0 0.0
    %1827 = vmatpush2.msra.mxu0 0.0
    %1828 = vmatprep.subr.mxu0 0.0
    %1829 = vmatpush2.msra.mxu0 0.0
    %1830 = vmatprep.subr.mxu0 0.0
    %1831 = vmatpush2.msra.mxu0 0.0
    %1832 = vmatprep.subr.mxu0 0.0
    %1833 = vmatpush2.msra.mxu0 0.0
    %1834 = vmatprep.subr.mxu0 0.0
    %1835 = vmatpush2.msra.mxu0 0.0
    %1836 = vmatprep.subr.mxu0 0.0
    %1837 = vmatpush2.msra.mxu0 0.0
    %1838 = vmatprep.subr.mxu0 0.0
    %1839 = vmatpush2.msra.mxu0 0.0
    %1840 = vmatprep.subr.mxu0 0.0
    %1841 = vmatpush2.msra.mxu0 0.0
    %1842 = vmatprep.subr.mxu0 0.0
    %1843 = vmatpush2.msra.mxu0 0.0
    %1844 = vmatprep.subr.mxu0 0.0
    %1845 = vmatpush2.msra.mxu0 0.0
    %1846 = vmatprep.subr.mxu0 0.0
    %1847 = vmatpush2.msra.mxu0 0.0
    %1848 = vmatprep.subr.mxu0 0.0
    %1849 = vmatpush2.msra.mxu0 0.0
    %1850 = vmatprep.subr.mxu0 0.0
    %1851 = vmatpush2.msra.mxu0 0.0
    %1852 = vmatprep.subr.mxu0 0.0
    %1853 = vmatpush2.msra.mxu0 0.0
    %1854 = vmatprep.subr.mxu0 0.0
    %1855 = vmatpush2.msra.mxu0 0.0
    %1856 = vmatprep.subr.mxu0 0.0
    %1857 = vmatpush2.msra.mxu0 0.0
    %1858 = vmatprep.mubr.f32.mxu0 0.0
    %1859 = vmatmul.mubr.f32.gmra.mxu0 %v1771
    %v1860 = vpop.f32.mrf.mxu0
    %v1861 = vadd.f32 %v1793, %v1860
    %v1862 = vpop.f32.mrf.mxu0
    %1863 = vdwg.mxu0
    %s1864 = scalar_lea.vmem [#allocation2], 1152
    %v1865 = vld [vmem:[%s1864] sm:$0xff]
    %v1866 = vld [vmem:[%s1864 + $0x8] sm:$0xff]
    %v1867 = vld [vmem:[%s1864 + $0x10] sm:$0xff]
    %v1868 = vld [vmem:[%s1864 + $0x18] sm:$0xff]
    %v1869 = vld [vmem:[%s1864 + $0x20] sm:$0xff]
    %v1870 = vld [vmem:[%s1864 + $0x28] sm:$0xff]
    %v1871 = vld [vmem:[%s1864 + $0x30] sm:$0xff]
    %v1872 = vld [vmem:[%s1864 + $0x38] sm:$0xff]
    %v1873 = vld [vmem:[%s1864 + $0x40] sm:$0xff]
    %v1874 = vld [vmem:[%s1864 + $0x48] sm:$0xff]
    %v1875 = vld [vmem:[%s1864 + $0x50] sm:$0xff]
    %v1876 = vld [vmem:[%s1864 + $0x58] sm:$0xff]
    %v1877 = vld [vmem:[%s1864 + $0x60] sm:$0xff]
    %v1878 = vld [vmem:[%s1864 + $0x68] sm:$0xff]
    %v1879 = vld [vmem:[%s1864 + $0x70] sm:$0xff]
    %v1880 = vld [vmem:[%s1864 + $0x78] sm:$0xff]
    %v1881 = vld [vmem:[%s6 + $0x14] sm:$0x1]
    %v1882 = vlaneseq
    %v1883 = vshrl.u32 %v1882, 7
    %v1884 = vsub.s32 0, %v1883
    %v1885 = vrot.slane %v1881, %v1884
    %1886 = vmatprep.subr.mxu0 0.0
    %1887 = vmatpush1.msra.mxu0 %v1880
    %1888 = vmatprep.subr.mxu0 0.0
    %1889 = vmatpush1.msra.mxu0 %v1879
    %1890 = vmatprep.subr.mxu0 0.0
    %1891 = vmatpush1.msra.mxu0 %v1878
    %1892 = vmatprep.subr.mxu0 0.0
    %1893 = vmatpush1.msra.mxu0 %v1877
    %1894 = vmatprep.subr.mxu0 0.0
    %1895 = vmatpush1.msra.mxu0 %v1876
    %1896 = vmatprep.subr.mxu0 0.0
    %1897 = vmatpush1.msra.mxu0 %v1875
    %1898 = vmatprep.subr.mxu0 0.0
    %1899 = vmatpush1.msra.mxu0 %v1874
    %1900 = vmatprep.subr.mxu0 0.0
    %1901 = vmatpush1.msra.mxu0 %v1873
    %1902 = vmatprep.subr.mxu0 0.0
    %1903 = vmatpush1.msra.mxu0 %v1872
    %1904 = vmatprep.subr.mxu0 0.0
    %1905 = vmatpush1.msra.mxu0 %v1871
    %1906 = vmatprep.subr.mxu0 0.0
    %1907 = vmatpush1.msra.mxu0 %v1870
    %1908 = vmatprep.subr.mxu0 0.0
    %1909 = vmatpush1.msra.mxu0 %v1869
    %1910 = vmatprep.subr.mxu0 0.0
    %1911 = vmatpush1.msra.mxu0 %v1868
    %1912 = vmatprep.subr.mxu0 0.0
    %1913 = vmatpush1.msra.mxu0 %v1867
    %1914 = vmatprep.subr.mxu0 0.0
    %1915 = vmatpush1.msra.mxu0 %v1866
    %1916 = vmatprep.subr.mxu0 0.0
    %1917 = vmatpush1.msra.mxu0 %v1865
    %1918 = vmatprep.subr.mxu0 0.0
    %1919 = vmatpush2.msra.mxu0 0.0
    %1920 = vmatprep.subr.mxu0 0.0
    %1921 = vmatpush2.msra.mxu0 0.0
    %1922 = vmatprep.subr.mxu0 0.0
    %1923 = vmatpush2.msra.mxu0 0.0
    %1924 = vmatprep.subr.mxu0 0.0
    %1925 = vmatpush2.msra.mxu0 0.0
    %1926 = vmatprep.subr.mxu0 0.0
    %1927 = vmatpush2.msra.mxu0 0.0
    %1928 = vmatprep.subr.mxu0 0.0
    %1929 = vmatpush2.msra.mxu0 0.0
    %1930 = vmatprep.subr.mxu0 0.0
    %1931 = vmatpush2.msra.mxu0 0.0
    %1932 = vmatprep.subr.mxu0 0.0
    %1933 = vmatpush2.msra.mxu0 0.0
    %1934 = vmatprep.subr.mxu0 0.0
    %1935 = vmatpush2.msra.mxu0 0.0
    %1936 = vmatprep.subr.mxu0 0.0
    %1937 = vmatpush2.msra.mxu0 0.0
    %1938 = vmatprep.subr.mxu0 0.0
    %1939 = vmatpush2.msra.mxu0 0.0
    %1940 = vmatprep.subr.mxu0 0.0
    %1941 = vmatpush2.msra.mxu0 0.0
    %1942 = vmatprep.subr.mxu0 0.0
    %1943 = vmatpush2.msra.mxu0 0.0
    %1944 = vmatprep.subr.mxu0 0.0
    %1945 = vmatpush2.msra.mxu0 0.0
    %1946 = vmatprep.subr.mxu0 0.0
    %1947 = vmatpush2.msra.mxu0 0.0
    %1948 = vmatprep.subr.mxu0 0.0
    %1949 = vmatpush2.msra.mxu0 0.0
    %1950 = vmatprep.mubr.f32.mxu0 0.0
    %1951 = vmatmul.mubr.f32.gmra.mxu0 %v1033
    %v1952 = vpop.f32.mrf.mxu0
    %v1953 = vadd.f32 %v1885, %v1952
    %v1954 = vpop.f32.mrf.mxu0
    %1955 = vdwg.mxu0
    %v1956 = vmax.f32 %v1953, 0.0
    %v1957 = vld [vmem:[%s11] sm:$0xff]
    %v1958 = vld [vmem:[%s11 + $0x8] sm:$0xff]
    %v1959 = vld [vmem:[%s11 + $0x10] sm:$0xff]
    %v1960 = vld [vmem:[%s11 + $0x18] sm:$0xff]
    %v1961 = vld [vmem:[%s11 + $0x20] sm:$0xff]
    %v1962 = vld [vmem:[%s11 + $0x28] sm:$0xff]
    %v1963 = vld [vmem:[%s11 + $0x30] sm:$0xff]
    %v1964 = vld [vmem:[%s11 + $0x38] sm:$0xff]
    %v1965 = vld [vmem:[%s11 + $0x40] sm:$0xff]
    %v1966 = vld [vmem:[%s11 + $0x48] sm:$0xff]
    %v1967 = vld [vmem:[%s11 + $0x50] sm:$0xff]
    %v1968 = vld [vmem:[%s11 + $0x58] sm:$0xff]
    %v1969 = vld [vmem:[%s11 + $0x60] sm:$0xff]
    %v1970 = vld [vmem:[%s11 + $0x68] sm:$0xff]
    %v1971 = vld [vmem:[%s11 + $0x70] sm:$0xff]
    %v1972 = vld [vmem:[%s11 + $0x78] sm:$0xff]
    %v1973 = vld [vmem:[%s8] sm:$0x1]
    %v1974 = vlaneseq
    %v1975 = vshrl.u32 %v1974, 7
    %v1976 = vsub.s32 0, %v1975
    %v1977 = vrot.slane %v1973, %v1976
    %1978 = vmatprep.subr.mxu0 0.0
    %1979 = vmatpush1.msra.mxu0 %v1972
    %1980 = vmatprep.subr.mxu0 0.0
    %1981 = vmatpush1.msra.mxu0 %v1971
    %1982 = vmatprep.subr.mxu0 0.0
    %1983 = vmatpush1.msra.mxu0 %v1970
    %1984 = vmatprep.subr.mxu0 0.0
    %1985 = vmatpush1.msra.mxu0 %v1969
    %1986 = vmatprep.subr.mxu0 0.0
    %1987 = vmatpush1.msra.mxu0 %v1968
    %1988 = vmatprep.subr.mxu0 0.0
    %1989 = vmatpush1.msra.mxu0 %v1967
    %1990 = vmatprep.subr.mxu0 0.0
    %1991 = vmatpush1.msra.mxu0 %v1966
    %1992 = vmatprep.subr.mxu0 0.0
    %1993 = vmatpush1.msra.mxu0 %v1965
    %1994 = vmatprep.subr.mxu0 0.0
    %1995 = vmatpush1.msra.mxu0 %v1964
    %1996 = vmatprep.subr.mxu0 0.0
    %1997 = vmatpush1.msra.mxu0 %v1963
    %1998 = vmatprep.subr.mxu0 0.0
    %1999 = vmatpush1.msra.mxu0 %v1962
    %2000 = vmatprep.subr.mxu0 0.0
    %2001 = vmatpush1.msra.mxu0 %v1961
    %2002 = vmatprep.subr.mxu0 0.0
    %2003 = vmatpush1.msra.mxu0 %v1960
    %2004 = vmatprep.subr.mxu0 0.0
    %2005 = vmatpush1.msra.mxu0 %v1959
    %2006 = vmatprep.subr.mxu0 0.0
    %2007 = vmatpush1.msra.mxu0 %v1958
    %2008 = vmatprep.subr.mxu0 0.0
    %2009 = vmatpush1.msra.mxu0 %v1957
    %2010 = vmatprep.subr.mxu0 0.0
    %2011 = vmatpush2.msra.mxu0 0.0
    %2012 = vmatprep.subr.mxu0 0.0
    %2013 = vmatpush2.msra.mxu0 0.0
    %2014 = vmatprep.subr.mxu0 0.0
    %2015 = vmatpush2.msra.mxu0 0.0
    %2016 = vmatprep.subr.mxu0 0.0
    %2017 = vmatpush2.msra.mxu0 0.0
    %2018 = vmatprep.subr.mxu0 0.0
    %2019 = vmatpush2.msra.mxu0 0.0
    %2020 = vmatprep.subr.mxu0 0.0
    %2021 = vmatpush2.msra.mxu0 0.0
    %2022 = vmatprep.subr.mxu0 0.0
    %2023 = vmatpush2.msra.mxu0 0.0
    %2024 = vmatprep.subr.mxu0 0.0
    %2025 = vmatpush2.msra.mxu0 0.0
    %2026 = vmatprep.subr.mxu0 0.0
    %2027 = vmatpush2.msra.mxu0 0.0
    %2028 = vmatprep.subr.mxu0 0.0
    %2029 = vmatpush2.msra.mxu0 0.0
    %2030 = vmatprep.subr.mxu0 0.0
    %2031 = vmatpush2.msra.mxu0 0.0
    %2032 = vmatprep.subr.mxu0 0.0
    %2033 = vmatpush2.msra.mxu0 0.0
    %2034 = vmatprep.subr.mxu0 0.0
    %2035 = vmatpush2.msra.mxu0 0.0
    %2036 = vmatprep.subr.mxu0 0.0
    %2037 = vmatpush2.msra.mxu0 0.0
    %2038 = vmatprep.subr.mxu0 0.0
    %2039 = vmatpush2.msra.mxu0 0.0
    %2040 = vmatprep.subr.mxu0 0.0
    %2041 = vmatpush2.msra.mxu0 0.0
    %2042 = vmatprep.mubr.f32.mxu0 0.0
    %2043 = vmatmul.mubr.f32.gmra.mxu0 %v1956
    %v2044 = vpop.f32.mrf.mxu0
    %v2045 = vadd.f32 %v1977, %v2044
    %v2046 = vpop.f32.mrf.mxu0
    %2047 = vdwg.mxu0
    %s2048 = scalar_lea.vmem [#allocation2], 1280
    %v2049 = vld [vmem:[%s2048] sm:$0xff]
    %v2050 = vld [vmem:[%s2048 + $0x8] sm:$0xff]
    %v2051 = vld [vmem:[%s2048 + $0x10] sm:$0xff]
    %v2052 = vld [vmem:[%s2048 + $0x18] sm:$0xff]
    %v2053 = vld [vmem:[%s2048 + $0x20] sm:$0xff]
    %v2054 = vld [vmem:[%s2048 + $0x28] sm:$0xff]
    %v2055 = vld [vmem:[%s2048 + $0x30] sm:$0xff]
    %v2056 = vld [vmem:[%s2048 + $0x38] sm:$0xff]
    %v2057 = vld [vmem:[%s2048 + $0x40] sm:$0xff]
    %v2058 = vld [vmem:[%s2048 + $0x48] sm:$0xff]
    %v2059 = vld [vmem:[%s2048 + $0x50] sm:$0xff]
    %v2060 = vld [vmem:[%s2048 + $0x58] sm:$0xff]
    %v2061 = vld [vmem:[%s2048 + $0x60] sm:$0xff]
    %v2062 = vld [vmem:[%s2048 + $0x68] sm:$0xff]
    %v2063 = vld [vmem:[%s2048 + $0x70] sm:$0xff]
    %v2064 = vld [vmem:[%s2048 + $0x78] sm:$0xff]
    %v2065 = vld [vmem:[%s6 + $0x15] sm:$0x1]
    %v2066 = vlaneseq
    %v2067 = vshrl.u32 %v2066, 7
    %v2068 = vsub.s32 0, %v2067
    %v2069 = vrot.slane %v2065, %v2068
    %2070 = vmatprep.subr.mxu0 0.0
    %2071 = vmatpush1.msra.mxu0 %v2064
    %2072 = vmatprep.subr.mxu0 0.0
    %2073 = vmatpush1.msra.mxu0 %v2063
    %2074 = vmatprep.subr.mxu0 0.0
    %2075 = vmatpush1.msra.mxu0 %v2062
    %2076 = vmatprep.subr.mxu0 0.0
    %2077 = vmatpush1.msra.mxu0 %v2061
    %2078 = vmatprep.subr.mxu0 0.0
    %2079 = vmatpush1.msra.mxu0 %v2060
    %2080 = vmatprep.subr.mxu0 0.0
    %2081 = vmatpush1.msra.mxu0 %v2059
    %2082 = vmatprep.subr.mxu0 0.0
    %2083 = vmatpush1.msra.mxu0 %v2058
    %2084 = vmatprep.subr.mxu0 0.0
    %2085 = vmatpush1.msra.mxu0 %v2057
    %2086 = vmatprep.subr.mxu0 0.0
    %2087 = vmatpush1.msra.mxu0 %v2056
    %2088 = vmatprep.subr.mxu0 0.0
    %2089 = vmatpush1.msra.mxu0 %v2055
    %2090 = vmatprep.subr.mxu0 0.0
    %2091 = vmatpush1.msra.mxu0 %v2054
    %2092 = vmatprep.subr.mxu0 0.0
    %2093 = vmatpush1.msra.mxu0 %v2053
    %2094 = vmatprep.subr.mxu0 0.0
    %2095 = vmatpush1.msra.mxu0 %v2052
    %2096 = vmatprep.subr.mxu0 0.0
    %2097 = vmatpush1.msra.mxu0 %v2051
    %2098 = vmatprep.subr.mxu0 0.0
    %2099 = vmatpush1.msra.mxu0 %v2050
    %2100 = vmatprep.subr.mxu0 0.0
    %2101 = vmatpush1.msra.mxu0 %v2049
    %2102 = vmatprep.subr.mxu0 0.0
    %2103 = vmatpush2.msra.mxu0 0.0
    %2104 = vmatprep.subr.mxu0 0.0
    %2105 = vmatpush2.msra.mxu0 0.0
    %2106 = vmatprep.subr.mxu0 0.0
    %2107 = vmatpush2.msra.mxu0 0.0
    %2108 = vmatprep.subr.mxu0 0.0
    %2109 = vmatpush2.msra.mxu0 0.0
    %2110 = vmatprep.subr.mxu0 0.0
    %2111 = vmatpush2.msra.mxu0 0.0
    %2112 = vmatprep.subr.mxu0 0.0
    %2113 = vmatpush2.msra.mxu0 0.0
    %2114 = vmatprep.subr.mxu0 0.0
    %2115 = vmatpush2.msra.mxu0 0.0
    %2116 = vmatprep.subr.mxu0 0.0
    %2117 = vmatpush2.msra.mxu0 0.0
    %2118 = vmatprep.subr.mxu0 0.0
    %2119 = vmatpush2.msra.mxu0 0.0
    %2120 = vmatprep.subr.mxu0 0.0
    %2121 = vmatpush2.msra.mxu0 0.0
    %2122 = vmatprep.subr.mxu0 0.0
    %2123 = vmatpush2.msra.mxu0 0.0
    %2124 = vmatprep.subr.mxu0 0.0
    %2125 = vmatpush2.msra.mxu0 0.0
    %2126 = vmatprep.subr.mxu0 0.0
    %2127 = vmatpush2.msra.mxu0 0.0
    %2128 = vmatprep.subr.mxu0 0.0
    %2129 = vmatpush2.msra.mxu0 0.0
    %2130 = vmatprep.subr.mxu0 0.0
    %2131 = vmatpush2.msra.mxu0 0.0
    %2132 = vmatprep.subr.mxu0 0.0
    %2133 = vmatpush2.msra.mxu0 0.0
    %2134 = vmatprep.mubr.f32.mxu0 0.0
    %2135 = vmatmul.mubr.f32.gmra.mxu0 %v1153
    %v2136 = vpop.f32.mrf.mxu0
    %v2137 = vadd.f32 %v2069, %v2136
    %v2138 = vpop.f32.mrf.mxu0
    %2139 = vdwg.mxu0
    %v2140 = vmax.f32 %v2137, 0.0
    %s2141 = scalar_lea.vmem %s11, 128
    %v2142 = vld [vmem:[%s2141] sm:$0xff]
    %v2143 = vld [vmem:[%s2141 + $0x8] sm:$0xff]
    %v2144 = vld [vmem:[%s2141 + $0x10] sm:$0xff]
    %v2145 = vld [vmem:[%s2141 + $0x18] sm:$0xff]
    %v2146 = vld [vmem:[%s2141 + $0x20] sm:$0xff]
    %v2147 = vld [vmem:[%s2141 + $0x28] sm:$0xff]
    %v2148 = vld [vmem:[%s2141 + $0x30] sm:$0xff]
    %v2149 = vld [vmem:[%s2141 + $0x38] sm:$0xff]
    %v2150 = vld [vmem:[%s2141 + $0x40] sm:$0xff]
    %v2151 = vld [vmem:[%s2141 + $0x48] sm:$0xff]
    %v2152 = vld [vmem:[%s2141 + $0x50] sm:$0xff]
    %v2153 = vld [vmem:[%s2141 + $0x58] sm:$0xff]
    %v2154 = vld [vmem:[%s2141 + $0x60] sm:$0xff]
    %v2155 = vld [vmem:[%s2141 + $0x68] sm:$0xff]
    %v2156 = vld [vmem:[%s2141 + $0x70] sm:$0xff]
    %v2157 = vld [vmem:[%s2141 + $0x78] sm:$0xff]
    %v2158 = vld [vmem:[%s8 + $0x1] sm:$0x1]
    %v2159 = vlaneseq
    %v2160 = vshrl.u32 %v2159, 7
    %v2161 = vsub.s32 0, %v2160
    %v2162 = vrot.slane %v2158, %v2161
    %2163 = vmatprep.subr.mxu0 0.0
    %2164 = vmatpush1.msra.mxu0 %v2157
    %2165 = vmatprep.subr.mxu0 0.0
    %2166 = vmatpush1.msra.mxu0 %v2156
    %2167 = vmatprep.subr.mxu0 0.0
    %2168 = vmatpush1.msra.mxu0 %v2155
    %2169 = vmatprep.subr.mxu0 0.0
    %2170 = vmatpush1.msra.mxu0 %v2154
    %2171 = vmatprep.subr.mxu0 0.0
    %2172 = vmatpush1.msra.mxu0 %v2153
    %2173 = vmatprep.subr.mxu0 0.0
    %2174 = vmatpush1.msra.mxu0 %v2152
    %2175 = vmatprep.subr.mxu0 0.0
    %2176 = vmatpush1.msra.mxu0 %v2151
    %2177 = vmatprep.subr.mxu0 0.0
    %2178 = vmatpush1.msra.mxu0 %v2150
    %2179 = vmatprep.subr.mxu0 0.0
    %2180 = vmatpush1.msra.mxu0 %v2149
    %2181 = vmatprep.subr.mxu0 0.0
    %2182 = vmatpush1.msra.mxu0 %v2148
    %2183 = vmatprep.subr.mxu0 0.0
    %2184 = vmatpush1.msra.mxu0 %v2147
    %2185 = vmatprep.subr.mxu0 0.0
    %2186 = vmatpush1.msra.mxu0 %v2146
    %2187 = vmatprep.subr.mxu0 0.0
    %2188 = vmatpush1.msra.mxu0 %v2145
    %2189 = vmatprep.subr.mxu0 0.0
    %2190 = vmatpush1.msra.mxu0 %v2144
    %2191 = vmatprep.subr.mxu0 0.0
    %2192 = vmatpush1.msra.mxu0 %v2143
    %2193 = vmatprep.subr.mxu0 0.0
    %2194 = vmatpush1.msra.mxu0 %v2142
    %2195 = vmatprep.subr.mxu0 0.0
    %2196 = vmatpush2.msra.mxu0 0.0
    %2197 = vmatprep.subr.mxu0 0.0
    %2198 = vmatpush2.msra.mxu0 0.0
    %2199 = vmatprep.subr.mxu0 0.0
    %2200 = vmatpush2.msra.mxu0 0.0
    %2201 = vmatprep.subr.mxu0 0.0
    %2202 = vmatpush2.msra.mxu0 0.0
    %2203 = vmatprep.subr.mxu0 0.0
    %2204 = vmatpush2.msra.mxu0 0.0
    %2205 = vmatprep.subr.mxu0 0.0
    %2206 = vmatpush2.msra.mxu0 0.0
    %2207 = vmatprep.subr.mxu0 0.0
    %2208 = vmatpush2.msra.mxu0 0.0
    %2209 = vmatprep.subr.mxu0 0.0
    %2210 = vmatpush2.msra.mxu0 0.0
    %2211 = vmatprep.subr.mxu0 0.0
    %2212 = vmatpush2.msra.mxu0 0.0
    %2213 = vmatprep.subr.mxu0 0.0
    %2214 = vmatpush2.msra.mxu0 0.0
    %2215 = vmatprep.subr.mxu0 0.0
    %2216 = vmatpush2.msra.mxu0 0.0
    %2217 = vmatprep.subr.mxu0 0.0
    %2218 = vmatpush2.msra.mxu0 0.0
    %2219 = vmatprep.subr.mxu0 0.0
    %2220 = vmatpush2.msra.mxu0 0.0
    %2221 = vmatprep.subr.mxu0 0.0
    %2222 = vmatpush2.msra.mxu0 0.0
    %2223 = vmatprep.subr.mxu0 0.0
    %2224 = vmatpush2.msra.mxu0 0.0
    %2225 = vmatprep.subr.mxu0 0.0
    %2226 = vmatpush2.msra.mxu0 0.0
    %2227 = vmatprep.mubr.f32.mxu0 0.0
    %2228 = vmatmul.mubr.f32.gmra.mxu0 %v2140
    %v2229 = vpop.f32.mrf.mxu0
    %v2230 = vadd.f32 %v2162, %v2229
    %v2231 = vpop.f32.mrf.mxu0
    %2232 = vdwg.mxu0
    %s2233 = scalar_lea.vmem [#allocation2], 1408
    %v2234 = vld [vmem:[%s2233] sm:$0xff]
    %v2235 = vld [vmem:[%s2233 + $0x8] sm:$0xff]
    %v2236 = vld [vmem:[%s2233 + $0x10] sm:$0xff]
    %v2237 = vld [vmem:[%s2233 + $0x18] sm:$0xff]
    %v2238 = vld [vmem:[%s2233 + $0x20] sm:$0xff]
    %v2239 = vld [vmem:[%s2233 + $0x28] sm:$0xff]
    %v2240 = vld [vmem:[%s2233 + $0x30] sm:$0xff]
    %v2241 = vld [vmem:[%s2233 + $0x38] sm:$0xff]
    %v2242 = vld [vmem:[%s2233 + $0x40] sm:$0xff]
    %v2243 = vld [vmem:[%s2233 + $0x48] sm:$0xff]
    %v2244 = vld [vmem:[%s2233 + $0x50] sm:$0xff]
    %v2245 = vld [vmem:[%s2233 + $0x58] sm:$0xff]
    %v2246 = vld [vmem:[%s2233 + $0x60] sm:$0xff]
    %v2247 = vld [vmem:[%s2233 + $0x68] sm:$0xff]
    %v2248 = vld [vmem:[%s2233 + $0x70] sm:$0xff]
    %v2249 = vld [vmem:[%s2233 + $0x78] sm:$0xff]
    %v2250 = vld [vmem:[%s6 + $0x16] sm:$0x1]
    %v2251 = vlaneseq
    %v2252 = vshrl.u32 %v2251, 7
    %v2253 = vsub.s32 0, %v2252
    %v2254 = vrot.slane %v2250, %v2253
    %2255 = vmatprep.subr.mxu0 0.0
    %2256 = vmatpush1.msra.mxu0 %v2249
    %2257 = vmatprep.subr.mxu0 0.0
    %2258 = vmatpush1.msra.mxu0 %v2248
    %2259 = vmatprep.subr.mxu0 0.0
    %2260 = vmatpush1.msra.mxu0 %v2247
    %2261 = vmatprep.subr.mxu0 0.0
    %2262 = vmatpush1.msra.mxu0 %v2246
    %2263 = vmatprep.subr.mxu0 0.0
    %2264 = vmatpush1.msra.mxu0 %v2245
    %2265 = vmatprep.subr.mxu0 0.0
    %2266 = vmatpush1.msra.mxu0 %v2244
    %2267 = vmatprep.subr.mxu0 0.0
    %2268 = vmatpush1.msra.mxu0 %v2243
    %2269 = vmatprep.subr.mxu0 0.0
    %2270 = vmatpush1.msra.mxu0 %v2242
    %2271 = vmatprep.subr.mxu0 0.0
    %2272 = vmatpush1.msra.mxu0 %v2241
    %2273 = vmatprep.subr.mxu0 0.0
    %2274 = vmatpush1.msra.mxu0 %v2240
    %2275 = vmatprep.subr.mxu0 0.0
    %2276 = vmatpush1.msra.mxu0 %v2239
    %2277 = vmatprep.subr.mxu0 0.0
    %2278 = vmatpush1.msra.mxu0 %v2238
    %2279 = vmatprep.subr.mxu0 0.0
    %2280 = vmatpush1.msra.mxu0 %v2237
    %2281 = vmatprep.subr.mxu0 0.0
    %2282 = vmatpush1.msra.mxu0 %v2236
    %2283 = vmatprep.subr.mxu0 0.0
    %2284 = vmatpush1.msra.mxu0 %v2235
    %2285 = vmatprep.subr.mxu0 0.0
    %2286 = vmatpush1.msra.mxu0 %v2234
    %2287 = vmatprep.subr.mxu0 0.0
    %2288 = vmatpush2.msra.mxu0 0.0
    %2289 = vmatprep.subr.mxu0 0.0
    %2290 = vmatpush2.msra.mxu0 0.0
    %2291 = vmatprep.subr.mxu0 0.0
    %2292 = vmatpush2.msra.mxu0 0.0
    %2293 = vmatprep.subr.mxu0 0.0
    %2294 = vmatpush2.msra.mxu0 0.0
    %2295 = vmatprep.subr.mxu0 0.0
    %2296 = vmatpush2.msra.mxu0 0.0
    %2297 = vmatprep.subr.mxu0 0.0
    %2298 = vmatpush2.msra.mxu0 0.0
    %2299 = vmatprep.subr.mxu0 0.0
    %2300 = vmatpush2.msra.mxu0 0.0
    %2301 = vmatprep.subr.mxu0 0.0
    %2302 = vmatpush2.msra.mxu0 0.0
    %2303 = vmatprep.subr.mxu0 0.0
    %2304 = vmatpush2.msra.mxu0 0.0
    %2305 = vmatprep.subr.mxu0 0.0
    %2306 = vmatpush2.msra.mxu0 0.0
    %2307 = vmatprep.subr.mxu0 0.0
    %2308 = vmatpush2.msra.mxu0 0.0
    %2309 = vmatprep.subr.mxu0 0.0
    %2310 = vmatpush2.msra.mxu0 0.0
    %2311 = vmatprep.subr.mxu0 0.0
    %2312 = vmatpush2.msra.mxu0 0.0
    %2313 = vmatprep.subr.mxu0 0.0
    %2314 = vmatpush2.msra.mxu0 0.0
    %2315 = vmatprep.subr.mxu0 0.0
    %2316 = vmatpush2.msra.mxu0 0.0
    %2317 = vmatprep.subr.mxu0 0.0
    %2318 = vmatpush2.msra.mxu0 0.0
    %2319 = vmatprep.mubr.f32.mxu0 0.0
    %2320 = vmatmul.mubr.f32.gmra.mxu0 %v914
    %v2321 = vpop.f32.mrf.mxu0
    %v2322 = vadd.f32 %v2254, %v2321
    %v2323 = vpop.f32.mrf.mxu0
    %2324 = vdwg.mxu0
    %v2325 = vmax.f32 %v2322, 0.0
    %s2326 = scalar_lea.vmem %s11, 256
    %v2327 = vld [vmem:[%s2326] sm:$0xff]
    %v2328 = vld [vmem:[%s2326 + $0x8] sm:$0xff]
    %v2329 = vld [vmem:[%s2326 + $0x10] sm:$0xff]
    %v2330 = vld [vmem:[%s2326 + $0x18] sm:$0xff]
    %v2331 = vld [vmem:[%s2326 + $0x20] sm:$0xff]
    %v2332 = vld [vmem:[%s2326 + $0x28] sm:$0xff]
    %v2333 = vld [vmem:[%s2326 + $0x30] sm:$0xff]
    %v2334 = vld [vmem:[%s2326 + $0x38] sm:$0xff]
    %v2335 = vld [vmem:[%s2326 + $0x40] sm:$0xff]
    %v2336 = vld [vmem:[%s2326 + $0x48] sm:$0xff]
    %v2337 = vld [vmem:[%s2326 + $0x50] sm:$0xff]
    %v2338 = vld [vmem:[%s2326 + $0x58] sm:$0xff]
    %v2339 = vld [vmem:[%s2326 + $0x60] sm:$0xff]
    %v2340 = vld [vmem:[%s2326 + $0x68] sm:$0xff]
    %v2341 = vld [vmem:[%s2326 + $0x70] sm:$0xff]
    %v2342 = vld [vmem:[%s2326 + $0x78] sm:$0xff]
    %v2343 = vld [vmem:[%s8 + $0x2] sm:$0x1]
    %v2344 = vlaneseq
    %v2345 = vshrl.u32 %v2344, 7
    %v2346 = vsub.s32 0, %v2345
    %v2347 = vrot.slane %v2343, %v2346
    %2348 = vmatprep.subr.mxu0 0.0
    %2349 = vmatpush1.msra.mxu0 %v2342
    %2350 = vmatprep.subr.mxu0 0.0
    %2351 = vmatpush1.msra.mxu0 %v2341
    %2352 = vmatprep.subr.mxu0 0.0
    %2353 = vmatpush1.msra.mxu0 %v2340
    %2354 = vmatprep.subr.mxu0 0.0
    %2355 = vmatpush1.msra.mxu0 %v2339
    %2356 = vmatprep.subr.mxu0 0.0
    %2357 = vmatpush1.msra.mxu0 %v2338
    %2358 = vmatprep.subr.mxu0 0.0
    %2359 = vmatpush1.msra.mxu0 %v2337
    %2360 = vmatprep.subr.mxu0 0.0
    %2361 = vmatpush1.msra.mxu0 %v2336
    %2362 = vmatprep.subr.mxu0 0.0
    %2363 = vmatpush1.msra.mxu0 %v2335
    %2364 = vmatprep.subr.mxu0 0.0
    %2365 = vmatpush1.msra.mxu0 %v2334
    %2366 = vmatprep.subr.mxu0 0.0
    %2367 = vmatpush1.msra.mxu0 %v2333
    %2368 = vmatprep.subr.mxu0 0.0
    %2369 = vmatpush1.msra.mxu0 %v2332
    %2370 = vmatprep.subr.mxu0 0.0
    %2371 = vmatpush1.msra.mxu0 %v2331
    %2372 = vmatprep.subr.mxu0 0.0
    %2373 = vmatpush1.msra.mxu0 %v2330
    %2374 = vmatprep.subr.mxu0 0.0
    %2375 = vmatpush1.msra.mxu0 %v2329
    %2376 = vmatprep.subr.mxu0 0.0
    %2377 = vmatpush1.msra.mxu0 %v2328
    %2378 = vmatprep.subr.mxu0 0.0
    %2379 = vmatpush1.msra.mxu0 %v2327
    %2380 = vmatprep.subr.mxu0 0.0
    %2381 = vmatpush2.msra.mxu0 0.0
    %2382 = vmatprep.subr.mxu0 0.0
    %2383 = vmatpush2.msra.mxu0 0.0
    %2384 = vmatprep.subr.mxu0 0.0
    %2385 = vmatpush2.msra.mxu0 0.0
    %2386 = vmatprep.subr.mxu0 0.0
    %2387 = vmatpush2.msra.mxu0 0.0
    %2388 = vmatprep.subr.mxu0 0.0
    %2389 = vmatpush2.msra.mxu0 0.0
    %2390 = vmatprep.subr.mxu0 0.0
    %2391 = vmatpush2.msra.mxu0 0.0
    %2392 = vmatprep.subr.mxu0 0.0
    %2393 = vmatpush2.msra.mxu0 0.0
    %2394 = vmatprep.subr.mxu0 0.0
    %2395 = vmatpush2.msra.mxu0 0.0
    %2396 = vmatprep.subr.mxu0 0.0
    %2397 = vmatpush2.msra.mxu0 0.0
    %2398 = vmatprep.subr.mxu0 0.0
    %2399 = vmatpush2.msra.mxu0 0.0
    %2400 = vmatprep.subr.mxu0 0.0
    %2401 = vmatpush2.msra.mxu0 0.0
    %2402 = vmatprep.subr.mxu0 0.0
    %2403 = vmatpush2.msra.mxu0 0.0
    %2404 = vmatprep.subr.mxu0 0.0
    %2405 = vmatpush2.msra.mxu0 0.0
    %2406 = vmatprep.subr.mxu0 0.0
    %2407 = vmatpush2.msra.mxu0 0.0
    %2408 = vmatprep.subr.mxu0 0.0
    %2409 = vmatpush2.msra.mxu0 0.0
    %2410 = vmatprep.subr.mxu0 0.0
    %2411 = vmatpush2.msra.mxu0 0.0
    %2412 = vmatprep.mubr.f32.mxu0 0.0
    %2413 = vmatmul.mubr.f32.gmra.mxu0 %v2325
    %v2414 = vpop.f32.mrf.mxu0
    %v2415 = vadd.f32 %v2347, %v2414
    %v2416 = vpop.f32.mrf.mxu0
    %2417 = vdwg.mxu0
    %2418 = vmatprep.subr.mxu0 0.0
    %2419 = vmatpush1.msra.mxu0 %v2249
    %2420 = vmatprep.subr.mxu0 0.0
    %2421 = vmatpush1.msra.mxu0 %v2248
    %2422 = vmatprep.subr.mxu0 0.0
    %2423 = vmatpush1.msra.mxu0 %v2247
    %2424 = vmatprep.subr.mxu0 0.0
    %2425 = vmatpush1.msra.mxu0 %v2246
    %2426 = vmatprep.subr.mxu0 0.0
    %2427 = vmatpush1.msra.mxu0 %v2245
    %2428 = vmatprep.subr.mxu0 0.0
    %2429 = vmatpush1.msra.mxu0 %v2244
    %2430 = vmatprep.subr.mxu0 0.0
    %2431 = vmatpush1.msra.mxu0 %v2243
    %2432 = vmatprep.subr.mxu0 0.0
    %2433 = vmatpush1.msra.mxu0 %v2242
    %2434 = vmatprep.subr.mxu0 0.0
    %2435 = vmatpush1.msra.mxu0 %v2241
    %2436 = vmatprep.subr.mxu0 0.0
    %2437 = vmatpush1.msra.mxu0 %v2240
    %2438 = vmatprep.subr.mxu0 0.0
    %2439 = vmatpush1.msra.mxu0 %v2239
    %2440 = vmatprep.subr.mxu0 0.0
    %2441 = vmatpush1.msra.mxu0 %v2238
    %2442 = vmatprep.subr.mxu0 0.0
    %2443 = vmatpush1.msra.mxu0 %v2237
    %2444 = vmatprep.subr.mxu0 0.0
    %2445 = vmatpush1.msra.mxu0 %v2236
    %2446 = vmatprep.subr.mxu0 0.0
    %2447 = vmatpush1.msra.mxu0 %v2235
    %2448 = vmatprep.subr.mxu0 0.0
    %2449 = vmatpush1.msra.mxu0 %v2234
    %2450 = vmatprep.subr.mxu0 0.0
    %2451 = vmatpush2.msra.mxu0 0.0
    %2452 = vmatprep.subr.mxu0 0.0
    %2453 = vmatpush2.msra.mxu0 0.0
    %2454 = vmatprep.subr.mxu0 0.0
    %2455 = vmatpush2.msra.mxu0 0.0
    %2456 = vmatprep.subr.mxu0 0.0
    %2457 = vmatpush2.msra.mxu0 0.0
    %2458 = vmatprep.subr.mxu0 0.0
    %2459 = vmatpush2.msra.mxu0 0.0
    %2460 = vmatprep.subr.mxu0 0.0
    %2461 = vmatpush2.msra.mxu0 0.0
    %2462 = vmatprep.subr.mxu0 0.0
    %2463 = vmatpush2.msra.mxu0 0.0
    %2464 = vmatprep.subr.mxu0 0.0
    %2465 = vmatpush2.msra.mxu0 0.0
    %2466 = vmatprep.subr.mxu0 0.0
    %2467 = vmatpush2.msra.mxu0 0.0
    %2468 = vmatprep.subr.mxu0 0.0
    %2469 = vmatpush2.msra.mxu0 0.0
    %2470 = vmatprep.subr.mxu0 0.0
    %2471 = vmatpush2.msra.mxu0 0.0
    %2472 = vmatprep.subr.mxu0 0.0
    %2473 = vmatpush2.msra.mxu0 0.0
    %2474 = vmatprep.subr.mxu0 0.0
    %2475 = vmatpush2.msra.mxu0 0.0
    %2476 = vmatprep.subr.mxu0 0.0
    %2477 = vmatpush2.msra.mxu0 0.0
    %2478 = vmatprep.subr.mxu0 0.0
    %2479 = vmatpush2.msra.mxu0 0.0
    %2480 = vmatprep.subr.mxu0 0.0
    %2481 = vmatpush2.msra.mxu0 0.0
    %2482 = vmatprep.mubr.f32.mxu0 0.0
    %2483 = vmatmul.mubr.f32.gmra.mxu0 %v1625
    %v2484 = vpop.f32.mrf.mxu0
    %v2485 = vadd.f32 %v2254, %v2484
    %v2486 = vpop.f32.mrf.mxu0
    %2487 = vdwg.mxu0
    %v2488 = vmax.f32 %v2485, 0.0
    %2489 = vmatprep.subr.mxu0 0.0
    %2490 = vmatpush1.msra.mxu0 %v2342
    %2491 = vmatprep.subr.mxu0 0.0
    %2492 = vmatpush1.msra.mxu0 %v2341
    %2493 = vmatprep.subr.mxu0 0.0
    %2494 = vmatpush1.msra.mxu0 %v2340
    %2495 = vmatprep.subr.mxu0 0.0
    %2496 = vmatpush1.msra.mxu0 %v2339
    %2497 = vmatprep.subr.mxu0 0.0
    %2498 = vmatpush1.msra.mxu0 %v2338
    %2499 = vmatprep.subr.mxu0 0.0
    %2500 = vmatpush1.msra.mxu0 %v2337
    %2501 = vmatprep.subr.mxu0 0.0
    %2502 = vmatpush1.msra.mxu0 %v2336
    %2503 = vmatprep.subr.mxu0 0.0
    %2504 = vmatpush1.msra.mxu0 %v2335
    %2505 = vmatprep.subr.mxu0 0.0
    %2506 = vmatpush1.msra.mxu0 %v2334
    %2507 = vmatprep.subr.mxu0 0.0
    %2508 = vmatpush1.msra.mxu0 %v2333
    %2509 = vmatprep.subr.mxu0 0.0
    %2510 = vmatpush1.msra.mxu0 %v2332
    %2511 = vmatprep.subr.mxu0 0.0
    %2512 = vmatpush1.msra.mxu0 %v2331
    %2513 = vmatprep.subr.mxu0 0.0
    %2514 = vmatpush1.msra.mxu0 %v2330
    %2515 = vmatprep.subr.mxu0 0.0
    %2516 = vmatpush1.msra.mxu0 %v2329
    %2517 = vmatprep.subr.mxu0 0.0
    %2518 = vmatpush1.msra.mxu0 %v2328
    %2519 = vmatprep.subr.mxu0 0.0
    %2520 = vmatpush1.msra.mxu0 %v2327
    %2521 = vmatprep.subr.mxu0 0.0
    %2522 = vmatpush2.msra.mxu0 0.0
    %2523 = vmatprep.subr.mxu0 0.0
    %2524 = vmatpush2.msra.mxu0 0.0
    %2525 = vmatprep.subr.mxu0 0.0
    %2526 = vmatpush2.msra.mxu0 0.0
    %2527 = vmatprep.subr.mxu0 0.0
    %2528 = vmatpush2.msra.mxu0 0.0
    %2529 = vmatprep.subr.mxu0 0.0
    %2530 = vmatpush2.msra.mxu0 0.0
    %2531 = vmatprep.subr.mxu0 0.0
    %2532 = vmatpush2.msra.mxu0 0.0
    %2533 = vmatprep.subr.mxu0 0.0
    %2534 = vmatpush2.msra.mxu0 0.0
    %2535 = vmatprep.subr.mxu0 0.0
    %2536 = vmatpush2.msra.mxu0 0.0
    %2537 = vmatprep.subr.mxu0 0.0
    %2538 = vmatpush2.msra.mxu0 0.0
    %2539 = vmatprep.subr.mxu0 0.0
    %2540 = vmatpush2.msra.mxu0 0.0
    %2541 = vmatprep.subr.mxu0 0.0
    %2542 = vmatpush2.msra.mxu0 0.0
    %2543 = vmatprep.subr.mxu0 0.0
    %2544 = vmatpush2.msra.mxu0 0.0
    %2545 = vmatprep.subr.mxu0 0.0
    %2546 = vmatpush2.msra.mxu0 0.0
    %2547 = vmatprep.subr.mxu0 0.0
    %2548 = vmatpush2.msra.mxu0 0.0
    %2549 = vmatprep.subr.mxu0 0.0
    %2550 = vmatpush2.msra.mxu0 0.0
    %2551 = vmatprep.subr.mxu0 0.0
    %2552 = vmatpush2.msra.mxu0 0.0
    %2553 = vmatprep.mubr.f32.mxu0 0.0
    %2554 = vmatmul.mubr.f32.gmra.mxu0 %v2488
    %v2555 = vpop.f32.mrf.mxu0
    %v2556 = vadd.f32 %v2347, %v2555
    %v2557 = vpop.f32.mrf.mxu0
    %2558 = vdwg.mxu0
    %v2559 = vmul.f32 %v1257, %v1257
    %vm2560 = vcmask 517120
    %v2561 = vsel %vm2560, %v2559, 0.0
    %2562 = vadd.xlane.f32.xlu0 %v2561
    %v2563 = vpop.xlane.xlu0 %2562
    %v2564 = vrsqrt.pop %v2563
    %v2565 = vmul.f32 %v2563, %v2564
    %vm2566 = vcmp.eq.f32.partialorder %v2563, inf
    %v2567 = vsel %vm2566, %v2563, %v2565
    %vm2568 = vcmp.eq.f32.partialorder %v2563, 0.0
    %v2569 = vand.u32 %v2563, 2147483648
    %v2570 = vsel %vm2568, %v2569, %v2567
    %v2571 = vmax.f32 %v2570, 1e-12
    %v2572 = vrcp.pop %v2571
    %v2573 = vmul.f32 %v1257, %v2572
    %2574 = vst.msk [vmem:[#allocation5] sm:$0x3] %vm2560, %v2573
    %v2575 = vmul.f32 %v1362, %v1362
    %v2576 = vsel %vm2560, %v2575, 0.0
    %2577 = vadd.xlane.f32.xlu0 %v2576
    %v2578 = vpop.xlane.xlu0 %2577
    %v2579 = vrsqrt.pop %v2578
    %v2580 = vmul.f32 %v2578, %v2579
    %vm2581 = vcmp.eq.f32.partialorder %v2578, inf
    %v2582 = vsel %vm2581, %v2578, %v2580
    %vm2583 = vcmp.eq.f32.partialorder %v2578, 0.0
    %v2584 = vand.u32 %v2578, 2147483648
    %v2585 = vsel %vm2583, %v2584, %v2582
    %v2586 = vmax.f32 %v2585, 1e-12
    %v2587 = vrcp.pop %v2586
    %v2588 = vmul.f32 %v1362, %v2587
    %2589 = vst.msk [vmem:[#allocation5 + $0x2] sm:$0x3] %vm2560, %v2588
    %v2590 = vmul.f32 %v1743, %v1743
    %v2591 = vsel %vm2560, %v2590, 0.0
    %2592 = vadd.xlane.f32.xlu0 %v2591
    %v2593 = vpop.xlane.xlu0 %2592
    %v2594 = vrsqrt.pop %v2593
    %v2595 = vmul.f32 %v2593, %v2594
    %vm2596 = vcmp.eq.f32.partialorder %v2593, inf
    %v2597 = vsel %vm2596, %v2593, %v2595
    %vm2598 = vcmp.eq.f32.partialorder %v2593, 0.0
    %v2599 = vand.u32 %v2593, 2147483648
    %v2600 = vsel %vm2598, %v2599, %v2597
    %v2601 = vmax.f32 %v2600, 1e-12
    %v2602 = vrcp.pop %v2601
    %v2603 = vmul.f32 %v1743, %v2602
    %2604 = vst.msk [vmem:[#allocation5 + $0x4] sm:$0x3] %vm2560, %v2603
    %v2605 = vmul.f32 %v1861, %v1861
    %v2606 = vsel %vm2560, %v2605, 0.0
    %2607 = vadd.xlane.f32.xlu0 %v2606
    %v2608 = vpop.xlane.xlu0 %2607
    %v2609 = vrsqrt.pop %v2608
    %v2610 = vmul.f32 %v2608, %v2609
    %vm2611 = vcmp.eq.f32.partialorder %v2608, inf
    %v2612 = vsel %vm2611, %v2608, %v2610
    %vm2613 = vcmp.eq.f32.partialorder %v2608, 0.0
    %v2614 = vand.u32 %v2608, 2147483648
    %v2615 = vsel %vm2613, %v2614, %v2612
    %v2616 = vmax.f32 %v2615, 1e-12
    %v2617 = vrcp.pop %v2616
    %v2618 = vmul.f32 %v1861, %v2617
    %2619 = vst.msk [vmem:[#allocation5 + $0x6] sm:$0x3] %vm2560, %v2618
    %v2620 = vmul.f32 %v1625, %v1625
    %v2621 = vsel %vm225, %v2620, 0.0
    %2622 = vadd.xlane.f32.xlu0 %v2621
    %v2623 = vpop.xlane.xlu0 %2622
    %v2624 = vrsqrt.pop %v2623
    %v2625 = vmul.f32 %v2623, %v2624
    %vm2626 = vcmp.eq.f32.partialorder %v2623, inf
    %v2627 = vsel %vm2626, %v2623, %v2625
    %vm2628 = vcmp.eq.f32.partialorder %v2623, 0.0
    %v2629 = vand.u32 %v2623, 2147483648
    %v2630 = vsel %vm2628, %v2629, %v2627
    %v2631 = vmax.f32 %v2630, 1e-12
    %v2632 = vrcp.pop %v2631
    %v2633 = vmul.f32 %v1625, %v2632
    %2634 = vst [vmem:[#allocation5 + $0x8] sm:$0x3] %v2633
    %v2635 = vmul.f32 %v914, %v914
    %v2636 = vsel %vm225, %v2635, 0.0
    %2637 = vadd.xlane.f32.xlu0 %v2636
    %v2638 = vpop.xlane.xlu0 %2637
    %v2639 = vrsqrt.pop %v2638
    %v2640 = vmul.f32 %v2638, %v2639
    %vm2641 = vcmp.eq.f32.partialorder %v2638, inf
    %v2642 = vsel %vm2641, %v2638, %v2640
    %vm2643 = vcmp.eq.f32.partialorder %v2638, 0.0
    %v2644 = vand.u32 %v2638, 2147483648
    %v2645 = vsel %vm2643, %v2644, %v2642
    %v2646 = vmax.f32 %v2645, 1e-12
    %v2647 = vrcp.pop %v2646
    %v2648 = vmul.f32 %v914, %v2647
    %2649 = vst [vmem:[#allocation5 + $0xa] sm:$0x3] %v2648
    %vm2650 = vcmask 254976
    %2651 = vst.msk [vmem:[#allocation6] sm:$0x3] %vm2650, %v2045
    %2652 = vst.msk [vmem:[#allocation6 + $0x2] sm:$0x3] %vm2650, %v2230
    %2653 = vst.msk [vmem:[#allocation6 + $0x4] sm:$0x3] %vm2650, %v2415
    %2654 = vst.msk [vmem:[#allocation6 + $0x6] sm:$0x3] %vm2650, %v2556
    // Predicated region
    $region58: #{tpu_custom_call.1} parent=1 // pred_check
      _
    $region59: #{tpu_custom_call.1} parent=1 // pred_check_branch
      %2656 = sbr.rel (0) target = $region61
    $region60: #{tpu_custom_call.1} parent=1 // pred_region
      %s2658 = ssub.s32 192, 192
      %2659 = vsyncadd [#allocation4], %s2658
      %s2661 = sshll.u32 [#allocation5], 4
      %s2662 = int_to_ptr.vmem [resolvable:$true] %s2661
      %2664 = dma.vmem_to_hbm [thread:$0]  %s2662, 192, %s13, [#allocation4]
    $region61: #{tpu_custom_call.1} parent=1 // pred_fallthru
      _
    // Predicated region
    $region62: #{tpu_custom_call.1} parent=1 // pred_check
      _
    $region63: #{tpu_custom_call.1} parent=1 // pred_check_branch
      %2666 = sbr.rel (0) target = $region65
    $region64: #{tpu_custom_call.1} parent=1 // pred_region
      %s2668 = ssub.s32 128, 128
      %2669 = vsyncadd [#allocation7], %s2668
      %s2671 = sshll.u32 [#allocation6], 4
      %s2672 = int_to_ptr.vmem [resolvable:$true] %s2671
      %2674 = dma.vmem_to_hbm [thread:$0]  %s2672, 128, %s14, [#allocation7]
    $region65: #{tpu_custom_call.1} parent=1 // pred_fallthru
      _
    // Predicated region
    $region66: #{tpu_custom_call.1} parent=1 // pred_check
      _
    $region67: #{tpu_custom_call.1} parent=1 // pred_check_branch
      %2676 = sbr.rel (0) target = $region69
    $region68: #{tpu_custom_call.1} parent=1 // pred_region
      %2677 = dma.done [#allocation4], 192
    $region69: #{tpu_custom_call.1} parent=1 // pred_fallthru
      _
    // Predicated region
    $region70: #{tpu_custom_call.1} parent=1 // pred_check
      _
    $region71: #{tpu_custom_call.1} parent=1 // pred_check_branch
      %2679 = sbr.rel (0) target = $region73
    $region72: #{tpu_custom_call.1} parent=1 // pred_region
      %2680 = dma.done [#allocation7], 128
    $region73: #{tpu_custom_call.1} parent=1 // pred_fallthru
      _
    %2681 = vsyncpa [#allocation3], 1
    %2682 = vsyncpa [#allocation4], 1
    %2683 = vsyncpa [#allocation7], 1

</llo_original>
